<compile_context>
chip_gen: v7x
topology: tpu7x:2x2x1
jax: 0.10.0
libtpu: 0.0.40
codegen_flags: <defaults>
</compile_context>

<pallas_src>
import jax
import jax.numpy as jnp
from jax import lax
from jax.experimental import pallas as pl
from jax.experimental.pallas import tpu as pltpu


def _upsample_row_polyphase_kernel(w_ref, b_ref, x_ref, y_ref):
    """One (batch, row-tile) step of: 2x nearest upsample + 3x3 SAME conv.

    w_ref : SMEM (2*C*C*2*3,) f32 -- 3x3 weights regrouped per output-row
            parity, layout [a, co, ci, i, dx]  (a = row parity, i = row tap).
    b_ref : SMEM (C,) f32
    x_ref : VMEM (1, C, 1, TH+2, 2W+2) -- width-doubled, zero-padded input slab.
    y_ref : VMEM (1, C, 2*TH, 2*W)
    """
    _, C, _, th_p2, wc = x_ref.shape
    TH = th_p2 - 2
    W2 = wc - 2          # = 2*W (output row width, lane axis)
    TH2 = 2 * TH

    # Tiny 0/1 selector matrices for the even/odd output-row interleave:
    #   out[v, :] = acc_{v % 2}[v // 2, :].  Exact in f32 (pure row selection),
    # runs on the otherwise-idle MXU, cost O(TH^2 * W) per channel.
    vi = lax.broadcasted_iota(jnp.int32, (TH2, TH), 0)
    ri = lax.broadcasted_iota(jnp.int32, (TH2, TH), 1)
    sel0 = (vi == 2 * ri).astype(jnp.float32)
    sel1 = (vi == 2 * ri + 1).astype(jnp.float32)

    def widx(a, co, ci, i, dx):
        return (((a * C + co) * C + ci) * 2 + i) * 3 + dx

    for co in range(C):
        bco = b_ref[co]
        acc0 = jnp.zeros((TH, W2), jnp.float32) + bco   # even output rows
        acc1 = jnp.zeros((TH, W2), jnp.float32) + bco   # odd output rows
        for ci in range(C):
            for roff in range(3):            # slab row offset (halo included)
                for dx in range(3):          # column tap (width already 2x)
                    tap = x_ref[0, ci, 0, roff:roff + TH, dx:dx + W2]
                    tap = tap.astype(jnp.float32)
                    if roff <= 1:            # parity 0 reads row offsets {0, 1}
                        acc0 = acc0 + w_ref[widx(0, co, ci, roff, dx)] * tap
                    if roff >= 1:            # parity 1 reads row offsets {1, 2}
                        acc1 = acc1 + w_ref[widx(1, co, ci, roff - 1, dx)] * tap
        rows = (jnp.dot(sel0, acc0, preferred_element_type=jnp.float32)
                + jnp.dot(sel1, acc1, preferred_element_type=jnp.float32))
        y_ref[0, co] = rows.astype(y_ref.dtype)


def _vmem_limit_bytes():
    """Generation-aware VMEM cap: ~41 MiB on v7x (64 MiB), ~83 MiB on v5e/v6e."""
    try:
        phys = pltpu.get_tpu_info().vmem_capacity_bytes
    except Exception:
        phys = 128 * 1024 * 1024
    return int(max(32 * 1024 * 1024, min(100 * 1024 * 1024, 0.65 * phys)))


def _pick_row_tile(H, W, C, itemsize, vmem_budget, target=32):
    """Largest TH <= target with H % TH == 0, 8 | 2*TH, and a double-buffered
    (input slab + output block) footprint under the VMEM budget."""
    best = H   # fallback: full frame. TODO(synk): pad+crop rows for awkward H.
    cap = min(target, max(1, H // 2))
    for t in range(1, cap + 1):
        if H % t:
            continue
        if (2 * t) % 8:          # output block second-minor dim must be 8-aligned
            continue
        step_bytes = 2 * C * ((t + 2) * (2 * W + 2) + (2 * t) * (2 * W)) * itemsize
        if step_bytes <= vmem_budget:
            best = t
    return best


def _upsample_conv_single(x, w_poly_flat, b_flat, row_tile, vmem_limit):
    """Run the fused nearest-2x + 3x3 conv for ONE tensor (NCHW)."""
    B, C, H, W = x.shape
    TH = row_tile
    nH = H // TH
    W2, WC = 2 * W, 2 * W + 2

    # Width-doubled (nearest), zero-padded, overlapping row slabs (1-input-row
    # halo on each side) -- cheap 1x-resolution XLA work fused into one pass.
    xw = jnp.repeat(x, 2, axis=3)                              # (B, C, H, 2W)
    xp = jnp.pad(xw, ((0, 0), (0, 0), (1, 1), (1, 1)))         # (B, C, H+2, 2W+2)
    rows = (jnp.arange(nH) * TH)[:, None] + jnp.arange(TH + 2)[None, :]
    slabs = jnp.take(xp, rows, axis=2)                         # (B, C, nH, TH+2, 2W+2)

    return pl.pallas_call(
        _upsample_row_polyphase_kernel,
        out_shape=jax.ShapeDtypeStruct((B, C, 2 * H, W2), x.dtype),
        grid=(B, nH),
        in_specs=[
            pl.BlockSpec(memory_space=pltpu.MemorySpace.SMEM),   # regrouped weights
            pl.BlockSpec(memory_space=pltpu.MemorySpace.SMEM),   # bias
            pl.BlockSpec((1, C, 1, TH + 2, WC), lambda b, h: (b, 0, h, 0, 0)),
        ],
        out_specs=pl.BlockSpec((1, C, 2 * TH, W2), lambda b, h: (b, 0, h, 0)),
        compiler_params=pltpu.CompilerParams(
            dimension_semantics=("parallel", "parallel"),
            vmem_limit_bytes=vmem_limit),
    )(w_poly_flat, b_flat, slabs)


def upsample_forward(x, x_enh, weight_oihw, bias, *, row_tile_target=32):
    """Equivalent of UpSample.forward.  All tensors use PyTorch NCHW layouts."""
    B, C, H, W = x.shape
    w = weight_oihw.astype(jnp.float32)

    # Regroup the 3 vertical taps per output-row parity (polyphase in H):
    #   parity 0 reads padded input rows r+{0,1} with weights [w0, w1+w2]
    #   parity 1 reads padded input rows r+{1,2} with weights [w0+w1, w2]
    wa0 = jnp.stack([w[:, :, 0, :], w[:, :, 1, :] + w[:, :, 2, :]], axis=2)
    wa1 = jnp.stack([w[:, :, 0, :] + w[:, :, 1, :], w[:, :, 2, :]], axis=2)
    w_poly = jnp.stack([wa0, wa1], axis=0).reshape(-1)   # (2*C*C*2*3,) [a,co,ci,i,dx]
    b_flat = bias.astype(jnp.float32).reshape(-1)

    vmem_limit = _vmem_limit_bytes()
    row_tile = _pick_row_tile(H, W, C, x.dtype.itemsize, vmem_limit // 3,
                              target=row_tile_target)

    # Two separate pallas_calls (one tensor each): a grid step only holds one
    # input slab + one output block in VMEM, and pipeline depth doubles.
    y = _upsample_conv_single(x, w_poly, b_flat, row_tile, vmem_limit)
    y_enh = _upsample_conv_single(x_enh, w_poly, b_flat, row_tile, vmem_limit)
    return y, y_enh


def _reference_forward(x, x_enh, weight, bias):
    """Pure-JAX reference (lax.conv) for the correctness check."""
    def run(v):
        v = jnp.repeat(jnp.repeat(v, 2, axis=2), 2, axis=3)
        y = lax.conv_general_dilated(
            v, weight, window_strides=(1, 1), padding="SAME",
            dimension_numbers=("NCHW", "OIHW", "NCHW"))
        return y + bias.reshape(1, -1, 1, 1)
    return run(x), run(x_enh)


if __name__ == "__main__":
    in_ch = 4
    B, H, W = 2, 16, 16

    key = jax.random.PRNGKey(0)
    kw, kb, kx, ke = jax.random.split(key, 4)

    # Module init is xavier_uniform_ weight / zeros_ bias; use a small nonzero
    # bias so the bias-add path is actually exercised by the check.
    fan = in_ch * 3 * 3
    bound = (6.0 / (fan + fan)) ** 0.5
    weight = jax.random.uniform(kw, (in_ch, in_ch, 3, 3), jnp.float32,
                                minval=-bound, maxval=bound)
    bias = 0.1 * jax.random.normal(kb, (in_ch,), jnp.float32)

    x = jax.random.normal(kx, (B, in_ch, H, W), jnp.float32)
    x_enh = jax.random.normal(ke, (B, in_ch, H, W), jnp.float32)

    y, y_enh = jax.jit(upsample_forward)(x, x_enh, weight, bias)
    jax.block_until_ready((y, y_enh))

    ry, ry_enh = _reference_forward(x, x_enh, weight, bias)
    assert y.shape == (B, in_ch, 2 * H, 2 * W)
    assert y_enh.shape == (B, in_ch, 2 * H, 2 * W)
    assert jnp.allclose(y, ry, atol=1e-4, rtol=1e-4)
    assert jnp.allclose(y_enh, ry_enh, atol=1e-4, rtol=1e-4)

    print("KERNEL_OK")
</pallas_src>

<mosaic_0001>
module attributes {stable_mosaic.version = 11 : i64} {
  func.func @_upsample_row_polyphase_kernel(%arg0: i32, %arg1: i32, %arg2: memref<192xf32, #tpu.memory_space<smem>>, %arg3: memref<4xf32, #tpu.memory_space<smem>>, %arg4: memref<1x4x1x10x34xf32, #tpu.memory_space<vmem>>, %arg5: memref<1x4x16x32xf32, #tpu.memory_space<vmem>>) attributes {dimension_semantics = [#tpu.dimension_semantics<parallel>, #tpu.dimension_semantics<parallel>], iteration_bounds = array<i64: 2, 2>, scalar_prefetch = 0 : i64, scratch_operands = 0 : i64, tpu.core_type = #tpu.core_type<tc>, window_params = [{transform_indices = @transform_0, window_bounds = array<i64: 192>}, {transform_indices = @transform_1, window_bounds = array<i64: 4>}, {transform_indices = @transform_2, window_bounds = array<i64: 1, 4, 1, 10, 34>}, {transform_indices = @transform_3, window_bounds = array<i64: 1, 4, 16, 32>}]} {
    %0 = tpu.iota {dimensions = array<i32: 0>} : vector<16x8xi32>
    %1 = tpu.iota {dimensions = array<i32: 1>} : vector<16x8xi32>
    %c2_i32 = arith.constant 2 : i32
    %2 = vector.broadcast %c2_i32 : i32 to vector<16x8xi32>
    %3 = arith.muli %2, %1 : vector<16x8xi32>
    %4 = arith.cmpi eq, %0, %3 : vector<16x8xi32>
    %5 = arith.extui %4 : vector<16x8xi1> to vector<16x8xi32>
    %6 = arith.sitofp %5 : vector<16x8xi32> to vector<16x8xf32>
    %c2_i32_0 = arith.constant 2 : i32
    %7 = vector.broadcast %c2_i32_0 : i32 to vector<16x8xi32>
    %8 = arith.muli %7, %1 : vector<16x8xi32>
    %c1_i32 = arith.constant 1 : i32
    %9 = vector.broadcast %c1_i32 : i32 to vector<16x8xi32>
    %10 = arith.addi %8, %9 : vector<16x8xi32>
    %11 = arith.cmpi eq, %0, %10 : vector<16x8xi32>
    %12 = arith.extui %11 : vector<16x8xi1> to vector<16x8xi32>
    %13 = arith.sitofp %12 : vector<16x8xi32> to vector<16x8xf32>
    %c0 = arith.constant 0 : index
    %14 = memref.load %arg3[%c0] : memref<4xf32, #tpu.memory_space<smem>>
    %cst = arith.constant 0.000000e+00 : f32
    %15 = vector.broadcast %cst : f32 to vector<8x32xf32>
    %16 = vector.broadcast %14 : f32 to vector<8x32xf32>
    %17 = arith.addf %15, %16 : vector<8x32xf32>
    %cst_1 = arith.constant 0.000000e+00 : f32
    %18 = vector.broadcast %cst_1 : f32 to vector<8x32xf32>
    %19 = vector.broadcast %14 : f32 to vector<8x32xf32>
    %20 = arith.addf %18, %19 : vector<8x32xf32>
    %c0_2 = arith.constant 0 : index
    %c0_3 = arith.constant 0 : index
    %c0_4 = arith.constant 0 : index
    %c0_5 = arith.constant 0 : index
    %c0_6 = arith.constant 0 : index
    %21 = vector.load %arg4[%c0_2, %c0_3, %c0_4, %c0_5, %c0_6] : memref<1x4x1x10x34xf32, #tpu.memory_space<vmem>>, vector<1x1x1x8x32xf32>
    %22 = vector.shape_cast %21 : vector<1x1x1x8x32xf32> to vector<8x32xf32>
    %c0_7 = arith.constant 0 : index
    %23 = memref.load %arg2[%c0_7] : memref<192xf32, #tpu.memory_space<smem>>
    %24 = vector.broadcast %23 : f32 to vector<8x32xf32>
    %25 = arith.mulf %24, %22 : vector<8x32xf32>
    %26 = arith.addf %17, %25 : vector<8x32xf32>
    %c0_8 = arith.constant 0 : index
    %c0_9 = arith.constant 0 : index
    %c0_10 = arith.constant 0 : index
    %c0_11 = arith.constant 0 : index
    %c1 = arith.constant 1 : index
    %27 = vector.load %arg4[%c0_8, %c0_9, %c0_10, %c0_11, %c1] : memref<1x4x1x10x34xf32, #tpu.memory_space<vmem>>, vector<1x1x1x8x32xf32>
    %28 = vector.shape_cast %27 : vector<1x1x1x8x32xf32> to vector<8x32xf32>
    %c1_12 = arith.constant 1 : index
    %29 = memref.load %arg2[%c1_12] : memref<192xf32, #tpu.memory_space<smem>>
    %30 = vector.broadcast %29 : f32 to vector<8x32xf32>
    %31 = arith.mulf %30, %28 : vector<8x32xf32>
    %32 = arith.addf %26, %31 : vector<8x32xf32>
    %c0_13 = arith.constant 0 : index
    %c0_14 = arith.constant 0 : index
    %c0_15 = arith.constant 0 : index
    %c0_16 = arith.constant 0 : index
    %c2 = arith.constant 2 : index
    %33 = vector.load %arg4[%c0_13, %c0_14, %c0_15, %c0_16, %c2] : memref<1x4x1x10x34xf32, #tpu.memory_space<vmem>>, vector<1x1x1x8x32xf32>
    %34 = vector.shape_cast %33 : vector<1x1x1x8x32xf32> to vector<8x32xf32>
    %c2_17 = arith.constant 2 : index
    %35 = memref.load %arg2[%c2_17] : memref<192xf32, #tpu.memory_space<smem>>
    %36 = vector.broadcast %35 : f32 to vector<8x32xf32>
    %37 = arith.mulf %36, %34 : vector<8x32xf32>
    %38 = arith.addf %32, %37 : vector<8x32xf32>
    %c0_18 = arith.constant 0 : index
    %c0_19 = arith.constant 0 : index
    %c0_20 = arith.constant 0 : index
    %c1_21 = arith.constant 1 : index
    %c0_22 = arith.constant 0 : index
    %39 = vector.load %arg4[%c0_18, %c0_19, %c0_20, %c1_21, %c0_22] : memref<1x4x1x10x34xf32, #tpu.memory_space<vmem>>, vector<1x1x1x8x32xf32>
    %40 = vector.shape_cast %39 : vector<1x1x1x8x32xf32> to vector<8x32xf32>
    %c3 = arith.constant 3 : index
    %41 = memref.load %arg2[%c3] : memref<192xf32, #tpu.memory_space<smem>>
    %42 = vector.broadcast %41 : f32 to vector<8x32xf32>
    %43 = arith.mulf %42, %40 : vector<8x32xf32>
    %44 = arith.addf %38, %43 : vector<8x32xf32>
    %c96 = arith.constant 96 : index
    %45 = memref.load %arg2[%c96] : memref<192xf32, #tpu.memory_space<smem>>
    %46 = vector.broadcast %45 : f32 to vector<8x32xf32>
    %47 = arith.mulf %46, %40 : vector<8x32xf32>
    %48 = arith.addf %20, %47 : vector<8x32xf32>
    %c0_23 = arith.constant 0 : index
    %c0_24 = arith.constant 0 : index
    %c0_25 = arith.constant 0 : index
    %c1_26 = arith.constant 1 : index
    %c1_27 = arith.constant 1 : index
    %49 = vector.load %arg4[%c0_23, %c0_24, %c0_25, %c1_26, %c1_27] : memref<1x4x1x10x34xf32, #tpu.memory_space<vmem>>, vector<1x1x1x8x32xf32>
    %50 = vector.shape_cast %49 : vector<1x1x1x8x32xf32> to vector<8x32xf32>
    %c4 = arith.constant 4 : index
    %51 = memref.load %arg2[%c4] : memref<192xf32, #tpu.memory_space<smem>>
    %52 = vector.broadcast %51 : f32 to vector<8x32xf32>
    %53 = arith.mulf %52, %50 : vector<8x32xf32>
    %54 = arith.addf %44, %53 : vector<8x32xf32>
    %c97 = arith.constant 97 : index
    %55 = memref.load %arg2[%c97] : memref<192xf32, #tpu.memory_space<smem>>
    %56 = vector.broadcast %55 : f32 to vector<8x32xf32>
    %57 = arith.mulf %56, %50 : vector<8x32xf32>
    %58 = arith.addf %48, %57 : vector<8x32xf32>
    %c0_28 = arith.constant 0 : index
    %c0_29 = arith.constant 0 : index
    %c0_30 = arith.constant 0 : index
    %c1_31 = arith.constant 1 : index
    %c2_32 = arith.constant 2 : index
    %59 = vector.load %arg4[%c0_28, %c0_29, %c0_30, %c1_31, %c2_32] : memref<1x4x1x10x34xf32, #tpu.memory_space<vmem>>, vector<1x1x1x8x32xf32>
    %60 = vector.shape_cast %59 : vector<1x1x1x8x32xf32> to vector<8x32xf32>
    %c5 = arith.constant 5 : index
    %61 = memref.load %arg2[%c5] : memref<192xf32, #tpu.memory_space<smem>>
    %62 = vector.broadcast %61 : f32 to vector<8x32xf32>
    %63 = arith.mulf %62, %60 : vector<8x32xf32>
    %64 = arith.addf %54, %63 : vector<8x32xf32>
    %c98 = arith.constant 98 : index
    %65 = memref.load %arg2[%c98] : memref<192xf32, #tpu.memory_space<smem>>
    %66 = vector.broadcast %65 : f32 to vector<8x32xf32>
    %67 = arith.mulf %66, %60 : vector<8x32xf32>
    %68 = arith.addf %58, %67 : vector<8x32xf32>
    %c0_33 = arith.constant 0 : index
    %c0_34 = arith.constant 0 : index
    %c0_35 = arith.constant 0 : index
    %c2_36 = arith.constant 2 : index
    %c0_37 = arith.constant 0 : index
    %69 = vector.load %arg4[%c0_33, %c0_34, %c0_35, %c2_36, %c0_37] : memref<1x4x1x10x34xf32, #tpu.memory_space<vmem>>, vector<1x1x1x8x32xf32>
    %70 = vector.shape_cast %69 : vector<1x1x1x8x32xf32> to vector<8x32xf32>
    %c99 = arith.constant 99 : index
    %71 = memref.load %arg2[%c99] : memref<192xf32, #tpu.memory_space<smem>>
    %72 = vector.broadcast %71 : f32 to vector<8x32xf32>
    %73 = arith.mulf %72, %70 : vector<8x32xf32>
    %74 = arith.addf %68, %73 : vector<8x32xf32>
    %c0_38 = arith.constant 0 : index
    %c0_39 = arith.constant 0 : index
    %c0_40 = arith.constant 0 : index
    %c2_41 = arith.constant 2 : index
    %c1_42 = arith.constant 1 : index
    %75 = vector.load %arg4[%c0_38, %c0_39, %c0_40, %c2_41, %c1_42] : memref<1x4x1x10x34xf32, #tpu.memory_space<vmem>>, vector<1x1x1x8x32xf32>
    %76 = vector.shape_cast %75 : vector<1x1x1x8x32xf32> to vector<8x32xf32>
    %c100 = arith.constant 100 : index
    %77 = memref.load %arg2[%c100] : memref<192xf32, #tpu.memory_space<smem>>
    %78 = vector.broadcast %77 : f32 to vector<8x32xf32>
    %79 = arith.mulf %78, %76 : vector<8x32xf32>
    %80 = arith.addf %74, %79 : vector<8x32xf32>
    %c0_43 = arith.constant 0 : index
    %c0_44 = arith.constant 0 : index
    %c0_45 = arith.constant 0 : index
    %c2_46 = arith.constant 2 : index
    %c2_47 = arith.constant 2 : index
    %81 = vector.load %arg4[%c0_43, %c0_44, %c0_45, %c2_46, %c2_47] : memref<1x4x1x10x34xf32, #tpu.memory_space<vmem>>, vector<1x1x1x8x32xf32>
    %82 = vector.shape_cast %81 : vector<1x1x1x8x32xf32> to vector<8x32xf32>
    %c101 = arith.constant 101 : index
    %83 = memref.load %arg2[%c101] : memref<192xf32, #tpu.memory_space<smem>>
    %84 = vector.broadcast %83 : f32 to vector<8x32xf32>
    %85 = arith.mulf %84, %82 : vector<8x32xf32>
    %86 = arith.addf %80, %85 : vector<8x32xf32>
    %c0_48 = arith.constant 0 : index
    %c1_49 = arith.constant 1 : index
    %c0_50 = arith.constant 0 : index
    %c0_51 = arith.constant 0 : index
    %c0_52 = arith.constant 0 : index
    %87 = vector.load %arg4[%c0_48, %c1_49, %c0_50, %c0_51, %c0_52] : memref<1x4x1x10x34xf32, #tpu.memory_space<vmem>>, vector<1x1x1x8x32xf32>
    %88 = vector.shape_cast %87 : vector<1x1x1x8x32xf32> to vector<8x32xf32>
    %c6 = arith.constant 6 : index
    %89 = memref.load %arg2[%c6] : memref<192xf32, #tpu.memory_space<smem>>
    %90 = vector.broadcast %89 : f32 to vector<8x32xf32>
    %91 = arith.mulf %90, %88 : vector<8x32xf32>
    %92 = arith.addf %64, %91 : vector<8x32xf32>
    %c0_53 = arith.constant 0 : index
    %c1_54 = arith.constant 1 : index
    %c0_55 = arith.constant 0 : index
    %c0_56 = arith.constant 0 : index
    %c1_57 = arith.constant 1 : index
    %93 = vector.load %arg4[%c0_53, %c1_54, %c0_55, %c0_56, %c1_57] : memref<1x4x1x10x34xf32, #tpu.memory_space<vmem>>, vector<1x1x1x8x32xf32>
    %94 = vector.shape_cast %93 : vector<1x1x1x8x32xf32> to vector<8x32xf32>
    %c7 = arith.constant 7 : index
    %95 = memref.load %arg2[%c7] : memref<192xf32, #tpu.memory_space<smem>>
    %96 = vector.broadcast %95 : f32 to vector<8x32xf32>
    %97 = arith.mulf %96, %94 : vector<8x32xf32>
    %98 = arith.addf %92, %97 : vector<8x32xf32>
    %c0_58 = arith.constant 0 : index
    %c1_59 = arith.constant 1 : index
    %c0_60 = arith.constant 0 : index
    %c0_61 = arith.constant 0 : index
    %c2_62 = arith.constant 2 : index
    %99 = vector.load %arg4[%c0_58, %c1_59, %c0_60, %c0_61, %c2_62] : memref<1x4x1x10x34xf32, #tpu.memory_space<vmem>>, vector<1x1x1x8x32xf32>
    %100 = vector.shape_cast %99 : vector<1x1x1x8x32xf32> to vector<8x32xf32>
    %c8 = arith.constant 8 : index
    %101 = memref.load %arg2[%c8] : memref<192xf32, #tpu.memory_space<smem>>
    %102 = vector.broadcast %101 : f32 to vector<8x32xf32>
    %103 = arith.mulf %102, %100 : vector<8x32xf32>
    %104 = arith.addf %98, %103 : vector<8x32xf32>
    %c0_63 = arith.constant 0 : index
    %c1_64 = arith.constant 1 : index
    %c0_65 = arith.constant 0 : index
    %c1_66 = arith.constant 1 : index
    %c0_67 = arith.constant 0 : index
    %105 = vector.load %arg4[%c0_63, %c1_64, %c0_65, %c1_66, %c0_67] : memref<1x4x1x10x34xf32, #tpu.memory_space<vmem>>, vector<1x1x1x8x32xf32>
    %106 = vector.shape_cast %105 : vector<1x1x1x8x32xf32> to vector<8x32xf32>
    %c9 = arith.constant 9 : index
    %107 = memref.load %arg2[%c9] : memref<192xf32, #tpu.memory_space<smem>>
    %108 = vector.broadcast %107 : f32 to vector<8x32xf32>
    %109 = arith.mulf %108, %106 : vector<8x32xf32>
    %110 = arith.addf %104, %109 : vector<8x32xf32>
    %c102 = arith.constant 102 : index
    %111 = memref.load %arg2[%c102] : memref<192xf32, #tpu.memory_space<smem>>
    %112 = vector.broadcast %111 : f32 to vector<8x32xf32>
    %113 = arith.mulf %112, %106 : vector<8x32xf32>
    %114 = arith.addf %86, %113 : vector<8x32xf32>
    %c0_68 = arith.constant 0 : index
    %c1_69 = arith.constant 1 : index
    %c0_70 = arith.constant 0 : index
    %c1_71 = arith.constant 1 : index
    %c1_72 = arith.constant 1 : index
    %115 = vector.load %arg4[%c0_68, %c1_69, %c0_70, %c1_71, %c1_72] : memref<1x4x1x10x34xf32, #tpu.memory_space<vmem>>, vector<1x1x1x8x32xf32>
    %116 = vector.shape_cast %115 : vector<1x1x1x8x32xf32> to vector<8x32xf32>
    %c10 = arith.constant 10 : index
    %117 = memref.load %arg2[%c10] : memref<192xf32, #tpu.memory_space<smem>>
    %118 = vector.broadcast %117 : f32 to vector<8x32xf32>
    %119 = arith.mulf %118, %116 : vector<8x32xf32>
    %120 = arith.addf %110, %119 : vector<8x32xf32>
    %c103 = arith.constant 103 : index
    %121 = memref.load %arg2[%c103] : memref<192xf32, #tpu.memory_space<smem>>
    %122 = vector.broadcast %121 : f32 to vector<8x32xf32>
    %123 = arith.mulf %122, %116 : vector<8x32xf32>
    %124 = arith.addf %114, %123 : vector<8x32xf32>
    %c0_73 = arith.constant 0 : index
    %c1_74 = arith.constant 1 : index
    %c0_75 = arith.constant 0 : index
    %c1_76 = arith.constant 1 : index
    %c2_77 = arith.constant 2 : index
    %125 = vector.load %arg4[%c0_73, %c1_74, %c0_75, %c1_76, %c2_77] : memref<1x4x1x10x34xf32, #tpu.memory_space<vmem>>, vector<1x1x1x8x32xf32>
    %126 = vector.shape_cast %125 : vector<1x1x1x8x32xf32> to vector<8x32xf32>
    %c11 = arith.constant 11 : index
    %127 = memref.load %arg2[%c11] : memref<192xf32, #tpu.memory_space<smem>>
    %128 = vector.broadcast %127 : f32 to vector<8x32xf32>
    %129 = arith.mulf %128, %126 : vector<8x32xf32>
    %130 = arith.addf %120, %129 : vector<8x32xf32>
    %c104 = arith.constant 104 : index
    %131 = memref.load %arg2[%c104] : memref<192xf32, #tpu.memory_space<smem>>
    %132 = vector.broadcast %131 : f32 to vector<8x32xf32>
    %133 = arith.mulf %132, %126 : vector<8x32xf32>
    %134 = arith.addf %124, %133 : vector<8x32xf32>
    %c0_78 = arith.constant 0 : index
    %c1_79 = arith.constant 1 : index
    %c0_80 = arith.constant 0 : index
    %c2_81 = arith.constant 2 : index
    %c0_82 = arith.constant 0 : index
    %135 = vector.load %arg4[%c0_78, %c1_79, %c0_80, %c2_81, %c0_82] : memref<1x4x1x10x34xf32, #tpu.memory_space<vmem>>, vector<1x1x1x8x32xf32>
    %136 = vector.shape_cast %135 : vector<1x1x1x8x32xf32> to vector<8x32xf32>
    %c105 = arith.constant 105 : index
    %137 = memref.load %arg2[%c105] : memref<192xf32, #tpu.memory_space<smem>>
    %138 = vector.broadcast %137 : f32 to vector<8x32xf32>
    %139 = arith.mulf %138, %136 : vector<8x32xf32>
    %140 = arith.addf %134, %139 : vector<8x32xf32>
    %c0_83 = arith.constant 0 : index
    %c1_84 = arith.constant 1 : index
    %c0_85 = arith.constant 0 : index
    %c2_86 = arith.constant 2 : index
    %c1_87 = arith.constant 1 : index
    %141 = vector.load %arg4[%c0_83, %c1_84, %c0_85, %c2_86, %c1_87] : memref<1x4x1x10x34xf32, #tpu.memory_space<vmem>>, vector<1x1x1x8x32xf32>
    %142 = vector.shape_cast %141 : vector<1x1x1x8x32xf32> to vector<8x32xf32>
    %c106 = arith.constant 106 : index
    %143 = memref.load %arg2[%c106] : memref<192xf32, #tpu.memory_space<smem>>
    %144 = vector.broadcast %143 : f32 to vector<8x32xf32>
    %145 = arith.mulf %144, %142 : vector<8x32xf32>
    %146 = arith.addf %140, %145 : vector<8x32xf32>
    %c0_88 = arith.constant 0 : index
    %c1_89 = arith.constant 1 : index
    %c0_90 = arith.constant 0 : index
    %c2_91 = arith.constant 2 : index
    %c2_92 = arith.constant 2 : index
    %147 = vector.load %arg4[%c0_88, %c1_89, %c0_90, %c2_91, %c2_92] : memref<1x4x1x10x34xf32, #tpu.memory_space<vmem>>, vector<1x1x1x8x32xf32>
    %148 = vector.shape_cast %147 : vector<1x1x1x8x32xf32> to vector<8x32xf32>
    %c107 = arith.constant 107 : index
    %149 = memref.load %arg2[%c107] : memref<192xf32, #tpu.memory_space<smem>>
    %150 = vector.broadcast %149 : f32 to vector<8x32xf32>
    %151 = arith.mulf %150, %148 : vector<8x32xf32>
    %152 = arith.addf %146, %151 : vector<8x32xf32>
    %c0_93 = arith.constant 0 : index
    %c2_94 = arith.constant 2 : index
    %c0_95 = arith.constant 0 : index
    %c0_96 = arith.constant 0 : index
    %c0_97 = arith.constant 0 : index
    %153 = vector.load %arg4[%c0_93, %c2_94, %c0_95, %c0_96, %c0_97] : memref<1x4x1x10x34xf32, #tpu.memory_space<vmem>>, vector<1x1x1x8x32xf32>
    %154 = vector.shape_cast %153 : vector<1x1x1x8x32xf32> to vector<8x32xf32>
    %c12 = arith.constant 12 : index
    %155 = memref.load %arg2[%c12] : memref<192xf32, #tpu.memory_space<smem>>
    %156 = vector.broadcast %155 : f32 to vector<8x32xf32>
    %157 = arith.mulf %156, %154 : vector<8x32xf32>
    %158 = arith.addf %130, %157 : vector<8x32xf32>
    %c0_98 = arith.constant 0 : index
    %c2_99 = arith.constant 2 : index
    %c0_100 = arith.constant 0 : index
    %c0_101 = arith.constant 0 : index
    %c1_102 = arith.constant 1 : index
    %159 = vector.load %arg4[%c0_98, %c2_99, %c0_100, %c0_101, %c1_102] : memref<1x4x1x10x34xf32, #tpu.memory_space<vmem>>, vector<1x1x1x8x32xf32>
    %160 = vector.shape_cast %159 : vector<1x1x1x8x32xf32> to vector<8x32xf32>
    %c13 = arith.constant 13 : index
    %161 = memref.load %arg2[%c13] : memref<192xf32, #tpu.memory_space<smem>>
    %162 = vector.broadcast %161 : f32 to vector<8x32xf32>
    %163 = arith.mulf %162, %160 : vector<8x32xf32>
    %164 = arith.addf %158, %163 : vector<8x32xf32>
    %c0_103 = arith.constant 0 : index
    %c2_104 = arith.constant 2 : index
    %c0_105 = arith.constant 0 : index
    %c0_106 = arith.constant 0 : index
    %c2_107 = arith.constant 2 : index
    %165 = vector.load %arg4[%c0_103, %c2_104, %c0_105, %c0_106, %c2_107] : memref<1x4x1x10x34xf32, #tpu.memory_space<vmem>>, vector<1x1x1x8x32xf32>
    %166 = vector.shape_cast %165 : vector<1x1x1x8x32xf32> to vector<8x32xf32>
    %c14 = arith.constant 14 : index
    %167 = memref.load %arg2[%c14] : memref<192xf32, #tpu.memory_space<smem>>
    %168 = vector.broadcast %167 : f32 to vector<8x32xf32>
    %169 = arith.mulf %168, %166 : vector<8x32xf32>
    %170 = arith.addf %164, %169 : vector<8x32xf32>
    %c0_108 = arith.constant 0 : index
    %c2_109 = arith.constant 2 : index
    %c0_110 = arith.constant 0 : index
    %c1_111 = arith.constant 1 : index
    %c0_112 = arith.constant 0 : index
    %171 = vector.load %arg4[%c0_108, %c2_109, %c0_110, %c1_111, %c0_112] : memref<1x4x1x10x34xf32, #tpu.memory_space<vmem>>, vector<1x1x1x8x32xf32>
    %172 = vector.shape_cast %171 : vector<1x1x1x8x32xf32> to vector<8x32xf32>
    %c15 = arith.constant 15 : index
    %173 = memref.load %arg2[%c15] : memref<192xf32, #tpu.memory_space<smem>>
    %174 = vector.broadcast %173 : f32 to vector<8x32xf32>
    %175 = arith.mulf %174, %172 : vector<8x32xf32>
    %176 = arith.addf %170, %175 : vector<8x32xf32>
    %c108 = arith.constant 108 : index
    %177 = memref.load %arg2[%c108] : memref<192xf32, #tpu.memory_space<smem>>
    %178 = vector.broadcast %177 : f32 to vector<8x32xf32>
    %179 = arith.mulf %178, %172 : vector<8x32xf32>
    %180 = arith.addf %152, %179 : vector<8x32xf32>
    %c0_113 = arith.constant 0 : index
    %c2_114 = arith.constant 2 : index
    %c0_115 = arith.constant 0 : index
    %c1_116 = arith.constant 1 : index
    %c1_117 = arith.constant 1 : index
    %181 = vector.load %arg4[%c0_113, %c2_114, %c0_115, %c1_116, %c1_117] : memref<1x4x1x10x34xf32, #tpu.memory_space<vmem>>, vector<1x1x1x8x32xf32>
    %182 = vector.shape_cast %181 : vector<1x1x1x8x32xf32> to vector<8x32xf32>
    %c16 = arith.constant 16 : index
    %183 = memref.load %arg2[%c16] : memref<192xf32, #tpu.memory_space<smem>>
    %184 = vector.broadcast %183 : f32 to vector<8x32xf32>
    %185 = arith.mulf %184, %182 : vector<8x32xf32>
    %186 = arith.addf %176, %185 : vector<8x32xf32>
    %c109 = arith.constant 109 : index
    %187 = memref.load %arg2[%c109] : memref<192xf32, #tpu.memory_space<smem>>
    %188 = vector.broadcast %187 : f32 to vector<8x32xf32>
    %189 = arith.mulf %188, %182 : vector<8x32xf32>
    %190 = arith.addf %180, %189 : vector<8x32xf32>
    %c0_118 = arith.constant 0 : index
    %c2_119 = arith.constant 2 : index
    %c0_120 = arith.constant 0 : index
    %c1_121 = arith.constant 1 : index
    %c2_122 = arith.constant 2 : index
    %191 = vector.load %arg4[%c0_118, %c2_119, %c0_120, %c1_121, %c2_122] : memref<1x4x1x10x34xf32, #tpu.memory_space<vmem>>, vector<1x1x1x8x32xf32>
    %192 = vector.shape_cast %191 : vector<1x1x1x8x32xf32> to vector<8x32xf32>
    %c17 = arith.constant 17 : index
    %193 = memref.load %arg2[%c17] : memref<192xf32, #tpu.memory_space<smem>>
    %194 = vector.broadcast %193 : f32 to vector<8x32xf32>
    %195 = arith.mulf %194, %192 : vector<8x32xf32>
    %196 = arith.addf %186, %195 : vector<8x32xf32>
    %c110 = arith.constant 110 : index
    %197 = memref.load %arg2[%c110] : memref<192xf32, #tpu.memory_space<smem>>
    %198 = vector.broadcast %197 : f32 to vector<8x32xf32>
    %199 = arith.mulf %198, %192 : vector<8x32xf32>
    %200 = arith.addf %190, %199 : vector<8x32xf32>
    %c0_123 = arith.constant 0 : index
    %c2_124 = arith.constant 2 : index
    %c0_125 = arith.constant 0 : index
    %c2_126 = arith.constant 2 : index
    %c0_127 = arith.constant 0 : index
    %201 = vector.load %arg4[%c0_123, %c2_124, %c0_125, %c2_126, %c0_127] : memref<1x4x1x10x34xf32, #tpu.memory_space<vmem>>, vector<1x1x1x8x32xf32>
    %202 = vector.shape_cast %201 : vector<1x1x1x8x32xf32> to vector<8x32xf32>
    %c111 = arith.constant 111 : index
    %203 = memref.load %arg2[%c111] : memref<192xf32, #tpu.memory_space<smem>>
    %204 = vector.broadcast %203 : f32 to vector<8x32xf32>
    %205 = arith.mulf %204, %202 : vector<8x32xf32>
    %206 = arith.addf %200, %205 : vector<8x32xf32>
    %c0_128 = arith.constant 0 : index
    %c2_129 = arith.constant 2 : index
    %c0_130 = arith.constant 0 : index
    %c2_131 = arith.constant 2 : index
    %c1_132 = arith.constant 1 : index
    %207 = vector.load %arg4[%c0_128, %c2_129, %c0_130, %c2_131, %c1_132] : memref<1x4x1x10x34xf32, #tpu.memory_space<vmem>>, vector<1x1x1x8x32xf32>
    %208 = vector.shape_cast %207 : vector<1x1x1x8x32xf32> to vector<8x32xf32>
    %c112 = arith.constant 112 : index
    %209 = memref.load %arg2[%c112] : memref<192xf32, #tpu.memory_space<smem>>
    %210 = vector.broadcast %209 : f32 to vector<8x32xf32>
    %211 = arith.mulf %210, %208 : vector<8x32xf32>
    %212 = arith.addf %206, %211 : vector<8x32xf32>
    %c0_133 = arith.constant 0 : index
    %c2_134 = arith.constant 2 : index
    %c0_135 = arith.constant 0 : index
    %c2_136 = arith.constant 2 : index
    %c2_137 = arith.constant 2 : index
    %213 = vector.load %arg4[%c0_133, %c2_134, %c0_135, %c2_136, %c2_137] : memref<1x4x1x10x34xf32, #tpu.memory_space<vmem>>, vector<1x1x1x8x32xf32>
    %214 = vector.shape_cast %213 : vector<1x1x1x8x32xf32> to vector<8x32xf32>
    %c113 = arith.constant 113 : index
    %215 = memref.load %arg2[%c113] : memref<192xf32, #tpu.memory_space<smem>>
    %216 = vector.broadcast %215 : f32 to vector<8x32xf32>
    %217 = arith.mulf %216, %214 : vector<8x32xf32>
    %218 = arith.addf %212, %217 : vector<8x32xf32>
    %c0_138 = arith.constant 0 : index
    %c3_139 = arith.constant 3 : index
    %c0_140 = arith.constant 0 : index
    %c0_141 = arith.constant 0 : index
    %c0_142 = arith.constant 0 : index
    %219 = vector.load %arg4[%c0_138, %c3_139, %c0_140, %c0_141, %c0_142] : memref<1x4x1x10x34xf32, #tpu.memory_space<vmem>>, vector<1x1x1x8x32xf32>
    %220 = vector.shape_cast %219 : vector<1x1x1x8x32xf32> to vector<8x32xf32>
    %c18 = arith.constant 18 : index
    %221 = memref.load %arg2[%c18] : memref<192xf32, #tpu.memory_space<smem>>
    %222 = vector.broadcast %221 : f32 to vector<8x32xf32>
    %223 = arith.mulf %222, %220 : vector<8x32xf32>
    %224 = arith.addf %196, %223 : vector<8x32xf32>
    %c0_143 = arith.constant 0 : index
    %c3_144 = arith.constant 3 : index
    %c0_145 = arith.constant 0 : index
    %c0_146 = arith.constant 0 : index
    %c1_147 = arith.constant 1 : index
    %225 = vector.load %arg4[%c0_143, %c3_144, %c0_145, %c0_146, %c1_147] : memref<1x4x1x10x34xf32, #tpu.memory_space<vmem>>, vector<1x1x1x8x32xf32>
    %226 = vector.shape_cast %225 : vector<1x1x1x8x32xf32> to vector<8x32xf32>
    %c19 = arith.constant 19 : index
    %227 = memref.load %arg2[%c19] : memref<192xf32, #tpu.memory_space<smem>>
    %228 = vector.broadcast %227 : f32 to vector<8x32xf32>
    %229 = arith.mulf %228, %226 : vector<8x32xf32>
    %230 = arith.addf %224, %229 : vector<8x32xf32>
    %c0_148 = arith.constant 0 : index
    %c3_149 = arith.constant 3 : index
    %c0_150 = arith.constant 0 : index
    %c0_151 = arith.constant 0 : index
    %c2_152 = arith.constant 2 : index
    %231 = vector.load %arg4[%c0_148, %c3_149, %c0_150, %c0_151, %c2_152] : memref<1x4x1x10x34xf32, #tpu.memory_space<vmem>>, vector<1x1x1x8x32xf32>
    %232 = vector.shape_cast %231 : vector<1x1x1x8x32xf32> to vector<8x32xf32>
    %c20 = arith.constant 20 : index
    %233 = memref.load %arg2[%c20] : memref<192xf32, #tpu.memory_space<smem>>
    %234 = vector.broadcast %233 : f32 to vector<8x32xf32>
    %235 = arith.mulf %234, %232 : vector<8x32xf32>
    %236 = arith.addf %230, %235 : vector<8x32xf32>
    %c0_153 = arith.constant 0 : index
    %c3_154 = arith.constant 3 : index
    %c0_155 = arith.constant 0 : index
    %c1_156 = arith.constant 1 : index
    %c0_157 = arith.constant 0 : index
    %237 = vector.load %arg4[%c0_153, %c3_154, %c0_155, %c1_156, %c0_157] : memref<1x4x1x10x34xf32, #tpu.memory_space<vmem>>, vector<1x1x1x8x32xf32>
    %238 = vector.shape_cast %237 : vector<1x1x1x8x32xf32> to vector<8x32xf32>
    %c21 = arith.constant 21 : index
    %239 = memref.load %arg2[%c21] : memref<192xf32, #tpu.memory_space<smem>>
    %240 = vector.broadcast %239 : f32 to vector<8x32xf32>
    %241 = arith.mulf %240, %238 : vector<8x32xf32>
    %242 = arith.addf %236, %241 : vector<8x32xf32>
    %c114 = arith.constant 114 : index
    %243 = memref.load %arg2[%c114] : memref<192xf32, #tpu.memory_space<smem>>
    %244 = vector.broadcast %243 : f32 to vector<8x32xf32>
    %245 = arith.mulf %244, %238 : vector<8x32xf32>
    %246 = arith.addf %218, %245 : vector<8x32xf32>
    %c0_158 = arith.constant 0 : index
    %c3_159 = arith.constant 3 : index
    %c0_160 = arith.constant 0 : index
    %c1_161 = arith.constant 1 : index
    %c1_162 = arith.constant 1 : index
    %247 = vector.load %arg4[%c0_158, %c3_159, %c0_160, %c1_161, %c1_162] : memref<1x4x1x10x34xf32, #tpu.memory_space<vmem>>, vector<1x1x1x8x32xf32>
    %248 = vector.shape_cast %247 : vector<1x1x1x8x32xf32> to vector<8x32xf32>
    %c22 = arith.constant 22 : index
    %249 = memref.load %arg2[%c22] : memref<192xf32, #tpu.memory_space<smem>>
    %250 = vector.broadcast %249 : f32 to vector<8x32xf32>
    %251 = arith.mulf %250, %248 : vector<8x32xf32>
    %252 = arith.addf %242, %251 : vector<8x32xf32>
    %c115 = arith.constant 115 : index
    %253 = memref.load %arg2[%c115] : memref<192xf32, #tpu.memory_space<smem>>
    %254 = vector.broadcast %253 : f32 to vector<8x32xf32>
    %255 = arith.mulf %254, %248 : vector<8x32xf32>
    %256 = arith.addf %246, %255 : vector<8x32xf32>
    %c0_163 = arith.constant 0 : index
    %c3_164 = arith.constant 3 : index
    %c0_165 = arith.constant 0 : index
    %c1_166 = arith.constant 1 : index
    %c2_167 = arith.constant 2 : index
    %257 = vector.load %arg4[%c0_163, %c3_164, %c0_165, %c1_166, %c2_167] : memref<1x4x1x10x34xf32, #tpu.memory_space<vmem>>, vector<1x1x1x8x32xf32>
    %258 = vector.shape_cast %257 : vector<1x1x1x8x32xf32> to vector<8x32xf32>
    %c23 = arith.constant 23 : index
    %259 = memref.load %arg2[%c23] : memref<192xf32, #tpu.memory_space<smem>>
    %260 = vector.broadcast %259 : f32 to vector<8x32xf32>
    %261 = arith.mulf %260, %258 : vector<8x32xf32>
    %262 = arith.addf %252, %261 : vector<8x32xf32>
    %c116 = arith.constant 116 : index
    %263 = memref.load %arg2[%c116] : memref<192xf32, #tpu.memory_space<smem>>
    %264 = vector.broadcast %263 : f32 to vector<8x32xf32>
    %265 = arith.mulf %264, %258 : vector<8x32xf32>
    %266 = arith.addf %256, %265 : vector<8x32xf32>
    %c0_168 = arith.constant 0 : index
    %c3_169 = arith.constant 3 : index
    %c0_170 = arith.constant 0 : index
    %c2_171 = arith.constant 2 : index
    %c0_172 = arith.constant 0 : index
    %267 = vector.load %arg4[%c0_168, %c3_169, %c0_170, %c2_171, %c0_172] : memref<1x4x1x10x34xf32, #tpu.memory_space<vmem>>, vector<1x1x1x8x32xf32>
    %268 = vector.shape_cast %267 : vector<1x1x1x8x32xf32> to vector<8x32xf32>
    %c117 = arith.constant 117 : index
    %269 = memref.load %arg2[%c117] : memref<192xf32, #tpu.memory_space<smem>>
    %270 = vector.broadcast %269 : f32 to vector<8x32xf32>
    %271 = arith.mulf %270, %268 : vector<8x32xf32>
    %272 = arith.addf %266, %271 : vector<8x32xf32>
    %c0_173 = arith.constant 0 : index
    %c3_174 = arith.constant 3 : index
    %c0_175 = arith.constant 0 : index
    %c2_176 = arith.constant 2 : index
    %c1_177 = arith.constant 1 : index
    %273 = vector.load %arg4[%c0_173, %c3_174, %c0_175, %c2_176, %c1_177] : memref<1x4x1x10x34xf32, #tpu.memory_space<vmem>>, vector<1x1x1x8x32xf32>
    %274 = vector.shape_cast %273 : vector<1x1x1x8x32xf32> to vector<8x32xf32>
    %c118 = arith.constant 118 : index
    %275 = memref.load %arg2[%c118] : memref<192xf32, #tpu.memory_space<smem>>
    %276 = vector.broadcast %275 : f32 to vector<8x32xf32>
    %277 = arith.mulf %276, %274 : vector<8x32xf32>
    %278 = arith.addf %272, %277 : vector<8x32xf32>
    %c0_178 = arith.constant 0 : index
    %c3_179 = arith.constant 3 : index
    %c0_180 = arith.constant 0 : index
    %c2_181 = arith.constant 2 : index
    %c2_182 = arith.constant 2 : index
    %279 = vector.load %arg4[%c0_178, %c3_179, %c0_180, %c2_181, %c2_182] : memref<1x4x1x10x34xf32, #tpu.memory_space<vmem>>, vector<1x1x1x8x32xf32>
    %280 = vector.shape_cast %279 : vector<1x1x1x8x32xf32> to vector<8x32xf32>
    %c119 = arith.constant 119 : index
    %281 = memref.load %arg2[%c119] : memref<192xf32, #tpu.memory_space<smem>>
    %282 = vector.broadcast %281 : f32 to vector<8x32xf32>
    %283 = arith.mulf %282, %280 : vector<8x32xf32>
    %284 = arith.addf %278, %283 : vector<8x32xf32>
    %cst_183 = arith.constant dense<0.000000e+00> : vector<16x32xf32>
    %285 = tpu.matmul %6, %262, %cst_183 {dimension_numbers = #tpu.dot_dimension_numbers<[1], [0], [0], [1], [0, 0, 1, 1], [], []>} : vector<16x8xf32>, vector<8x32xf32>, vector<16x32xf32> -> vector<16x32xf32>
    %cst_184 = arith.constant dense<0.000000e+00> : vector<16x32xf32>
    %286 = tpu.matmul %13, %284, %cst_184 {dimension_numbers = #tpu.dot_dimension_numbers<[1], [0], [0], [1], [0, 0, 1, 1], [], []>} : vector<16x8xf32>, vector<8x32xf32>, vector<16x32xf32> -> vector<16x32xf32>
    %287 = arith.addf %285, %286 : vector<16x32xf32>
    %c0_185 = arith.constant 0 : index
    %c0_186 = arith.constant 0 : index
    %c0_187 = arith.constant 0 : index
    %c0_188 = arith.constant 0 : index
    %288 = vector.load %arg5[%c0_185, %c0_186, %c0_187, %c0_188] : memref<1x4x16x32xf32, #tpu.memory_space<vmem>>, vector<1x1x16x32xf32>
    %289 = vector.shape_cast %288 : vector<1x1x16x32xf32> to vector<16x32xf32>
    %290 = vector.shape_cast %287 : vector<16x32xf32> to vector<1x1x16x32xf32>
    tpu.vector_store %arg5[%c0_185, %c0_186, %c0_187, %c0_188], %290 {strides = array<i32>} : memref<1x4x16x32xf32, #tpu.memory_space<vmem>>, vector<1x1x16x32xf32>,
    %c1_189 = arith.constant 1 : index
    %291 = memref.load %arg3[%c1_189] : memref<4xf32, #tpu.memory_space<smem>>
    %cst_190 = arith.constant 0.000000e+00 : f32
    %292 = vector.broadcast %cst_190 : f32 to vector<8x32xf32>
    %293 = vector.broadcast %291 : f32 to vector<8x32xf32>
    %294 = arith.addf %292, %293 : vector<8x32xf32>
    %cst_191 = arith.constant 0.000000e+00 : f32
    %295 = vector.broadcast %cst_191 : f32 to vector<8x32xf32>
    %296 = vector.broadcast %291 : f32 to vector<8x32xf32>
    %297 = arith.addf %295, %296 : vector<8x32xf32>
    %c0_192 = arith.constant 0 : index
    %c0_193 = arith.constant 0 : index
    %c0_194 = arith.constant 0 : index
    %c0_195 = arith.constant 0 : index
    %c0_196 = arith.constant 0 : index
    %298 = vector.load %arg4[%c0_192, %c0_193, %c0_194, %c0_195, %c0_196] : memref<1x4x1x10x34xf32, #tpu.memory_space<vmem>>, vector<1x1x1x8x32xf32>
    %299 = vector.shape_cast %298 : vector<1x1x1x8x32xf32> to vector<8x32xf32>
    %c24 = arith.constant 24 : index
    %300 = memref.load %arg2[%c24] : memref<192xf32, #tpu.memory_space<smem>>
    %301 = vector.broadcast %300 : f32 to vector<8x32xf32>
    %302 = arith.mulf %301, %299 : vector<8x32xf32>
    %303 = arith.addf %294, %302 : vector<8x32xf32>
    %c0_197 = arith.constant 0 : index
    %c0_198 = arith.constant 0 : index
    %c0_199 = arith.constant 0 : index
    %c0_200 = arith.constant 0 : index
    %c1_201 = arith.constant 1 : index
    %304 = vector.load %arg4[%c0_197, %c0_198, %c0_199, %c0_200, %c1_201] : memref<1x4x1x10x34xf32, #tpu.memory_space<vmem>>, vector<1x1x1x8x32xf32>
    %305 = vector.shape_cast %304 : vector<1x1x1x8x32xf32> to vector<8x32xf32>
    %c25 = arith.constant 25 : index
    %306 = memref.load %arg2[%c25] : memref<192xf32, #tpu.memory_space<smem>>
    %307 = vector.broadcast %306 : f32 to vector<8x32xf32>
    %308 = arith.mulf %307, %305 : vector<8x32xf32>
    %309 = arith.addf %303, %308 : vector<8x32xf32>
    %c0_202 = arith.constant 0 : index
    %c0_203 = arith.constant 0 : index
    %c0_204 = arith.constant 0 : index
    %c0_205 = arith.constant 0 : index
    %c2_206 = arith.constant 2 : index
    %310 = vector.load %arg4[%c0_202, %c0_203, %c0_204, %c0_205, %c2_206] : memref<1x4x1x10x34xf32, #tpu.memory_space<vmem>>, vector<1x1x1x8x32xf32>
    %311 = vector.shape_cast %310 : vector<1x1x1x8x32xf32> to vector<8x32xf32>
    %c26 = arith.constant 26 : index
    %312 = memref.load %arg2[%c26] : memref<192xf32, #tpu.memory_space<smem>>
    %313 = vector.broadcast %312 : f32 to vector<8x32xf32>
    %314 = arith.mulf %313, %311 : vector<8x32xf32>
    %315 = arith.addf %309, %314 : vector<8x32xf32>
    %c0_207 = arith.constant 0 : index
    %c0_208 = arith.constant 0 : index
    %c0_209 = arith.constant 0 : index
    %c1_210 = arith.constant 1 : index
    %c0_211 = arith.constant 0 : index
    %316 = vector.load %arg4[%c0_207, %c0_208, %c0_209, %c1_210, %c0_211] : memref<1x4x1x10x34xf32, #tpu.memory_space<vmem>>, vector<1x1x1x8x32xf32>
    %317 = vector.shape_cast %316 : vector<1x1x1x8x32xf32> to vector<8x32xf32>
    %c27 = arith.constant 27 : index
    %318 = memref.load %arg2[%c27] : memref<192xf32, #tpu.memory_space<smem>>
    %319 = vector.broadcast %318 : f32 to vector<8x32xf32>
    %320 = arith.mulf %319, %317 : vector<8x32xf32>
    %321 = arith.addf %315, %320 : vector<8x32xf32>
    %c120 = arith.constant 120 : index
    %322 = memref.load %arg2[%c120] : memref<192xf32, #tpu.memory_space<smem>>
    %323 = vector.broadcast %322 : f32 to vector<8x32xf32>
    %324 = arith.mulf %323, %317 : vector<8x32xf32>
    %325 = arith.addf %297, %324 : vector<8x32xf32>
    %c0_212 = arith.constant 0 : index
    %c0_213 = arith.constant 0 : index
    %c0_214 = arith.constant 0 : index
    %c1_215 = arith.constant 1 : index
    %c1_216 = arith.constant 1 : index
    %326 = vector.load %arg4[%c0_212, %c0_213, %c0_214, %c1_215, %c1_216] : memref<1x4x1x10x34xf32, #tpu.memory_space<vmem>>, vector<1x1x1x8x32xf32>
    %327 = vector.shape_cast %326 : vector<1x1x1x8x32xf32> to vector<8x32xf32>
    %c28 = arith.constant 28 : index
    %328 = memref.load %arg2[%c28] : memref<192xf32, #tpu.memory_space<smem>>
    %329 = vector.broadcast %328 : f32 to vector<8x32xf32>
    %330 = arith.mulf %329, %327 : vector<8x32xf32>
    %331 = arith.addf %321, %330 : vector<8x32xf32>
    %c121 = arith.constant 121 : index
    %332 = memref.load %arg2[%c121] : memref<192xf32, #tpu.memory_space<smem>>
    %333 = vector.broadcast %332 : f32 to vector<8x32xf32>
    %334 = arith.mulf %333, %327 : vector<8x32xf32>
    %335 = arith.addf %325, %334 : vector<8x32xf32>
    %c0_217 = arith.constant 0 : index
    %c0_218 = arith.constant 0 : index
    %c0_219 = arith.constant 0 : index
    %c1_220 = arith.constant 1 : index
    %c2_221 = arith.constant 2 : index
    %336 = vector.load %arg4[%c0_217, %c0_218, %c0_219, %c1_220, %c2_221] : memref<1x4x1x10x34xf32, #tpu.memory_space<vmem>>, vector<1x1x1x8x32xf32>
    %337 = vector.shape_cast %336 : vector<1x1x1x8x32xf32> to vector<8x32xf32>
    %c29 = arith.constant 29 : index
    %338 = memref.load %arg2[%c29] : memref<192xf32, #tpu.memory_space<smem>>
    %339 = vector.broadcast %338 : f32 to vector<8x32xf32>
    %340 = arith.mulf %339, %337 : vector<8x32xf32>
    %341 = arith.addf %331, %340 : vector<8x32xf32>
    %c122 = arith.constant 122 : index
    %342 = memref.load %arg2[%c122] : memref<192xf32, #tpu.memory_space<smem>>
    %343 = vector.broadcast %342 : f32 to vector<8x32xf32>
    %344 = arith.mulf %343, %337 : vector<8x32xf32>
    %345 = arith.addf %335, %344 : vector<8x32xf32>
    %c0_222 = arith.constant 0 : index
    %c0_223 = arith.constant 0 : index
    %c0_224 = arith.constant 0 : index
    %c2_225 = arith.constant 2 : index
    %c0_226 = arith.constant 0 : index
    %346 = vector.load %arg4[%c0_222, %c0_223, %c0_224, %c2_225, %c0_226] : memref<1x4x1x10x34xf32, #tpu.memory_space<vmem>>, vector<1x1x1x8x32xf32>
    %347 = vector.shape_cast %346 : vector<1x1x1x8x32xf32> to vector<8x32xf32>
    %c123 = arith.constant 123 : index
    %348 = memref.load %arg2[%c123] : memref<192xf32, #tpu.memory_space<smem>>
    %349 = vector.broadcast %348 : f32 to vector<8x32xf32>
    %350 = arith.mulf %349, %347 : vector<8x32xf32>
    %351 = arith.addf %345, %350 : vector<8x32xf32>
    %c0_227 = arith.constant 0 : index
    %c0_228 = arith.constant 0 : index
    %c0_229 = arith.constant 0 : index
    %c2_230 = arith.constant 2 : index
    %c1_231 = arith.constant 1 : index
    %352 = vector.load %arg4[%c0_227, %c0_228, %c0_229, %c2_230, %c1_231] : memref<1x4x1x10x34xf32, #tpu.memory_space<vmem>>, vector<1x1x1x8x32xf32>
    %353 = vector.shape_cast %352 : vector<1x1x1x8x32xf32> to vector<8x32xf32>
    %c124 = arith.constant 124 : index
    %354 = memref.load %arg2[%c124] : memref<192xf32, #tpu.memory_space<smem>>
    %355 = vector.broadcast %354 : f32 to vector<8x32xf32>
    %356 = arith.mulf %355, %353 : vector<8x32xf32>
    %357 = arith.addf %351, %356 : vector<8x32xf32>
    %c0_232 = arith.constant 0 : index
    %c0_233 = arith.constant 0 : index
    %c0_234 = arith.constant 0 : index
    %c2_235 = arith.constant 2 : index
    %c2_236 = arith.constant 2 : index
    %358 = vector.load %arg4[%c0_232, %c0_233, %c0_234, %c2_235, %c2_236] : memref<1x4x1x10x34xf32, #tpu.memory_space<vmem>>, vector<1x1x1x8x32xf32>
    %359 = vector.shape_cast %358 : vector<1x1x1x8x32xf32> to vector<8x32xf32>
    %c125 = arith.constant 125 : index
    %360 = memref.load %arg2[%c125] : memref<192xf32, #tpu.memory_space<smem>>
    %361 = vector.broadcast %360 : f32 to vector<8x32xf32>
    %362 = arith.mulf %361, %359 : vector<8x32xf32>
    %363 = arith.addf %357, %362 : vector<8x32xf32>
    %c0_237 = arith.constant 0 : index
    %c1_238 = arith.constant 1 : index
    %c0_239 = arith.constant 0 : index
    %c0_240 = arith.constant 0 : index
    %c0_241 = arith.constant 0 : index
    %364 = vector.load %arg4[%c0_237, %c1_238, %c0_239, %c0_240, %c0_241] : memref<1x4x1x10x34xf32, #tpu.memory_space<vmem>>, vector<1x1x1x8x32xf32>
    %365 = vector.shape_cast %364 : vector<1x1x1x8x32xf32> to vector<8x32xf32>
    %c30 = arith.constant 30 : index
    %366 = memref.load %arg2[%c30] : memref<192xf32, #tpu.memory_space<smem>>
    %367 = vector.broadcast %366 : f32 to vector<8x32xf32>
    %368 = arith.mulf %367, %365 : vector<8x32xf32>
    %369 = arith.addf %341, %368 : vector<8x32xf32>
    %c0_242 = arith.constant 0 : index
    %c1_243 = arith.constant 1 : index
    %c0_244 = arith.constant 0 : index
    %c0_245 = arith.constant 0 : index
    %c1_246 = arith.constant 1 : index
    %370 = vector.load %arg4[%c0_242, %c1_243, %c0_244, %c0_245, %c1_246] : memref<1x4x1x10x34xf32, #tpu.memory_space<vmem>>, vector<1x1x1x8x32xf32>
    %371 = vector.shape_cast %370 : vector<1x1x1x8x32xf32> to vector<8x32xf32>
    %c31 = arith.constant 31 : index
    %372 = memref.load %arg2[%c31] : memref<192xf32, #tpu.memory_space<smem>>
    %373 = vector.broadcast %372 : f32 to vector<8x32xf32>
    %374 = arith.mulf %373, %371 : vector<8x32xf32>
    %375 = arith.addf %369, %374 : vector<8x32xf32>
    %c0_247 = arith.constant 0 : index
    %c1_248 = arith.constant 1 : index
    %c0_249 = arith.constant 0 : index
    %c0_250 = arith.constant 0 : index
    %c2_251 = arith.constant 2 : index
    %376 = vector.load %arg4[%c0_247, %c1_248, %c0_249, %c0_250, %c2_251] : memref<1x4x1x10x34xf32, #tpu.memory_space<vmem>>, vector<1x1x1x8x32xf32>
    %377 = vector.shape_cast %376 : vector<1x1x1x8x32xf32> to vector<8x32xf32>
    %c32 = arith.constant 32 : index
    %378 = memref.load %arg2[%c32] : memref<192xf32, #tpu.memory_space<smem>>
    %379 = vector.broadcast %378 : f32 to vector<8x32xf32>
    %380 = arith.mulf %379, %377 : vector<8x32xf32>
    %381 = arith.addf %375, %380 : vector<8x32xf32>
    %c0_252 = arith.constant 0 : index
    %c1_253 = arith.constant 1 : index
    %c0_254 = arith.constant 0 : index
    %c1_255 = arith.constant 1 : index
    %c0_256 = arith.constant 0 : index
    %382 = vector.load %arg4[%c0_252, %c1_253, %c0_254, %c1_255, %c0_256] : memref<1x4x1x10x34xf32, #tpu.memory_space<vmem>>, vector<1x1x1x8x32xf32>
    %383 = vector.shape_cast %382 : vector<1x1x1x8x32xf32> to vector<8x32xf32>
    %c33 = arith.constant 33 : index
    %384 = memref.load %arg2[%c33] : memref<192xf32, #tpu.memory_space<smem>>
    %385 = vector.broadcast %384 : f32 to vector<8x32xf32>
    %386 = arith.mulf %385, %383 : vector<8x32xf32>
    %387 = arith.addf %381, %386 : vector<8x32xf32>
    %c126 = arith.constant 126 : index
    %388 = memref.load %arg2[%c126] : memref<192xf32, #tpu.memory_space<smem>>
    %389 = vector.broadcast %388 : f32 to vector<8x32xf32>
    %390 = arith.mulf %389, %383 : vector<8x32xf32>
    %391 = arith.addf %363, %390 : vector<8x32xf32>
    %c0_257 = arith.constant 0 : index
    %c1_258 = arith.constant 1 : index
    %c0_259 = arith.constant 0 : index
    %c1_260 = arith.constant 1 : index
    %c1_261 = arith.constant 1 : index
    %392 = vector.load %arg4[%c0_257, %c1_258, %c0_259, %c1_260, %c1_261] : memref<1x4x1x10x34xf32, #tpu.memory_space<vmem>>, vector<1x1x1x8x32xf32>
    %393 = vector.shape_cast %392 : vector<1x1x1x8x32xf32> to vector<8x32xf32>
    %c34 = arith.constant 34 : index
    %394 = memref.load %arg2[%c34] : memref<192xf32, #tpu.memory_space<smem>>
    %395 = vector.broadcast %394 : f32 to vector<8x32xf32>
    %396 = arith.mulf %395, %393 : vector<8x32xf32>
    %397 = arith.addf %387, %396 : vector<8x32xf32>
    %c127 = arith.constant 127 : index
    %398 = memref.load %arg2[%c127] : memref<192xf32, #tpu.memory_space<smem>>
    %399 = vector.broadcast %398 : f32 to vector<8x32xf32>
    %400 = arith.mulf %399, %393 : vector<8x32xf32>
    %401 = arith.addf %391, %400 : vector<8x32xf32>
    %c0_262 = arith.constant 0 : index
    %c1_263 = arith.constant 1 : index
    %c0_264 = arith.constant 0 : index
    %c1_265 = arith.constant 1 : index
    %c2_266 = arith.constant 2 : index
    %402 = vector.load %arg4[%c0_262, %c1_263, %c0_264, %c1_265, %c2_266] : memref<1x4x1x10x34xf32, #tpu.memory_space<vmem>>, vector<1x1x1x8x32xf32>
    %403 = vector.shape_cast %402 : vector<1x1x1x8x32xf32> to vector<8x32xf32>
    %c35 = arith.constant 35 : index
    %404 = memref.load %arg2[%c35] : memref<192xf32, #tpu.memory_space<smem>>
    %405 = vector.broadcast %404 : f32 to vector<8x32xf32>
    %406 = arith.mulf %405, %403 : vector<8x32xf32>
    %407 = arith.addf %397, %406 : vector<8x32xf32>
    %c128 = arith.constant 128 : index
    %408 = memref.load %arg2[%c128] : memref<192xf32, #tpu.memory_space<smem>>
    %409 = vector.broadcast %408 : f32 to vector<8x32xf32>
    %410 = arith.mulf %409, %403 : vector<8x32xf32>
    %411 = arith.addf %401, %410 : vector<8x32xf32>
    %c0_267 = arith.constant 0 : index
    %c1_268 = arith.constant 1 : index
    %c0_269 = arith.constant 0 : index
    %c2_270 = arith.constant 2 : index
    %c0_271 = arith.constant 0 : index
    %412 = vector.load %arg4[%c0_267, %c1_268, %c0_269, %c2_270, %c0_271] : memref<1x4x1x10x34xf32, #tpu.memory_space<vmem>>, vector<1x1x1x8x32xf32>
    %413 = vector.shape_cast %412 : vector<1x1x1x8x32xf32> to vector<8x32xf32>
    %c129 = arith.constant 129 : index
    %414 = memref.load %arg2[%c129] : memref<192xf32, #tpu.memory_space<smem>>
    %415 = vector.broadcast %414 : f32 to vector<8x32xf32>
    %416 = arith.mulf %415, %413 : vector<8x32xf32>
    %417 = arith.addf %411, %416 : vector<8x32xf32>
    %c0_272 = arith.constant 0 : index
    %c1_273 = arith.constant 1 : index
    %c0_274 = arith.constant 0 : index
    %c2_275 = arith.constant 2 : index
    %c1_276 = arith.constant 1 : index
    %418 = vector.load %arg4[%c0_272, %c1_273, %c0_274, %c2_275, %c1_276] : memref<1x4x1x10x34xf32, #tpu.memory_space<vmem>>, vector<1x1x1x8x32xf32>
    %419 = vector.shape_cast %418 : vector<1x1x1x8x32xf32> to vector<8x32xf32>
    %c130 = arith.constant 130 : index
    %420 = memref.load %arg2[%c130] : memref<192xf32, #tpu.memory_space<smem>>
    %421 = vector.broadcast %420 : f32 to vector<8x32xf32>
    %422 = arith.mulf %421, %419 : vector<8x32xf32>
    %423 = arith.addf %417, %422 : vector<8x32xf32>
    %c0_277 = arith.constant 0 : index
    %c1_278 = arith.constant 1 : index
    %c0_279 = arith.constant 0 : index
    %c2_280 = arith.constant 2 : index
    %c2_281 = arith.constant 2 : index
    %424 = vector.load %arg4[%c0_277, %c1_278, %c0_279, %c2_280, %c2_281] : memref<1x4x1x10x34xf32, #tpu.memory_space<vmem>>, vector<1x1x1x8x32xf32>
    %425 = vector.shape_cast %424 : vector<1x1x1x8x32xf32> to vector<8x32xf32>
    %c131 = arith.constant 131 : index
    %426 = memref.load %arg2[%c131] : memref<192xf32, #tpu.memory_space<smem>>
    %427 = vector.broadcast %426 : f32 to vector<8x32xf32>
    %428 = arith.mulf %427, %425 : vector<8x32xf32>
    %429 = arith.addf %423, %428 : vector<8x32xf32>
    %c0_282 = arith.constant 0 : index
    %c2_283 = arith.constant 2 : index
    %c0_284 = arith.constant 0 : index
    %c0_285 = arith.constant 0 : index
    %c0_286 = arith.constant 0 : index
    %430 = vector.load %arg4[%c0_282, %c2_283, %c0_284, %c0_285, %c0_286] : memref<1x4x1x10x34xf32, #tpu.memory_space<vmem>>, vector<1x1x1x8x32xf32>
    %431 = vector.shape_cast %430 : vector<1x1x1x8x32xf32> to vector<8x32xf32>
    %c36 = arith.constant 36 : index
    %432 = memref.load %arg2[%c36] : memref<192xf32, #tpu.memory_space<smem>>
    %433 = vector.broadcast %432 : f32 to vector<8x32xf32>
    %434 = arith.mulf %433, %431 : vector<8x32xf32>
    %435 = arith.addf %407, %434 : vector<8x32xf32>
    %c0_287 = arith.constant 0 : index
    %c2_288 = arith.constant 2 : index
    %c0_289 = arith.constant 0 : index
    %c0_290 = arith.constant 0 : index
    %c1_291 = arith.constant 1 : index
    %436 = vector.load %arg4[%c0_287, %c2_288, %c0_289, %c0_290, %c1_291] : memref<1x4x1x10x34xf32, #tpu.memory_space<vmem>>, vector<1x1x1x8x32xf32>
    %437 = vector.shape_cast %436 : vector<1x1x1x8x32xf32> to vector<8x32xf32>
    %c37 = arith.constant 37 : index
    %438 = memref.load %arg2[%c37] : memref<192xf32, #tpu.memory_space<smem>>
    %439 = vector.broadcast %438 : f32 to vector<8x32xf32>
    %440 = arith.mulf %439, %437 : vector<8x32xf32>
    %441 = arith.addf %435, %440 : vector<8x32xf32>
    %c0_292 = arith.constant 0 : index
    %c2_293 = arith.constant 2 : index
    %c0_294 = arith.constant 0 : index
    %c0_295 = arith.constant 0 : index
    %c2_296 = arith.constant 2 : index
    %442 = vector.load %arg4[%c0_292, %c2_293, %c0_294, %c0_295, %c2_296] : memref<1x4x1x10x34xf32, #tpu.memory_space<vmem>>, vector<1x1x1x8x32xf32>
    %443 = vector.shape_cast %442 : vector<1x1x1x8x32xf32> to vector<8x32xf32>
    %c38 = arith.constant 38 : index
    %444 = memref.load %arg2[%c38] : memref<192xf32, #tpu.memory_space<smem>>
    %445 = vector.broadcast %444 : f32 to vector<8x32xf32>
    %446 = arith.mulf %445, %443 : vector<8x32xf32>
    %447 = arith.addf %441, %446 : vector<8x32xf32>
    %c0_297 = arith.constant 0 : index
    %c2_298 = arith.constant 2 : index
    %c0_299 = arith.constant 0 : index
    %c1_300 = arith.constant 1 : index
    %c0_301 = arith.constant 0 : index
    %448 = vector.load %arg4[%c0_297, %c2_298, %c0_299, %c1_300, %c0_301] : memref<1x4x1x10x34xf32, #tpu.memory_space<vmem>>, vector<1x1x1x8x32xf32>
    %449 = vector.shape_cast %448 : vector<1x1x1x8x32xf32> to vector<8x32xf32>
    %c39 = arith.constant 39 : index
    %450 = memref.load %arg2[%c39] : memref<192xf32, #tpu.memory_space<smem>>
    %451 = vector.broadcast %450 : f32 to vector<8x32xf32>
    %452 = arith.mulf %451, %449 : vector<8x32xf32>
    %453 = arith.addf %447, %452 : vector<8x32xf32>
    %c132 = arith.constant 132 : index
    %454 = memref.load %arg2[%c132] : memref<192xf32, #tpu.memory_space<smem>>
    %455 = vector.broadcast %454 : f32 to vector<8x32xf32>
    %456 = arith.mulf %455, %449 : vector<8x32xf32>
    %457 = arith.addf %429, %456 : vector<8x32xf32>
    %c0_302 = arith.constant 0 : index
    %c2_303 = arith.constant 2 : index
    %c0_304 = arith.constant 0 : index
    %c1_305 = arith.constant 1 : index
    %c1_306 = arith.constant 1 : index
    %458 = vector.load %arg4[%c0_302, %c2_303, %c0_304, %c1_305, %c1_306] : memref<1x4x1x10x34xf32, #tpu.memory_space<vmem>>, vector<1x1x1x8x32xf32>
    %459 = vector.shape_cast %458 : vector<1x1x1x8x32xf32> to vector<8x32xf32>
    %c40 = arith.constant 40 : index
    %460 = memref.load %arg2[%c40] : memref<192xf32, #tpu.memory_space<smem>>
    %461 = vector.broadcast %460 : f32 to vector<8x32xf32>
    %462 = arith.mulf %461, %459 : vector<8x32xf32>
    %463 = arith.addf %453, %462 : vector<8x32xf32>
    %c133 = arith.constant 133 : index
    %464 = memref.load %arg2[%c133] : memref<192xf32, #tpu.memory_space<smem>>
    %465 = vector.broadcast %464 : f32 to vector<8x32xf32>
    %466 = arith.mulf %465, %459 : vector<8x32xf32>
    %467 = arith.addf %457, %466 : vector<8x32xf32>
    %c0_307 = arith.constant 0 : index
    %c2_308 = arith.constant 2 : index
    %c0_309 = arith.constant 0 : index
    %c1_310 = arith.constant 1 : index
    %c2_311 = arith.constant 2 : index
    %468 = vector.load %arg4[%c0_307, %c2_308, %c0_309, %c1_310, %c2_311] : memref<1x4x1x10x34xf32, #tpu.memory_space<vmem>>, vector<1x1x1x8x32xf32>
    %469 = vector.shape_cast %468 : vector<1x1x1x8x32xf32> to vector<8x32xf32>
    %c41 = arith.constant 41 : index
    %470 = memref.load %arg2[%c41] : memref<192xf32, #tpu.memory_space<smem>>
    %471 = vector.broadcast %470 : f32 to vector<8x32xf32>
    %472 = arith.mulf %471, %469 : vector<8x32xf32>
    %473 = arith.addf %463, %472 : vector<8x32xf32>
    %c134 = arith.constant 134 : index
    %474 = memref.load %arg2[%c134] : memref<192xf32, #tpu.memory_space<smem>>
    %475 = vector.broadcast %474 : f32 to vector<8x32xf32>
    %476 = arith.mulf %475, %469 : vector<8x32xf32>
    %477 = arith.addf %467, %476 : vector<8x32xf32>
    %c0_312 = arith.constant 0 : index
    %c2_313 = arith.constant 2 : index
    %c0_314 = arith.constant 0 : index
    %c2_315 = arith.constant 2 : index
    %c0_316 = arith.constant 0 : index
    %478 = vector.load %arg4[%c0_312, %c2_313, %c0_314, %c2_315, %c0_316] : memref<1x4x1x10x34xf32, #tpu.memory_space<vmem>>, vector<1x1x1x8x32xf32>
    %479 = vector.shape_cast %478 : vector<1x1x1x8x32xf32> to vector<8x32xf32>
    %c135 = arith.constant 135 : index
    %480 = memref.load %arg2[%c135] : memref<192xf32, #tpu.memory_space<smem>>
    %481 = vector.broadcast %480 : f32 to vector<8x32xf32>
    %482 = arith.mulf %481, %479 : vector<8x32xf32>
    %483 = arith.addf %477, %482 : vector<8x32xf32>
    %c0_317 = arith.constant 0 : index
    %c2_318 = arith.constant 2 : index
    %c0_319 = arith.constant 0 : index
    %c2_320 = arith.constant 2 : index
    %c1_321 = arith.constant 1 : index
    %484 = vector.load %arg4[%c0_317, %c2_318, %c0_319, %c2_320, %c1_321] : memref<1x4x1x10x34xf32, #tpu.memory_space<vmem>>, vector<1x1x1x8x32xf32>
    %485 = vector.shape_cast %484 : vector<1x1x1x8x32xf32> to vector<8x32xf32>
    %c136 = arith.constant 136 : index
    %486 = memref.load %arg2[%c136] : memref<192xf32, #tpu.memory_space<smem>>
    %487 = vector.broadcast %486 : f32 to vector<8x32xf32>
    %488 = arith.mulf %487, %485 : vector<8x32xf32>
    %489 = arith.addf %483, %488 : vector<8x32xf32>
    %c0_322 = arith.constant 0 : index
    %c2_323 = arith.constant 2 : index
    %c0_324 = arith.constant 0 : index
    %c2_325 = arith.constant 2 : index
    %c2_326 = arith.constant 2 : index
    %490 = vector.load %arg4[%c0_322, %c2_323, %c0_324, %c2_325, %c2_326] : memref<1x4x1x10x34xf32, #tpu.memory_space<vmem>>, vector<1x1x1x8x32xf32>
    %491 = vector.shape_cast %490 : vector<1x1x1x8x32xf32> to vector<8x32xf32>
    %c137 = arith.constant 137 : index
    %492 = memref.load %arg2[%c137] : memref<192xf32, #tpu.memory_space<smem>>
    %493 = vector.broadcast %492 : f32 to vector<8x32xf32>
    %494 = arith.mulf %493, %491 : vector<8x32xf32>
    %495 = arith.addf %489, %494 : vector<8x32xf32>
    %c0_327 = arith.constant 0 : index
    %c3_328 = arith.constant 3 : index
    %c0_329 = arith.constant 0 : index
    %c0_330 = arith.constant 0 : index
    %c0_331 = arith.constant 0 : index
    %496 = vector.load %arg4[%c0_327, %c3_328, %c0_329, %c0_330, %c0_331] : memref<1x4x1x10x34xf32, #tpu.memory_space<vmem>>, vector<1x1x1x8x32xf32>
    %497 = vector.shape_cast %496 : vector<1x1x1x8x32xf32> to vector<8x32xf32>
    %c42 = arith.constant 42 : index
    %498 = memref.load %arg2[%c42] : memref<192xf32, #tpu.memory_space<smem>>
    %499 = vector.broadcast %498 : f32 to vector<8x32xf32>
    %500 = arith.mulf %499, %497 : vector<8x32xf32>
    %501 = arith.addf %473, %500 : vector<8x32xf32>
    %c0_332 = arith.constant 0 : index
    %c3_333 = arith.constant 3 : index
    %c0_334 = arith.constant 0 : index
    %c0_335 = arith.constant 0 : index
    %c1_336 = arith.constant 1 : index
    %502 = vector.load %arg4[%c0_332, %c3_333, %c0_334, %c0_335, %c1_336] : memref<1x4x1x10x34xf32, #tpu.memory_space<vmem>>, vector<1x1x1x8x32xf32>
    %503 = vector.shape_cast %502 : vector<1x1x1x8x32xf32> to vector<8x32xf32>
    %c43 = arith.constant 43 : index
    %504 = memref.load %arg2[%c43] : memref<192xf32, #tpu.memory_space<smem>>
    %505 = vector.broadcast %504 : f32 to vector<8x32xf32>
    %506 = arith.mulf %505, %503 : vector<8x32xf32>
    %507 = arith.addf %501, %506 : vector<8x32xf32>
    %c0_337 = arith.constant 0 : index
    %c3_338 = arith.constant 3 : index
    %c0_339 = arith.constant 0 : index
    %c0_340 = arith.constant 0 : index
    %c2_341 = arith.constant 2 : index
    %508 = vector.load %arg4[%c0_337, %c3_338, %c0_339, %c0_340, %c2_341] : memref<1x4x1x10x34xf32, #tpu.memory_space<vmem>>, vector<1x1x1x8x32xf32>
    %509 = vector.shape_cast %508 : vector<1x1x1x8x32xf32> to vector<8x32xf32>
    %c44 = arith.constant 44 : index
    %510 = memref.load %arg2[%c44] : memref<192xf32, #tpu.memory_space<smem>>
    %511 = vector.broadcast %510 : f32 to vector<8x32xf32>
    %512 = arith.mulf %511, %509 : vector<8x32xf32>
    %513 = arith.addf %507, %512 : vector<8x32xf32>
    %c0_342 = arith.constant 0 : index
    %c3_343 = arith.constant 3 : index
    %c0_344 = arith.constant 0 : index
    %c1_345 = arith.constant 1 : index
    %c0_346 = arith.constant 0 : index
    %514 = vector.load %arg4[%c0_342, %c3_343, %c0_344, %c1_345, %c0_346] : memref<1x4x1x10x34xf32, #tpu.memory_space<vmem>>, vector<1x1x1x8x32xf32>
    %515 = vector.shape_cast %514 : vector<1x1x1x8x32xf32> to vector<8x32xf32>
    %c45 = arith.constant 45 : index
    %516 = memref.load %arg2[%c45] : memref<192xf32, #tpu.memory_space<smem>>
    %517 = vector.broadcast %516 : f32 to vector<8x32xf32>
    %518 = arith.mulf %517, %515 : vector<8x32xf32>
    %519 = arith.addf %513, %518 : vector<8x32xf32>
    %c138 = arith.constant 138 : index
    %520 = memref.load %arg2[%c138] : memref<192xf32, #tpu.memory_space<smem>>
    %521 = vector.broadcast %520 : f32 to vector<8x32xf32>
    %522 = arith.mulf %521, %515 : vector<8x32xf32>
    %523 = arith.addf %495, %522 : vector<8x32xf32>
    %c0_347 = arith.constant 0 : index
    %c3_348 = arith.constant 3 : index
    %c0_349 = arith.constant 0 : index
    %c1_350 = arith.constant 1 : index
    %c1_351 = arith.constant 1 : index
    %524 = vector.load %arg4[%c0_347, %c3_348, %c0_349, %c1_350, %c1_351] : memref<1x4x1x10x34xf32, #tpu.memory_space<vmem>>, vector<1x1x1x8x32xf32>
    %525 = vector.shape_cast %524 : vector<1x1x1x8x32xf32> to vector<8x32xf32>
    %c46 = arith.constant 46 : index
    %526 = memref.load %arg2[%c46] : memref<192xf32, #tpu.memory_space<smem>>
    %527 = vector.broadcast %526 : f32 to vector<8x32xf32>
    %528 = arith.mulf %527, %525 : vector<8x32xf32>
    %529 = arith.addf %519, %528 : vector<8x32xf32>
    %c139 = arith.constant 139 : index
    %530 = memref.load %arg2[%c139] : memref<192xf32, #tpu.memory_space<smem>>
    %531 = vector.broadcast %530 : f32 to vector<8x32xf32>
    %532 = arith.mulf %531, %525 : vector<8x32xf32>
    %533 = arith.addf %523, %532 : vector<8x32xf32>
    %c0_352 = arith.constant 0 : index
    %c3_353 = arith.constant 3 : index
    %c0_354 = arith.constant 0 : index
    %c1_355 = arith.constant 1 : index
    %c2_356 = arith.constant 2 : index
    %534 = vector.load %arg4[%c0_352, %c3_353, %c0_354, %c1_355, %c2_356] : memref<1x4x1x10x34xf32, #tpu.memory_space<vmem>>, vector<1x1x1x8x32xf32>
    %535 = vector.shape_cast %534 : vector<1x1x1x8x32xf32> to vector<8x32xf32>
    %c47 = arith.constant 47 : index
    %536 = memref.load %arg2[%c47] : memref<192xf32, #tpu.memory_space<smem>>
    %537 = vector.broadcast %536 : f32 to vector<8x32xf32>
    %538 = arith.mulf %537, %535 : vector<8x32xf32>
    %539 = arith.addf %529, %538 : vector<8x32xf32>
    %c140 = arith.constant 140 : index
    %540 = memref.load %arg2[%c140] : memref<192xf32, #tpu.memory_space<smem>>
    %541 = vector.broadcast %540 : f32 to vector<8x32xf32>
    %542 = arith.mulf %541, %535 : vector<8x32xf32>
    %543 = arith.addf %533, %542 : vector<8x32xf32>
    %c0_357 = arith.constant 0 : index
    %c3_358 = arith.constant 3 : index
    %c0_359 = arith.constant 0 : index
    %c2_360 = arith.constant 2 : index
    %c0_361 = arith.constant 0 : index
    %544 = vector.load %arg4[%c0_357, %c3_358, %c0_359, %c2_360, %c0_361] : memref<1x4x1x10x34xf32, #tpu.memory_space<vmem>>, vector<1x1x1x8x32xf32>
    %545 = vector.shape_cast %544 : vector<1x1x1x8x32xf32> to vector<8x32xf32>
    %c141 = arith.constant 141 : index
    %546 = memref.load %arg2[%c141] : memref<192xf32, #tpu.memory_space<smem>>
    %547 = vector.broadcast %546 : f32 to vector<8x32xf32>
    %548 = arith.mulf %547, %545 : vector<8x32xf32>
    %549 = arith.addf %543, %548 : vector<8x32xf32>
    %c0_362 = arith.constant 0 : index
    %c3_363 = arith.constant 3 : index
    %c0_364 = arith.constant 0 : index
    %c2_365 = arith.constant 2 : index
    %c1_366 = arith.constant 1 : index
    %550 = vector.load %arg4[%c0_362, %c3_363, %c0_364, %c2_365, %c1_366] : memref<1x4x1x10x34xf32, #tpu.memory_space<vmem>>, vector<1x1x1x8x32xf32>
    %551 = vector.shape_cast %550 : vector<1x1x1x8x32xf32> to vector<8x32xf32>
    %c142 = arith.constant 142 : index
    %552 = memref.load %arg2[%c142] : memref<192xf32, #tpu.memory_space<smem>>
    %553 = vector.broadcast %552 : f32 to vector<8x32xf32>
    %554 = arith.mulf %553, %551 : vector<8x32xf32>
    %555 = arith.addf %549, %554 : vector<8x32xf32>
    %c0_367 = arith.constant 0 : index
    %c3_368 = arith.constant 3 : index
    %c0_369 = arith.constant 0 : index
    %c2_370 = arith.constant 2 : index
    %c2_371 = arith.constant 2 : index
    %556 = vector.load %arg4[%c0_367, %c3_368, %c0_369, %c2_370, %c2_371] : memref<1x4x1x10x34xf32, #tpu.memory_space<vmem>>, vector<1x1x1x8x32xf32>
    %557 = vector.shape_cast %556 : vector<1x1x1x8x32xf32> to vector<8x32xf32>
    %c143 = arith.constant 143 : index
    %558 = memref.load %arg2[%c143] : memref<192xf32, #tpu.memory_space<smem>>
    %559 = vector.broadcast %558 : f32 to vector<8x32xf32>
    %560 = arith.mulf %559, %557 : vector<8x32xf32>
    %561 = arith.addf %555, %560 : vector<8x32xf32>
    %cst_372 = arith.constant dense<0.000000e+00> : vector<16x32xf32>
    %562 = tpu.matmul %6, %539, %cst_372 {dimension_numbers = #tpu.dot_dimension_numbers<[1], [0], [0], [1], [0, 0, 1, 1], [], []>} : vector<16x8xf32>, vector<8x32xf32>, vector<16x32xf32> -> vector<16x32xf32>
    %cst_373 = arith.constant dense<0.000000e+00> : vector<16x32xf32>
    %563 = tpu.matmul %13, %561, %cst_373 {dimension_numbers = #tpu.dot_dimension_numbers<[1], [0], [0], [1], [0, 0, 1, 1], [], []>} : vector<16x8xf32>, vector<8x32xf32>, vector<16x32xf32> -> vector<16x32xf32>
    %564 = arith.addf %562, %563 : vector<16x32xf32>
    %c0_374 = arith.constant 0 : index
    %c1_375 = arith.constant 1 : index
    %c0_376 = arith.constant 0 : index
    %c0_377 = arith.constant 0 : index
    %565 = vector.load %arg5[%c0_374, %c1_375, %c0_376, %c0_377] : memref<1x4x16x32xf32, #tpu.memory_space<vmem>>, vector<1x1x16x32xf32>
    %566 = vector.shape_cast %565 : vector<1x1x16x32xf32> to vector<16x32xf32>
    %567 = vector.shape_cast %564 : vector<16x32xf32> to vector<1x1x16x32xf32>
    tpu.vector_store %arg5[%c0_374, %c1_375, %c0_376, %c0_377], %567 {strides = array<i32>} : memref<1x4x16x32xf32, #tpu.memory_space<vmem>>, vector<1x1x16x32xf32>,
    %c2_378 = arith.constant 2 : index
    %568 = memref.load %arg3[%c2_378] : memref<4xf32, #tpu.memory_space<smem>>
    %cst_379 = arith.constant 0.000000e+00 : f32
    %569 = vector.broadcast %cst_379 : f32 to vector<8x32xf32>
    %570 = vector.broadcast %568 : f32 to vector<8x32xf32>
    %571 = arith.addf %569, %570 : vector<8x32xf32>
    %cst_380 = arith.constant 0.000000e+00 : f32
    %572 = vector.broadcast %cst_380 : f32 to vector<8x32xf32>
    %573 = vector.broadcast %568 : f32 to vector<8x32xf32>
    %574 = arith.addf %572, %573 : vector<8x32xf32>
    %c0_381 = arith.constant 0 : index
    %c0_382 = arith.constant 0 : index
    %c0_383 = arith.constant 0 : index
    %c0_384 = arith.constant 0 : index
    %c0_385 = arith.constant 0 : index
    %575 = vector.load %arg4[%c0_381, %c0_382, %c0_383, %c0_384, %c0_385] : memref<1x4x1x10x34xf32, #tpu.memory_space<vmem>>, vector<1x1x1x8x32xf32>
    %576 = vector.shape_cast %575 : vector<1x1x1x8x32xf32> to vector<8x32xf32>
    %c48 = arith.constant 48 : index
    %577 = memref.load %arg2[%c48] : memref<192xf32, #tpu.memory_space<smem>>
    %578 = vector.broadcast %577 : f32 to vector<8x32xf32>
    %579 = arith.mulf %578, %576 : vector<8x32xf32>
    %580 = arith.addf %571, %579 : vector<8x32xf32>
    %c0_386 = arith.constant 0 : index
    %c0_387 = arith.constant 0 : index
    %c0_388 = arith.constant 0 : index
    %c0_389 = arith.constant 0 : index
    %c1_390 = arith.constant 1 : index
    %581 = vector.load %arg4[%c0_386, %c0_387, %c0_388, %c0_389, %c1_390] : memref<1x4x1x10x34xf32, #tpu.memory_space<vmem>>, vector<1x1x1x8x32xf32>
    %582 = vector.shape_cast %581 : vector<1x1x1x8x32xf32> to vector<8x32xf32>
    %c49 = arith.constant 49 : index
    %583 = memref.load %arg2[%c49] : memref<192xf32, #tpu.memory_space<smem>>
    %584 = vector.broadcast %583 : f32 to vector<8x32xf32>
    %585 = arith.mulf %584, %582 : vector<8x32xf32>
    %586 = arith.addf %580, %585 : vector<8x32xf32>
    %c0_391 = arith.constant 0 : index
    %c0_392 = arith.constant 0 : index
    %c0_393 = arith.constant 0 : index
    %c0_394 = arith.constant 0 : index
    %c2_395 = arith.constant 2 : index
    %587 = vector.load %arg4[%c0_391, %c0_392, %c0_393, %c0_394, %c2_395] : memref<1x4x1x10x34xf32, #tpu.memory_space<vmem>>, vector<1x1x1x8x32xf32>
    %588 = vector.shape_cast %587 : vector<1x1x1x8x32xf32> to vector<8x32xf32>
    %c50 = arith.constant 50 : index
    %589 = memref.load %arg2[%c50] : memref<192xf32, #tpu.memory_space<smem>>
    %590 = vector.broadcast %589 : f32 to vector<8x32xf32>
    %591 = arith.mulf %590, %588 : vector<8x32xf32>
    %592 = arith.addf %586, %591 : vector<8x32xf32>
    %c0_396 = arith.constant 0 : index
    %c0_397 = arith.constant 0 : index
    %c0_398 = arith.constant 0 : index
    %c1_399 = arith.constant 1 : index
    %c0_400 = arith.constant 0 : index
    %593 = vector.load %arg4[%c0_396, %c0_397, %c0_398, %c1_399, %c0_400] : memref<1x4x1x10x34xf32, #tpu.memory_space<vmem>>, vector<1x1x1x8x32xf32>
    %594 = vector.shape_cast %593 : vector<1x1x1x8x32xf32> to vector<8x32xf32>
    %c51 = arith.constant 51 : index
    %595 = memref.load %arg2[%c51] : memref<192xf32, #tpu.memory_space<smem>>
    %596 = vector.broadcast %595 : f32 to vector<8x32xf32>
    %597 = arith.mulf %596, %594 : vector<8x32xf32>
    %598 = arith.addf %592, %597 : vector<8x32xf32>
    %c144 = arith.constant 144 : index
    %599 = memref.load %arg2[%c144] : memref<192xf32, #tpu.memory_space<smem>>
    %600 = vector.broadcast %599 : f32 to vector<8x32xf32>
    %601 = arith.mulf %600, %594 : vector<8x32xf32>
    %602 = arith.addf %574, %601 : vector<8x32xf32>
    %c0_401 = arith.constant 0 : index
    %c0_402 = arith.constant 0 : index
    %c0_403 = arith.constant 0 : index
    %c1_404 = arith.constant 1 : index
    %c1_405 = arith.constant 1 : index
    %603 = vector.load %arg4[%c0_401, %c0_402, %c0_403, %c1_404, %c1_405] : memref<1x4x1x10x34xf32, #tpu.memory_space<vmem>>, vector<1x1x1x8x32xf32>
    %604 = vector.shape_cast %603 : vector<1x1x1x8x32xf32> to vector<8x32xf32>
    %c52 = arith.constant 52 : index
    %605 = memref.load %arg2[%c52] : memref<192xf32, #tpu.memory_space<smem>>
    %606 = vector.broadcast %605 : f32 to vector<8x32xf32>
    %607 = arith.mulf %606, %604 : vector<8x32xf32>
    %608 = arith.addf %598, %607 : vector<8x32xf32>
    %c145 = arith.constant 145 : index
    %609 = memref.load %arg2[%c145] : memref<192xf32, #tpu.memory_space<smem>>
    %610 = vector.broadcast %609 : f32 to vector<8x32xf32>
    %611 = arith.mulf %610, %604 : vector<8x32xf32>
    %612 = arith.addf %602, %611 : vector<8x32xf32>
    %c0_406 = arith.constant 0 : index
    %c0_407 = arith.constant 0 : index
    %c0_408 = arith.constant 0 : index
    %c1_409 = arith.constant 1 : index
    %c2_410 = arith.constant 2 : index
    %613 = vector.load %arg4[%c0_406, %c0_407, %c0_408, %c1_409, %c2_410] : memref<1x4x1x10x34xf32, #tpu.memory_space<vmem>>, vector<1x1x1x8x32xf32>
    %614 = vector.shape_cast %613 : vector<1x1x1x8x32xf32> to vector<8x32xf32>
    %c53 = arith.constant 53 : index
    %615 = memref.load %arg2[%c53] : memref<192xf32, #tpu.memory_space<smem>>
    %616 = vector.broadcast %615 : f32 to vector<8x32xf32>
    %617 = arith.mulf %616, %614 : vector<8x32xf32>
    %618 = arith.addf %608, %617 : vector<8x32xf32>
    %c146 = arith.constant 146 : index
    %619 = memref.load %arg2[%c146] : memref<192xf32, #tpu.memory_space<smem>>
    %620 = vector.broadcast %619 : f32 to vector<8x32xf32>
    %621 = arith.mulf %620, %614 : vector<8x32xf32>
    %622 = arith.addf %612, %621 : vector<8x32xf32>
    %c0_411 = arith.constant 0 : index
    %c0_412 = arith.constant 0 : index
    %c0_413 = arith.constant 0 : index
    %c2_414 = arith.constant 2 : index
    %c0_415 = arith.constant 0 : index
    %623 = vector.load %arg4[%c0_411, %c0_412, %c0_413, %c2_414, %c0_415] : memref<1x4x1x10x34xf32, #tpu.memory_space<vmem>>, vector<1x1x1x8x32xf32>
    %624 = vector.shape_cast %623 : vector<1x1x1x8x32xf32> to vector<8x32xf32>
    %c147 = arith.constant 147 : index
    %625 = memref.load %arg2[%c147] : memref<192xf32, #tpu.memory_space<smem>>
    %626 = vector.broadcast %625 : f32 to vector<8x32xf32>
    %627 = arith.mulf %626, %624 : vector<8x32xf32>
    %628 = arith.addf %622, %627 : vector<8x32xf32>
    %c0_416 = arith.constant 0 : index
    %c0_417 = arith.constant 0 : index
    %c0_418 = arith.constant 0 : index
    %c2_419 = arith.constant 2 : index
    %c1_420 = arith.constant 1 : index
    %629 = vector.load %arg4[%c0_416, %c0_417, %c0_418, %c2_419, %c1_420] : memref<1x4x1x10x34xf32, #tpu.memory_space<vmem>>, vector<1x1x1x8x32xf32>
    %630 = vector.shape_cast %629 : vector<1x1x1x8x32xf32> to vector<8x32xf32>
    %c148 = arith.constant 148 : index
    %631 = memref.load %arg2[%c148] : memref<192xf32, #tpu.memory_space<smem>>
    %632 = vector.broadcast %631 : f32 to vector<8x32xf32>
    %633 = arith.mulf %632, %630 : vector<8x32xf32>
    %634 = arith.addf %628, %633 : vector<8x32xf32>
    %c0_421 = arith.constant 0 : index
    %c0_422 = arith.constant 0 : index
    %c0_423 = arith.constant 0 : index
    %c2_424 = arith.constant 2 : index
    %c2_425 = arith.constant 2 : index
    %635 = vector.load %arg4[%c0_421, %c0_422, %c0_423, %c2_424, %c2_425] : memref<1x4x1x10x34xf32, #tpu.memory_space<vmem>>, vector<1x1x1x8x32xf32>
    %636 = vector.shape_cast %635 : vector<1x1x1x8x32xf32> to vector<8x32xf32>
    %c149 = arith.constant 149 : index
    %637 = memref.load %arg2[%c149] : memref<192xf32, #tpu.memory_space<smem>>
    %638 = vector.broadcast %637 : f32 to vector<8x32xf32>
    %639 = arith.mulf %638, %636 : vector<8x32xf32>
    %640 = arith.addf %634, %639 : vector<8x32xf32>
    %c0_426 = arith.constant 0 : index
    %c1_427 = arith.constant 1 : index
    %c0_428 = arith.constant 0 : index
    %c0_429 = arith.constant 0 : index
    %c0_430 = arith.constant 0 : index
    %641 = vector.load %arg4[%c0_426, %c1_427, %c0_428, %c0_429, %c0_430] : memref<1x4x1x10x34xf32, #tpu.memory_space<vmem>>, vector<1x1x1x8x32xf32>
    %642 = vector.shape_cast %641 : vector<1x1x1x8x32xf32> to vector<8x32xf32>
    %c54 = arith.constant 54 : index
    %643 = memref.load %arg2[%c54] : memref<192xf32, #tpu.memory_space<smem>>
    %644 = vector.broadcast %643 : f32 to vector<8x32xf32>
    %645 = arith.mulf %644, %642 : vector<8x32xf32>
    %646 = arith.addf %618, %645 : vector<8x32xf32>
    %c0_431 = arith.constant 0 : index
    %c1_432 = arith.constant 1 : index
    %c0_433 = arith.constant 0 : index
    %c0_434 = arith.constant 0 : index
    %c1_435 = arith.constant 1 : index
    %647 = vector.load %arg4[%c0_431, %c1_432, %c0_433, %c0_434, %c1_435] : memref<1x4x1x10x34xf32, #tpu.memory_space<vmem>>, vector<1x1x1x8x32xf32>
    %648 = vector.shape_cast %647 : vector<1x1x1x8x32xf32> to vector<8x32xf32>
    %c55 = arith.constant 55 : index
    %649 = memref.load %arg2[%c55] : memref<192xf32, #tpu.memory_space<smem>>
    %650 = vector.broadcast %649 : f32 to vector<8x32xf32>
    %651 = arith.mulf %650, %648 : vector<8x32xf32>
    %652 = arith.addf %646, %651 : vector<8x32xf32>
    %c0_436 = arith.constant 0 : index
    %c1_437 = arith.constant 1 : index
    %c0_438 = arith.constant 0 : index
    %c0_439 = arith.constant 0 : index
    %c2_440 = arith.constant 2 : index
    %653 = vector.load %arg4[%c0_436, %c1_437, %c0_438, %c0_439, %c2_440] : memref<1x4x1x10x34xf32, #tpu.memory_space<vmem>>, vector<1x1x1x8x32xf32>
    %654 = vector.shape_cast %653 : vector<1x1x1x8x32xf32> to vector<8x32xf32>
    %c56 = arith.constant 56 : index
    %655 = memref.load %arg2[%c56] : memref<192xf32, #tpu.memory_space<smem>>
    %656 = vector.broadcast %655 : f32 to vector<8x32xf32>
    %657 = arith.mulf %656, %654 : vector<8x32xf32>
    %658 = arith.addf %652, %657 : vector<8x32xf32>
    %c0_441 = arith.constant 0 : index
    %c1_442 = arith.constant 1 : index
    %c0_443 = arith.constant 0 : index
    %c1_444 = arith.constant 1 : index
    %c0_445 = arith.constant 0 : index
    %659 = vector.load %arg4[%c0_441, %c1_442, %c0_443, %c1_444, %c0_445] : memref<1x4x1x10x34xf32, #tpu.memory_space<vmem>>, vector<1x1x1x8x32xf32>
    %660 = vector.shape_cast %659 : vector<1x1x1x8x32xf32> to vector<8x32xf32>
    %c57 = arith.constant 57 : index
    %661 = memref.load %arg2[%c57] : memref<192xf32, #tpu.memory_space<smem>>
    %662 = vector.broadcast %661 : f32 to vector<8x32xf32>
    %663 = arith.mulf %662, %660 : vector<8x32xf32>
    %664 = arith.addf %658, %663 : vector<8x32xf32>
    %c150 = arith.constant 150 : index
    %665 = memref.load %arg2[%c150] : memref<192xf32, #tpu.memory_space<smem>>
    %666 = vector.broadcast %665 : f32 to vector<8x32xf32>
    %667 = arith.mulf %666, %660 : vector<8x32xf32>
    %668 = arith.addf %640, %667 : vector<8x32xf32>
    %c0_446 = arith.constant 0 : index
    %c1_447 = arith.constant 1 : index
    %c0_448 = arith.constant 0 : index
    %c1_449 = arith.constant 1 : index
    %c1_450 = arith.constant 1 : index
    %669 = vector.load %arg4[%c0_446, %c1_447, %c0_448, %c1_449, %c1_450] : memref<1x4x1x10x34xf32, #tpu.memory_space<vmem>>, vector<1x1x1x8x32xf32>
    %670 = vector.shape_cast %669 : vector<1x1x1x8x32xf32> to vector<8x32xf32>
    %c58 = arith.constant 58 : index
    %671 = memref.load %arg2[%c58] : memref<192xf32, #tpu.memory_space<smem>>
    %672 = vector.broadcast %671 : f32 to vector<8x32xf32>
    %673 = arith.mulf %672, %670 : vector<8x32xf32>
    %674 = arith.addf %664, %673 : vector<8x32xf32>
    %c151 = arith.constant 151 : index
    %675 = memref.load %arg2[%c151] : memref<192xf32, #tpu.memory_space<smem>>
    %676 = vector.broadcast %675 : f32 to vector<8x32xf32>
    %677 = arith.mulf %676, %670 : vector<8x32xf32>
    %678 = arith.addf %668, %677 : vector<8x32xf32>
    %c0_451 = arith.constant 0 : index
    %c1_452 = arith.constant 1 : index
    %c0_453 = arith.constant 0 : index
    %c1_454 = arith.constant 1 : index
    %c2_455 = arith.constant 2 : index
    %679 = vector.load %arg4[%c0_451, %c1_452, %c0_453, %c1_454, %c2_455] : memref<1x4x1x10x34xf32, #tpu.memory_space<vmem>>, vector<1x1x1x8x32xf32>
    %680 = vector.shape_cast %679 : vector<1x1x1x8x32xf32> to vector<8x32xf32>
    %c59 = arith.constant 59 : index
    %681 = memref.load %arg2[%c59] : memref<192xf32, #tpu.memory_space<smem>>
    %682 = vector.broadcast %681 : f32 to vector<8x32xf32>
    %683 = arith.mulf %682, %680 : vector<8x32xf32>
    %684 = arith.addf %674, %683 : vector<8x32xf32>
    %c152 = arith.constant 152 : index
    %685 = memref.load %arg2[%c152] : memref<192xf32, #tpu.memory_space<smem>>
    %686 = vector.broadcast %685 : f32 to vector<8x32xf32>
    %687 = arith.mulf %686, %680 : vector<8x32xf32>
    %688 = arith.addf %678, %687 : vector<8x32xf32>
    %c0_456 = arith.constant 0 : index
    %c1_457 = arith.constant 1 : index
    %c0_458 = arith.constant 0 : index
    %c2_459 = arith.constant 2 : index
    %c0_460 = arith.constant 0 : index
    %689 = vector.load %arg4[%c0_456, %c1_457, %c0_458, %c2_459, %c0_460] : memref<1x4x1x10x34xf32, #tpu.memory_space<vmem>>, vector<1x1x1x8x32xf32>
    %690 = vector.shape_cast %689 : vector<1x1x1x8x32xf32> to vector<8x32xf32>
    %c153 = arith.constant 153 : index
    %691 = memref.load %arg2[%c153] : memref<192xf32, #tpu.memory_space<smem>>
    %692 = vector.broadcast %691 : f32 to vector<8x32xf32>
    %693 = arith.mulf %692, %690 : vector<8x32xf32>
    %694 = arith.addf %688, %693 : vector<8x32xf32>
    %c0_461 = arith.constant 0 : index
    %c1_462 = arith.constant 1 : index
    %c0_463 = arith.constant 0 : index
    %c2_464 = arith.constant 2 : index
    %c1_465 = arith.constant 1 : index
    %695 = vector.load %arg4[%c0_461, %c1_462, %c0_463, %c2_464, %c1_465] : memref<1x4x1x10x34xf32, #tpu.memory_space<vmem>>, vector<1x1x1x8x32xf32>
    %696 = vector.shape_cast %695 : vector<1x1x1x8x32xf32> to vector<8x32xf32>
    %c154 = arith.constant 154 : index
    %697 = memref.load %arg2[%c154] : memref<192xf32, #tpu.memory_space<smem>>
    %698 = vector.broadcast %697 : f32 to vector<8x32xf32>
    %699 = arith.mulf %698, %696 : vector<8x32xf32>
    %700 = arith.addf %694, %699 : vector<8x32xf32>
    %c0_466 = arith.constant 0 : index
    %c1_467 = arith.constant 1 : index
    %c0_468 = arith.constant 0 : index
    %c2_469 = arith.constant 2 : index
    %c2_470 = arith.constant 2 : index
    %701 = vector.load %arg4[%c0_466, %c1_467, %c0_468, %c2_469, %c2_470] : memref<1x4x1x10x34xf32, #tpu.memory_space<vmem>>, vector<1x1x1x8x32xf32>
    %702 = vector.shape_cast %701 : vector<1x1x1x8x32xf32> to vector<8x32xf32>
    %c155 = arith.constant 155 : index
    %703 = memref.load %arg2[%c155] : memref<192xf32, #tpu.memory_space<smem>>
    %704 = vector.broadcast %703 : f32 to vector<8x32xf32>
    %705 = arith.mulf %704, %702 : vector<8x32xf32>
    %706 = arith.addf %700, %705 : vector<8x32xf32>
    %c0_471 = arith.constant 0 : index
    %c2_472 = arith.constant 2 : index
    %c0_473 = arith.constant 0 : index
    %c0_474 = arith.constant 0 : index
    %c0_475 = arith.constant 0 : index
    %707 = vector.load %arg4[%c0_471, %c2_472, %c0_473, %c0_474, %c0_475] : memref<1x4x1x10x34xf32, #tpu.memory_space<vmem>>, vector<1x1x1x8x32xf32>
    %708 = vector.shape_cast %707 : vector<1x1x1x8x32xf32> to vector<8x32xf32>
    %c60 = arith.constant 60 : index
    %709 = memref.load %arg2[%c60] : memref<192xf32, #tpu.memory_space<smem>>
    %710 = vector.broadcast %709 : f32 to vector<8x32xf32>
    %711 = arith.mulf %710, %708 : vector<8x32xf32>
    %712 = arith.addf %684, %711 : vector<8x32xf32>
    %c0_476 = arith.constant 0 : index
    %c2_477 = arith.constant 2 : index
    %c0_478 = arith.constant 0 : index
    %c0_479 = arith.constant 0 : index
    %c1_480 = arith.constant 1 : index
    %713 = vector.load %arg4[%c0_476, %c2_477, %c0_478, %c0_479, %c1_480] : memref<1x4x1x10x34xf32, #tpu.memory_space<vmem>>, vector<1x1x1x8x32xf32>
    %714 = vector.shape_cast %713 : vector<1x1x1x8x32xf32> to vector<8x32xf32>
    %c61 = arith.constant 61 : index
    %715 = memref.load %arg2[%c61] : memref<192xf32, #tpu.memory_space<smem>>
    %716 = vector.broadcast %715 : f32 to vector<8x32xf32>
    %717 = arith.mulf %716, %714 : vector<8x32xf32>
    %718 = arith.addf %712, %717 : vector<8x32xf32>
    %c0_481 = arith.constant 0 : index
    %c2_482 = arith.constant 2 : index
    %c0_483 = arith.constant 0 : index
    %c0_484 = arith.constant 0 : index
    %c2_485 = arith.constant 2 : index
    %719 = vector.load %arg4[%c0_481, %c2_482, %c0_483, %c0_484, %c2_485] : memref<1x4x1x10x34xf32, #tpu.memory_space<vmem>>, vector<1x1x1x8x32xf32>
    %720 = vector.shape_cast %719 : vector<1x1x1x8x32xf32> to vector<8x32xf32>
    %c62 = arith.constant 62 : index
    %721 = memref.load %arg2[%c62] : memref<192xf32, #tpu.memory_space<smem>>
    %722 = vector.broadcast %721 : f32 to vector<8x32xf32>
    %723 = arith.mulf %722, %720 : vector<8x32xf32>
    %724 = arith.addf %718, %723 : vector<8x32xf32>
    %c0_486 = arith.constant 0 : index
    %c2_487 = arith.constant 2 : index
    %c0_488 = arith.constant 0 : index
    %c1_489 = arith.constant 1 : index
    %c0_490 = arith.constant 0 : index
    %725 = vector.load %arg4[%c0_486, %c2_487, %c0_488, %c1_489, %c0_490] : memref<1x4x1x10x34xf32, #tpu.memory_space<vmem>>, vector<1x1x1x8x32xf32>
    %726 = vector.shape_cast %725 : vector<1x1x1x8x32xf32> to vector<8x32xf32>
    %c63 = arith.constant 63 : index
    %727 = memref.load %arg2[%c63] : memref<192xf32, #tpu.memory_space<smem>>
    %728 = vector.broadcast %727 : f32 to vector<8x32xf32>
    %729 = arith.mulf %728, %726 : vector<8x32xf32>
    %730 = arith.addf %724, %729 : vector<8x32xf32>
    %c156 = arith.constant 156 : index
    %731 = memref.load %arg2[%c156] : memref<192xf32, #tpu.memory_space<smem>>
    %732 = vector.broadcast %731 : f32 to vector<8x32xf32>
    %733 = arith.mulf %732, %726 : vector<8x32xf32>
    %734 = arith.addf %706, %733 : vector<8x32xf32>
    %c0_491 = arith.constant 0 : index
    %c2_492 = arith.constant 2 : index
    %c0_493 = arith.constant 0 : index
    %c1_494 = arith.constant 1 : index
    %c1_495 = arith.constant 1 : index
    %735 = vector.load %arg4[%c0_491, %c2_492, %c0_493, %c1_494, %c1_495] : memref<1x4x1x10x34xf32, #tpu.memory_space<vmem>>, vector<1x1x1x8x32xf32>
    %736 = vector.shape_cast %735 : vector<1x1x1x8x32xf32> to vector<8x32xf32>
    %c64 = arith.constant 64 : index
    %737 = memref.load %arg2[%c64] : memref<192xf32, #tpu.memory_space<smem>>
    %738 = vector.broadcast %737 : f32 to vector<8x32xf32>
    %739 = arith.mulf %738, %736 : vector<8x32xf32>
    %740 = arith.addf %730, %739 : vector<8x32xf32>
    %c157 = arith.constant 157 : index
    %741 = memref.load %arg2[%c157] : memref<192xf32, #tpu.memory_space<smem>>
    %742 = vector.broadcast %741 : f32 to vector<8x32xf32>
    %743 = arith.mulf %742, %736 : vector<8x32xf32>
    %744 = arith.addf %734, %743 : vector<8x32xf32>
    %c0_496 = arith.constant 0 : index
    %c2_497 = arith.constant 2 : index
    %c0_498 = arith.constant 0 : index
    %c1_499 = arith.constant 1 : index
    %c2_500 = arith.constant 2 : index
    %745 = vector.load %arg4[%c0_496, %c2_497, %c0_498, %c1_499, %c2_500] : memref<1x4x1x10x34xf32, #tpu.memory_space<vmem>>, vector<1x1x1x8x32xf32>
    %746 = vector.shape_cast %745 : vector<1x1x1x8x32xf32> to vector<8x32xf32>
    %c65 = arith.constant 65 : index
    %747 = memref.load %arg2[%c65] : memref<192xf32, #tpu.memory_space<smem>>
    %748 = vector.broadcast %747 : f32 to vector<8x32xf32>
    %749 = arith.mulf %748, %746 : vector<8x32xf32>
    %750 = arith.addf %740, %749 : vector<8x32xf32>
    %c158 = arith.constant 158 : index
    %751 = memref.load %arg2[%c158] : memref<192xf32, #tpu.memory_space<smem>>
    %752 = vector.broadcast %751 : f32 to vector<8x32xf32>
    %753 = arith.mulf %752, %746 : vector<8x32xf32>
    %754 = arith.addf %744, %753 : vector<8x32xf32>
    %c0_501 = arith.constant 0 : index
    %c2_502 = arith.constant 2 : index
    %c0_503 = arith.constant 0 : index
    %c2_504 = arith.constant 2 : index
    %c0_505 = arith.constant 0 : index
    %755 = vector.load %arg4[%c0_501, %c2_502, %c0_503, %c2_504, %c0_505] : memref<1x4x1x10x34xf32, #tpu.memory_space<vmem>>, vector<1x1x1x8x32xf32>
    %756 = vector.shape_cast %755 : vector<1x1x1x8x32xf32> to vector<8x32xf32>
    %c159 = arith.constant 159 : index
    %757 = memref.load %arg2[%c159] : memref<192xf32, #tpu.memory_space<smem>>
    %758 = vector.broadcast %757 : f32 to vector<8x32xf32>
    %759 = arith.mulf %758, %756 : vector<8x32xf32>
    %760 = arith.addf %754, %759 : vector<8x32xf32>
    %c0_506 = arith.constant 0 : index
    %c2_507 = arith.constant 2 : index
    %c0_508 = arith.constant 0 : index
    %c2_509 = arith.constant 2 : index
    %c1_510 = arith.constant 1 : index
    %761 = vector.load %arg4[%c0_506, %c2_507, %c0_508, %c2_509, %c1_510] : memref<1x4x1x10x34xf32, #tpu.memory_space<vmem>>, vector<1x1x1x8x32xf32>
    %762 = vector.shape_cast %761 : vector<1x1x1x8x32xf32> to vector<8x32xf32>
    %c160 = arith.constant 160 : index
    %763 = memref.load %arg2[%c160] : memref<192xf32, #tpu.memory_space<smem>>
    %764 = vector.broadcast %763 : f32 to vector<8x32xf32>
    %765 = arith.mulf %764, %762 : vector<8x32xf32>
    %766 = arith.addf %760, %765 : vector<8x32xf32>
    %c0_511 = arith.constant 0 : index
    %c2_512 = arith.constant 2 : index
    %c0_513 = arith.constant 0 : index
    %c2_514 = arith.constant 2 : index
    %c2_515 = arith.constant 2 : index
    %767 = vector.load %arg4[%c0_511, %c2_512, %c0_513, %c2_514, %c2_515] : memref<1x4x1x10x34xf32, #tpu.memory_space<vmem>>, vector<1x1x1x8x32xf32>
    %768 = vector.shape_cast %767 : vector<1x1x1x8x32xf32> to vector<8x32xf32>
    %c161 = arith.constant 161 : index
    %769 = memref.load %arg2[%c161] : memref<192xf32, #tpu.memory_space<smem>>
    %770 = vector.broadcast %769 : f32 to vector<8x32xf32>
    %771 = arith.mulf %770, %768 : vector<8x32xf32>
    %772 = arith.addf %766, %771 : vector<8x32xf32>
    %c0_516 = arith.constant 0 : index
    %c3_517 = arith.constant 3 : index
    %c0_518 = arith.constant 0 : index
    %c0_519 = arith.constant 0 : index
    %c0_520 = arith.constant 0 : index
    %773 = vector.load %arg4[%c0_516, %c3_517, %c0_518, %c0_519, %c0_520] : memref<1x4x1x10x34xf32, #tpu.memory_space<vmem>>, vector<1x1x1x8x32xf32>
    %774 = vector.shape_cast %773 : vector<1x1x1x8x32xf32> to vector<8x32xf32>
    %c66 = arith.constant 66 : index
    %775 = memref.load %arg2[%c66] : memref<192xf32, #tpu.memory_space<smem>>
    %776 = vector.broadcast %775 : f32 to vector<8x32xf32>
    %777 = arith.mulf %776, %774 : vector<8x32xf32>
    %778 = arith.addf %750, %777 : vector<8x32xf32>
    %c0_521 = arith.constant 0 : index
    %c3_522 = arith.constant 3 : index
    %c0_523 = arith.constant 0 : index
    %c0_524 = arith.constant 0 : index
    %c1_525 = arith.constant 1 : index
    %779 = vector.load %arg4[%c0_521, %c3_522, %c0_523, %c0_524, %c1_525] : memref<1x4x1x10x34xf32, #tpu.memory_space<vmem>>, vector<1x1x1x8x32xf32>
    %780 = vector.shape_cast %779 : vector<1x1x1x8x32xf32> to vector<8x32xf32>
    %c67 = arith.constant 67 : index
    %781 = memref.load %arg2[%c67] : memref<192xf32, #tpu.memory_space<smem>>
    %782 = vector.broadcast %781 : f32 to vector<8x32xf32>
    %783 = arith.mulf %782, %780 : vector<8x32xf32>
    %784 = arith.addf %778, %783 : vector<8x32xf32>
    %c0_526 = arith.constant 0 : index
    %c3_527 = arith.constant 3 : index
    %c0_528 = arith.constant 0 : index
    %c0_529 = arith.constant 0 : index
    %c2_530 = arith.constant 2 : index
    %785 = vector.load %arg4[%c0_526, %c3_527, %c0_528, %c0_529, %c2_530] : memref<1x4x1x10x34xf32, #tpu.memory_space<vmem>>, vector<1x1x1x8x32xf32>
    %786 = vector.shape_cast %785 : vector<1x1x1x8x32xf32> to vector<8x32xf32>
    %c68 = arith.constant 68 : index
    %787 = memref.load %arg2[%c68] : memref<192xf32, #tpu.memory_space<smem>>
    %788 = vector.broadcast %787 : f32 to vector<8x32xf32>
    %789 = arith.mulf %788, %786 : vector<8x32xf32>
    %790 = arith.addf %784, %789 : vector<8x32xf32>
    %c0_531 = arith.constant 0 : index
    %c3_532 = arith.constant 3 : index
    %c0_533 = arith.constant 0 : index
    %c1_534 = arith.constant 1 : index
    %c0_535 = arith.constant 0 : index
    %791 = vector.load %arg4[%c0_531, %c3_532, %c0_533, %c1_534, %c0_535] : memref<1x4x1x10x34xf32, #tpu.memory_space<vmem>>, vector<1x1x1x8x32xf32>
    %792 = vector.shape_cast %791 : vector<1x1x1x8x32xf32> to vector<8x32xf32>
    %c69 = arith.constant 69 : index
    %793 = memref.load %arg2[%c69] : memref<192xf32, #tpu.memory_space<smem>>
    %794 = vector.broadcast %793 : f32 to vector<8x32xf32>
    %795 = arith.mulf %794, %792 : vector<8x32xf32>
    %796 = arith.addf %790, %795 : vector<8x32xf32>
    %c162 = arith.constant 162 : index
    %797 = memref.load %arg2[%c162] : memref<192xf32, #tpu.memory_space<smem>>
    %798 = vector.broadcast %797 : f32 to vector<8x32xf32>
    %799 = arith.mulf %798, %792 : vector<8x32xf32>
    %800 = arith.addf %772, %799 : vector<8x32xf32>
    %c0_536 = arith.constant 0 : index
    %c3_537 = arith.constant 3 : index
    %c0_538 = arith.constant 0 : index
    %c1_539 = arith.constant 1 : index
    %c1_540 = arith.constant 1 : index
    %801 = vector.load %arg4[%c0_536, %c3_537, %c0_538, %c1_539, %c1_540] : memref<1x4x1x10x34xf32, #tpu.memory_space<vmem>>, vector<1x1x1x8x32xf32>
    %802 = vector.shape_cast %801 : vector<1x1x1x8x32xf32> to vector<8x32xf32>
    %c70 = arith.constant 70 : index
    %803 = memref.load %arg2[%c70] : memref<192xf32, #tpu.memory_space<smem>>
    %804 = vector.broadcast %803 : f32 to vector<8x32xf32>
    %805 = arith.mulf %804, %802 : vector<8x32xf32>
    %806 = arith.addf %796, %805 : vector<8x32xf32>
    %c163 = arith.constant 163 : index
    %807 = memref.load %arg2[%c163] : memref<192xf32, #tpu.memory_space<smem>>
    %808 = vector.broadcast %807 : f32 to vector<8x32xf32>
    %809 = arith.mulf %808, %802 : vector<8x32xf32>
    %810 = arith.addf %800, %809 : vector<8x32xf32>
    %c0_541 = arith.constant 0 : index
    %c3_542 = arith.constant 3 : index
    %c0_543 = arith.constant 0 : index
    %c1_544 = arith.constant 1 : index
    %c2_545 = arith.constant 2 : index
    %811 = vector.load %arg4[%c0_541, %c3_542, %c0_543, %c1_544, %c2_545] : memref<1x4x1x10x34xf32, #tpu.memory_space<vmem>>, vector<1x1x1x8x32xf32>
    %812 = vector.shape_cast %811 : vector<1x1x1x8x32xf32> to vector<8x32xf32>
    %c71 = arith.constant 71 : index
    %813 = memref.load %arg2[%c71] : memref<192xf32, #tpu.memory_space<smem>>
    %814 = vector.broadcast %813 : f32 to vector<8x32xf32>
    %815 = arith.mulf %814, %812 : vector<8x32xf32>
    %816 = arith.addf %806, %815 : vector<8x32xf32>
    %c164 = arith.constant 164 : index
    %817 = memref.load %arg2[%c164] : memref<192xf32, #tpu.memory_space<smem>>
    %818 = vector.broadcast %817 : f32 to vector<8x32xf32>
    %819 = arith.mulf %818, %812 : vector<8x32xf32>
    %820 = arith.addf %810, %819 : vector<8x32xf32>
    %c0_546 = arith.constant 0 : index
    %c3_547 = arith.constant 3 : index
    %c0_548 = arith.constant 0 : index
    %c2_549 = arith.constant 2 : index
    %c0_550 = arith.constant 0 : index
    %821 = vector.load %arg4[%c0_546, %c3_547, %c0_548, %c2_549, %c0_550] : memref<1x4x1x10x34xf32, #tpu.memory_space<vmem>>, vector<1x1x1x8x32xf32>
    %822 = vector.shape_cast %821 : vector<1x1x1x8x32xf32> to vector<8x32xf32>
    %c165 = arith.constant 165 : index
    %823 = memref.load %arg2[%c165] : memref<192xf32, #tpu.memory_space<smem>>
    %824 = vector.broadcast %823 : f32 to vector<8x32xf32>
    %825 = arith.mulf %824, %822 : vector<8x32xf32>
    %826 = arith.addf %820, %825 : vector<8x32xf32>
    %c0_551 = arith.constant 0 : index
    %c3_552 = arith.constant 3 : index
    %c0_553 = arith.constant 0 : index
    %c2_554 = arith.constant 2 : index
    %c1_555 = arith.constant 1 : index
    %827 = vector.load %arg4[%c0_551, %c3_552, %c0_553, %c2_554, %c1_555] : memref<1x4x1x10x34xf32, #tpu.memory_space<vmem>>, vector<1x1x1x8x32xf32>
    %828 = vector.shape_cast %827 : vector<1x1x1x8x32xf32> to vector<8x32xf32>
    %c166 = arith.constant 166 : index
    %829 = memref.load %arg2[%c166] : memref<192xf32, #tpu.memory_space<smem>>
    %830 = vector.broadcast %829 : f32 to vector<8x32xf32>
    %831 = arith.mulf %830, %828 : vector<8x32xf32>
    %832 = arith.addf %826, %831 : vector<8x32xf32>
    %c0_556 = arith.constant 0 : index
    %c3_557 = arith.constant 3 : index
    %c0_558 = arith.constant 0 : index
    %c2_559 = arith.constant 2 : index
    %c2_560 = arith.constant 2 : index
    %833 = vector.load %arg4[%c0_556, %c3_557, %c0_558, %c2_559, %c2_560] : memref<1x4x1x10x34xf32, #tpu.memory_space<vmem>>, vector<1x1x1x8x32xf32>
    %834 = vector.shape_cast %833 : vector<1x1x1x8x32xf32> to vector<8x32xf32>
    %c167 = arith.constant 167 : index
    %835 = memref.load %arg2[%c167] : memref<192xf32, #tpu.memory_space<smem>>
    %836 = vector.broadcast %835 : f32 to vector<8x32xf32>
    %837 = arith.mulf %836, %834 : vector<8x32xf32>
    %838 = arith.addf %832, %837 : vector<8x32xf32>
    %cst_561 = arith.constant dense<0.000000e+00> : vector<16x32xf32>
    %839 = tpu.matmul %6, %816, %cst_561 {dimension_numbers = #tpu.dot_dimension_numbers<[1], [0], [0], [1], [0, 0, 1, 1], [], []>} : vector<16x8xf32>, vector<8x32xf32>, vector<16x32xf32> -> vector<16x32xf32>
    %cst_562 = arith.constant dense<0.000000e+00> : vector<16x32xf32>
    %840 = tpu.matmul %13, %838, %cst_562 {dimension_numbers = #tpu.dot_dimension_numbers<[1], [0], [0], [1], [0, 0, 1, 1], [], []>} : vector<16x8xf32>, vector<8x32xf32>, vector<16x32xf32> -> vector<16x32xf32>
    %841 = arith.addf %839, %840 : vector<16x32xf32>
    %c0_563 = arith.constant 0 : index
    %c2_564 = arith.constant 2 : index
    %c0_565 = arith.constant 0 : index
    %c0_566 = arith.constant 0 : index
    %842 = vector.load %arg5[%c0_563, %c2_564, %c0_565, %c0_566] : memref<1x4x16x32xf32, #tpu.memory_space<vmem>>, vector<1x1x16x32xf32>
    %843 = vector.shape_cast %842 : vector<1x1x16x32xf32> to vector<16x32xf32>
    %844 = vector.shape_cast %841 : vector<16x32xf32> to vector<1x1x16x32xf32>
    tpu.vector_store %arg5[%c0_563, %c2_564, %c0_565, %c0_566], %844 {strides = array<i32>} : memref<1x4x16x32xf32, #tpu.memory_space<vmem>>, vector<1x1x16x32xf32>,
    %c3_567 = arith.constant 3 : index
    %845 = memref.load %arg3[%c3_567] : memref<4xf32, #tpu.memory_space<smem>>
    %cst_568 = arith.constant 0.000000e+00 : f32
    %846 = vector.broadcast %cst_568 : f32 to vector<8x32xf32>
    %847 = vector.broadcast %845 : f32 to vector<8x32xf32>
    %848 = arith.addf %846, %847 : vector<8x32xf32>
    %cst_569 = arith.constant 0.000000e+00 : f32
    %849 = vector.broadcast %cst_569 : f32 to vector<8x32xf32>
    %850 = vector.broadcast %845 : f32 to vector<8x32xf32>
    %851 = arith.addf %849, %850 : vector<8x32xf32>
    %c0_570 = arith.constant 0 : index
    %c0_571 = arith.constant 0 : index
    %c0_572 = arith.constant 0 : index
    %c0_573 = arith.constant 0 : index
    %c0_574 = arith.constant 0 : index
    %852 = vector.load %arg4[%c0_570, %c0_571, %c0_572, %c0_573, %c0_574] : memref<1x4x1x10x34xf32, #tpu.memory_space<vmem>>, vector<1x1x1x8x32xf32>
    %853 = vector.shape_cast %852 : vector<1x1x1x8x32xf32> to vector<8x32xf32>
    %c72 = arith.constant 72 : index
    %854 = memref.load %arg2[%c72] : memref<192xf32, #tpu.memory_space<smem>>
    %855 = vector.broadcast %854 : f32 to vector<8x32xf32>
    %856 = arith.mulf %855, %853 : vector<8x32xf32>
    %857 = arith.addf %848, %856 : vector<8x32xf32>
    %c0_575 = arith.constant 0 : index
    %c0_576 = arith.constant 0 : index
    %c0_577 = arith.constant 0 : index
    %c0_578 = arith.constant 0 : index
    %c1_579 = arith.constant 1 : index
    %858 = vector.load %arg4[%c0_575, %c0_576, %c0_577, %c0_578, %c1_579] : memref<1x4x1x10x34xf32, #tpu.memory_space<vmem>>, vector<1x1x1x8x32xf32>
    %859 = vector.shape_cast %858 : vector<1x1x1x8x32xf32> to vector<8x32xf32>
    %c73 = arith.constant 73 : index
    %860 = memref.load %arg2[%c73] : memref<192xf32, #tpu.memory_space<smem>>
    %861 = vector.broadcast %860 : f32 to vector<8x32xf32>
    %862 = arith.mulf %861, %859 : vector<8x32xf32>
    %863 = arith.addf %857, %862 : vector<8x32xf32>
    %c0_580 = arith.constant 0 : index
    %c0_581 = arith.constant 0 : index
    %c0_582 = arith.constant 0 : index
    %c0_583 = arith.constant 0 : index
    %c2_584 = arith.constant 2 : index
    %864 = vector.load %arg4[%c0_580, %c0_581, %c0_582, %c0_583, %c2_584] : memref<1x4x1x10x34xf32, #tpu.memory_space<vmem>>, vector<1x1x1x8x32xf32>
    %865 = vector.shape_cast %864 : vector<1x1x1x8x32xf32> to vector<8x32xf32>
    %c74 = arith.constant 74 : index
    %866 = memref.load %arg2[%c74] : memref<192xf32, #tpu.memory_space<smem>>
    %867 = vector.broadcast %866 : f32 to vector<8x32xf32>
    %868 = arith.mulf %867, %865 : vector<8x32xf32>
    %869 = arith.addf %863, %868 : vector<8x32xf32>
    %c0_585 = arith.constant 0 : index
    %c0_586 = arith.constant 0 : index
    %c0_587 = arith.constant 0 : index
    %c1_588 = arith.constant 1 : index
    %c0_589 = arith.constant 0 : index
    %870 = vector.load %arg4[%c0_585, %c0_586, %c0_587, %c1_588, %c0_589] : memref<1x4x1x10x34xf32, #tpu.memory_space<vmem>>, vector<1x1x1x8x32xf32>
    %871 = vector.shape_cast %870 : vector<1x1x1x8x32xf32> to vector<8x32xf32>
    %c75 = arith.constant 75 : index
    %872 = memref.load %arg2[%c75] : memref<192xf32, #tpu.memory_space<smem>>
    %873 = vector.broadcast %872 : f32 to vector<8x32xf32>
    %874 = arith.mulf %873, %871 : vector<8x32xf32>
    %875 = arith.addf %869, %874 : vector<8x32xf32>
    %c168 = arith.constant 168 : index
    %876 = memref.load %arg2[%c168] : memref<192xf32, #tpu.memory_space<smem>>
    %877 = vector.broadcast %876 : f32 to vector<8x32xf32>
    %878 = arith.mulf %877, %871 : vector<8x32xf32>
    %879 = arith.addf %851, %878 : vector<8x32xf32>
    %c0_590 = arith.constant 0 : index
    %c0_591 = arith.constant 0 : index
    %c0_592 = arith.constant 0 : index
    %c1_593 = arith.constant 1 : index
    %c1_594 = arith.constant 1 : index
    %880 = vector.load %arg4[%c0_590, %c0_591, %c0_592, %c1_593, %c1_594] : memref<1x4x1x10x34xf32, #tpu.memory_space<vmem>>, vector<1x1x1x8x32xf32>
    %881 = vector.shape_cast %880 : vector<1x1x1x8x32xf32> to vector<8x32xf32>
    %c76 = arith.constant 76 : index
    %882 = memref.load %arg2[%c76] : memref<192xf32, #tpu.memory_space<smem>>
    %883 = vector.broadcast %882 : f32 to vector<8x32xf32>
    %884 = arith.mulf %883, %881 : vector<8x32xf32>
    %885 = arith.addf %875, %884 : vector<8x32xf32>
    %c169 = arith.constant 169 : index
    %886 = memref.load %arg2[%c169] : memref<192xf32, #tpu.memory_space<smem>>
    %887 = vector.broadcast %886 : f32 to vector<8x32xf32>
    %888 = arith.mulf %887, %881 : vector<8x32xf32>
    %889 = arith.addf %879, %888 : vector<8x32xf32>
    %c0_595 = arith.constant 0 : index
    %c0_596 = arith.constant 0 : index
    %c0_597 = arith.constant 0 : index
    %c1_598 = arith.constant 1 : index
    %c2_599 = arith.constant 2 : index
    %890 = vector.load %arg4[%c0_595, %c0_596, %c0_597, %c1_598, %c2_599] : memref<1x4x1x10x34xf32, #tpu.memory_space<vmem>>, vector<1x1x1x8x32xf32>
    %891 = vector.shape_cast %890 : vector<1x1x1x8x32xf32> to vector<8x32xf32>
    %c77 = arith.constant 77 : index
    %892 = memref.load %arg2[%c77] : memref<192xf32, #tpu.memory_space<smem>>
    %893 = vector.broadcast %892 : f32 to vector<8x32xf32>
    %894 = arith.mulf %893, %891 : vector<8x32xf32>
    %895 = arith.addf %885, %894 : vector<8x32xf32>
    %c170 = arith.constant 170 : index
    %896 = memref.load %arg2[%c170] : memref<192xf32, #tpu.memory_space<smem>>
    %897 = vector.broadcast %896 : f32 to vector<8x32xf32>
    %898 = arith.mulf %897, %891 : vector<8x32xf32>
    %899 = arith.addf %889, %898 : vector<8x32xf32>
    %c0_600 = arith.constant 0 : index
    %c0_601 = arith.constant 0 : index
    %c0_602 = arith.constant 0 : index
    %c2_603 = arith.constant 2 : index
    %c0_604 = arith.constant 0 : index
    %900 = vector.load %arg4[%c0_600, %c0_601, %c0_602, %c2_603, %c0_604] : memref<1x4x1x10x34xf32, #tpu.memory_space<vmem>>, vector<1x1x1x8x32xf32>
    %901 = vector.shape_cast %900 : vector<1x1x1x8x32xf32> to vector<8x32xf32>
    %c171 = arith.constant 171 : index
    %902 = memref.load %arg2[%c171] : memref<192xf32, #tpu.memory_space<smem>>
    %903 = vector.broadcast %902 : f32 to vector<8x32xf32>
    %904 = arith.mulf %903, %901 : vector<8x32xf32>
    %905 = arith.addf %899, %904 : vector<8x32xf32>
    %c0_605 = arith.constant 0 : index
    %c0_606 = arith.constant 0 : index
    %c0_607 = arith.constant 0 : index
    %c2_608 = arith.constant 2 : index
    %c1_609 = arith.constant 1 : index
    %906 = vector.load %arg4[%c0_605, %c0_606, %c0_607, %c2_608, %c1_609] : memref<1x4x1x10x34xf32, #tpu.memory_space<vmem>>, vector<1x1x1x8x32xf32>
    %907 = vector.shape_cast %906 : vector<1x1x1x8x32xf32> to vector<8x32xf32>
    %c172 = arith.constant 172 : index
    %908 = memref.load %arg2[%c172] : memref<192xf32, #tpu.memory_space<smem>>
    %909 = vector.broadcast %908 : f32 to vector<8x32xf32>
    %910 = arith.mulf %909, %907 : vector<8x32xf32>
    %911 = arith.addf %905, %910 : vector<8x32xf32>
    %c0_610 = arith.constant 0 : index
    %c0_611 = arith.constant 0 : index
    %c0_612 = arith.constant 0 : index
    %c2_613 = arith.constant 2 : index
    %c2_614 = arith.constant 2 : index
    %912 = vector.load %arg4[%c0_610, %c0_611, %c0_612, %c2_613, %c2_614] : memref<1x4x1x10x34xf32, #tpu.memory_space<vmem>>, vector<1x1x1x8x32xf32>
    %913 = vector.shape_cast %912 : vector<1x1x1x8x32xf32> to vector<8x32xf32>
    %c173 = arith.constant 173 : index
    %914 = memref.load %arg2[%c173] : memref<192xf32, #tpu.memory_space<smem>>
    %915 = vector.broadcast %914 : f32 to vector<8x32xf32>
    %916 = arith.mulf %915, %913 : vector<8x32xf32>
    %917 = arith.addf %911, %916 : vector<8x32xf32>
    %c0_615 = arith.constant 0 : index
    %c1_616 = arith.constant 1 : index
    %c0_617 = arith.constant 0 : index
    %c0_618 = arith.constant 0 : index
    %c0_619 = arith.constant 0 : index
    %918 = vector.load %arg4[%c0_615, %c1_616, %c0_617, %c0_618, %c0_619] : memref<1x4x1x10x34xf32, #tpu.memory_space<vmem>>, vector<1x1x1x8x32xf32>
    %919 = vector.shape_cast %918 : vector<1x1x1x8x32xf32> to vector<8x32xf32>
    %c78 = arith.constant 78 : index
    %920 = memref.load %arg2[%c78] : memref<192xf32, #tpu.memory_space<smem>>
    %921 = vector.broadcast %920 : f32 to vector<8x32xf32>
    %922 = arith.mulf %921, %919 : vector<8x32xf32>
    %923 = arith.addf %895, %922 : vector<8x32xf32>
    %c0_620 = arith.constant 0 : index
    %c1_621 = arith.constant 1 : index
    %c0_622 = arith.constant 0 : index
    %c0_623 = arith.constant 0 : index
    %c1_624 = arith.constant 1 : index
    %924 = vector.load %arg4[%c0_620, %c1_621, %c0_622, %c0_623, %c1_624] : memref<1x4x1x10x34xf32, #tpu.memory_space<vmem>>, vector<1x1x1x8x32xf32>
    %925 = vector.shape_cast %924 : vector<1x1x1x8x32xf32> to vector<8x32xf32>
    %c79 = arith.constant 79 : index
    %926 = memref.load %arg2[%c79] : memref<192xf32, #tpu.memory_space<smem>>
    %927 = vector.broadcast %926 : f32 to vector<8x32xf32>
    %928 = arith.mulf %927, %925 : vector<8x32xf32>
    %929 = arith.addf %923, %928 : vector<8x32xf32>
    %c0_625 = arith.constant 0 : index
    %c1_626 = arith.constant 1 : index
    %c0_627 = arith.constant 0 : index
    %c0_628 = arith.constant 0 : index
    %c2_629 = arith.constant 2 : index
    %930 = vector.load %arg4[%c0_625, %c1_626, %c0_627, %c0_628, %c2_629] : memref<1x4x1x10x34xf32, #tpu.memory_space<vmem>>, vector<1x1x1x8x32xf32>
    %931 = vector.shape_cast %930 : vector<1x1x1x8x32xf32> to vector<8x32xf32>
    %c80 = arith.constant 80 : index
    %932 = memref.load %arg2[%c80] : memref<192xf32, #tpu.memory_space<smem>>
    %933 = vector.broadcast %932 : f32 to vector<8x32xf32>
    %934 = arith.mulf %933, %931 : vector<8x32xf32>
    %935 = arith.addf %929, %934 : vector<8x32xf32>
    %c0_630 = arith.constant 0 : index
    %c1_631 = arith.constant 1 : index
    %c0_632 = arith.constant 0 : index
    %c1_633 = arith.constant 1 : index
    %c0_634 = arith.constant 0 : index
    %936 = vector.load %arg4[%c0_630, %c1_631, %c0_632, %c1_633, %c0_634] : memref<1x4x1x10x34xf32, #tpu.memory_space<vmem>>, vector<1x1x1x8x32xf32>
    %937 = vector.shape_cast %936 : vector<1x1x1x8x32xf32> to vector<8x32xf32>
    %c81 = arith.constant 81 : index
    %938 = memref.load %arg2[%c81] : memref<192xf32, #tpu.memory_space<smem>>
    %939 = vector.broadcast %938 : f32 to vector<8x32xf32>
    %940 = arith.mulf %939, %937 : vector<8x32xf32>
    %941 = arith.addf %935, %940 : vector<8x32xf32>
    %c174 = arith.constant 174 : index
    %942 = memref.load %arg2[%c174] : memref<192xf32, #tpu.memory_space<smem>>
    %943 = vector.broadcast %942 : f32 to vector<8x32xf32>
    %944 = arith.mulf %943, %937 : vector<8x32xf32>
    %945 = arith.addf %917, %944 : vector<8x32xf32>
    %c0_635 = arith.constant 0 : index
    %c1_636 = arith.constant 1 : index
    %c0_637 = arith.constant 0 : index
    %c1_638 = arith.constant 1 : index
    %c1_639 = arith.constant 1 : index
    %946 = vector.load %arg4[%c0_635, %c1_636, %c0_637, %c1_638, %c1_639] : memref<1x4x1x10x34xf32, #tpu.memory_space<vmem>>, vector<1x1x1x8x32xf32>
    %947 = vector.shape_cast %946 : vector<1x1x1x8x32xf32> to vector<8x32xf32>
    %c82 = arith.constant 82 : index
    %948 = memref.load %arg2[%c82] : memref<192xf32, #tpu.memory_space<smem>>
    %949 = vector.broadcast %948 : f32 to vector<8x32xf32>
    %950 = arith.mulf %949, %947 : vector<8x32xf32>
    %951 = arith.addf %941, %950 : vector<8x32xf32>
    %c175 = arith.constant 175 : index
    %952 = memref.load %arg2[%c175] : memref<192xf32, #tpu.memory_space<smem>>
    %953 = vector.broadcast %952 : f32 to vector<8x32xf32>
    %954 = arith.mulf %953, %947 : vector<8x32xf32>
    %955 = arith.addf %945, %954 : vector<8x32xf32>
    %c0_640 = arith.constant 0 : index
    %c1_641 = arith.constant 1 : index
    %c0_642 = arith.constant 0 : index
    %c1_643 = arith.constant 1 : index
    %c2_644 = arith.constant 2 : index
    %956 = vector.load %arg4[%c0_640, %c1_641, %c0_642, %c1_643, %c2_644] : memref<1x4x1x10x34xf32, #tpu.memory_space<vmem>>, vector<1x1x1x8x32xf32>
    %957 = vector.shape_cast %956 : vector<1x1x1x8x32xf32> to vector<8x32xf32>
    %c83 = arith.constant 83 : index
    %958 = memref.load %arg2[%c83] : memref<192xf32, #tpu.memory_space<smem>>
    %959 = vector.broadcast %958 : f32 to vector<8x32xf32>
    %960 = arith.mulf %959, %957 : vector<8x32xf32>
    %961 = arith.addf %951, %960 : vector<8x32xf32>
    %c176 = arith.constant 176 : index
    %962 = memref.load %arg2[%c176] : memref<192xf32, #tpu.memory_space<smem>>
    %963 = vector.broadcast %962 : f32 to vector<8x32xf32>
    %964 = arith.mulf %963, %957 : vector<8x32xf32>
    %965 = arith.addf %955, %964 : vector<8x32xf32>
    %c0_645 = arith.constant 0 : index
    %c1_646 = arith.constant 1 : index
    %c0_647 = arith.constant 0 : index
    %c2_648 = arith.constant 2 : index
    %c0_649 = arith.constant 0 : index
    %966 = vector.load %arg4[%c0_645, %c1_646, %c0_647, %c2_648, %c0_649] : memref<1x4x1x10x34xf32, #tpu.memory_space<vmem>>, vector<1x1x1x8x32xf32>
    %967 = vector.shape_cast %966 : vector<1x1x1x8x32xf32> to vector<8x32xf32>
    %c177 = arith.constant 177 : index
    %968 = memref.load %arg2[%c177] : memref<192xf32, #tpu.memory_space<smem>>
    %969 = vector.broadcast %968 : f32 to vector<8x32xf32>
    %970 = arith.mulf %969, %967 : vector<8x32xf32>
    %971 = arith.addf %965, %970 : vector<8x32xf32>
    %c0_650 = arith.constant 0 : index
    %c1_651 = arith.constant 1 : index
    %c0_652 = arith.constant 0 : index
    %c2_653 = arith.constant 2 : index
    %c1_654 = arith.constant 1 : index
    %972 = vector.load %arg4[%c0_650, %c1_651, %c0_652, %c2_653, %c1_654] : memref<1x4x1x10x34xf32, #tpu.memory_space<vmem>>, vector<1x1x1x8x32xf32>
    %973 = vector.shape_cast %972 : vector<1x1x1x8x32xf32> to vector<8x32xf32>
    %c178 = arith.constant 178 : index
    %974 = memref.load %arg2[%c178] : memref<192xf32, #tpu.memory_space<smem>>
    %975 = vector.broadcast %974 : f32 to vector<8x32xf32>
    %976 = arith.mulf %975, %973 : vector<8x32xf32>
    %977 = arith.addf %971, %976 : vector<8x32xf32>
    %c0_655 = arith.constant 0 : index
    %c1_656 = arith.constant 1 : index
    %c0_657 = arith.constant 0 : index
    %c2_658 = arith.constant 2 : index
    %c2_659 = arith.constant 2 : index
    %978 = vector.load %arg4[%c0_655, %c1_656, %c0_657, %c2_658, %c2_659] : memref<1x4x1x10x34xf32, #tpu.memory_space<vmem>>, vector<1x1x1x8x32xf32>
    %979 = vector.shape_cast %978 : vector<1x1x1x8x32xf32> to vector<8x32xf32>
    %c179 = arith.constant 179 : index
    %980 = memref.load %arg2[%c179] : memref<192xf32, #tpu.memory_space<smem>>
    %981 = vector.broadcast %980 : f32 to vector<8x32xf32>
    %982 = arith.mulf %981, %979 : vector<8x32xf32>
    %983 = arith.addf %977, %982 : vector<8x32xf32>
    %c0_660 = arith.constant 0 : index
    %c2_661 = arith.constant 2 : index
    %c0_662 = arith.constant 0 : index
    %c0_663 = arith.constant 0 : index
    %c0_664 = arith.constant 0 : index
    %984 = vector.load %arg4[%c0_660, %c2_661, %c0_662, %c0_663, %c0_664] : memref<1x4x1x10x34xf32, #tpu.memory_space<vmem>>, vector<1x1x1x8x32xf32>
    %985 = vector.shape_cast %984 : vector<1x1x1x8x32xf32> to vector<8x32xf32>
    %c84 = arith.constant 84 : index
    %986 = memref.load %arg2[%c84] : memref<192xf32, #tpu.memory_space<smem>>
    %987 = vector.broadcast %986 : f32 to vector<8x32xf32>
    %988 = arith.mulf %987, %985 : vector<8x32xf32>
    %989 = arith.addf %961, %988 : vector<8x32xf32>
    %c0_665 = arith.constant 0 : index
    %c2_666 = arith.constant 2 : index
    %c0_667 = arith.constant 0 : index
    %c0_668 = arith.constant 0 : index
    %c1_669 = arith.constant 1 : index
    %990 = vector.load %arg4[%c0_665, %c2_666, %c0_667, %c0_668, %c1_669] : memref<1x4x1x10x34xf32, #tpu.memory_space<vmem>>, vector<1x1x1x8x32xf32>
    %991 = vector.shape_cast %990 : vector<1x1x1x8x32xf32> to vector<8x32xf32>
    %c85 = arith.constant 85 : index
    %992 = memref.load %arg2[%c85] : memref<192xf32, #tpu.memory_space<smem>>
    %993 = vector.broadcast %992 : f32 to vector<8x32xf32>
    %994 = arith.mulf %993, %991 : vector<8x32xf32>
    %995 = arith.addf %989, %994 : vector<8x32xf32>
    %c0_670 = arith.constant 0 : index
    %c2_671 = arith.constant 2 : index
    %c0_672 = arith.constant 0 : index
    %c0_673 = arith.constant 0 : index
    %c2_674 = arith.constant 2 : index
    %996 = vector.load %arg4[%c0_670, %c2_671, %c0_672, %c0_673, %c2_674] : memref<1x4x1x10x34xf32, #tpu.memory_space<vmem>>, vector<1x1x1x8x32xf32>
    %997 = vector.shape_cast %996 : vector<1x1x1x8x32xf32> to vector<8x32xf32>
    %c86 = arith.constant 86 : index
    %998 = memref.load %arg2[%c86] : memref<192xf32, #tpu.memory_space<smem>>
    %999 = vector.broadcast %998 : f32 to vector<8x32xf32>
    %1000 = arith.mulf %999, %997 : vector<8x32xf32>
    %1001 = arith.addf %995, %1000 : vector<8x32xf32>
    %c0_675 = arith.constant 0 : index
    %c2_676 = arith.constant 2 : index
    %c0_677 = arith.constant 0 : index
    %c1_678 = arith.constant 1 : index
    %c0_679 = arith.constant 0 : index
    %1002 = vector.load %arg4[%c0_675, %c2_676, %c0_677, %c1_678, %c0_679] : memref<1x4x1x10x34xf32, #tpu.memory_space<vmem>>, vector<1x1x1x8x32xf32>
    %1003 = vector.shape_cast %1002 : vector<1x1x1x8x32xf32> to vector<8x32xf32>
    %c87 = arith.constant 87 : index
    %1004 = memref.load %arg2[%c87] : memref<192xf32, #tpu.memory_space<smem>>
    %1005 = vector.broadcast %1004 : f32 to vector<8x32xf32>
    %1006 = arith.mulf %1005, %1003 : vector<8x32xf32>
    %1007 = arith.addf %1001, %1006 : vector<8x32xf32>
    %c180 = arith.constant 180 : index
    %1008 = memref.load %arg2[%c180] : memref<192xf32, #tpu.memory_space<smem>>
    %1009 = vector.broadcast %1008 : f32 to vector<8x32xf32>
    %1010 = arith.mulf %1009, %1003 : vector<8x32xf32>
    %1011 = arith.addf %983, %1010 : vector<8x32xf32>
    %c0_680 = arith.constant 0 : index
    %c2_681 = arith.constant 2 : index
    %c0_682 = arith.constant 0 : index
    %c1_683 = arith.constant 1 : index
    %c1_684 = arith.constant 1 : index
    %1012 = vector.load %arg4[%c0_680, %c2_681, %c0_682, %c1_683, %c1_684] : memref<1x4x1x10x34xf32, #tpu.memory_space<vmem>>, vector<1x1x1x8x32xf32>
    %1013 = vector.shape_cast %1012 : vector<1x1x1x8x32xf32> to vector<8x32xf32>
    %c88 = arith.constant 88 : index
    %1014 = memref.load %arg2[%c88] : memref<192xf32, #tpu.memory_space<smem>>
    %1015 = vector.broadcast %1014 : f32 to vector<8x32xf32>
    %1016 = arith.mulf %1015, %1013 : vector<8x32xf32>
    %1017 = arith.addf %1007, %1016 : vector<8x32xf32>
    %c181 = arith.constant 181 : index
    %1018 = memref.load %arg2[%c181] : memref<192xf32, #tpu.memory_space<smem>>
    %1019 = vector.broadcast %1018 : f32 to vector<8x32xf32>
    %1020 = arith.mulf %1019, %1013 : vector<8x32xf32>
    %1021 = arith.addf %1011, %1020 : vector<8x32xf32>
    %c0_685 = arith.constant 0 : index
    %c2_686 = arith.constant 2 : index
    %c0_687 = arith.constant 0 : index
    %c1_688 = arith.constant 1 : index
    %c2_689 = arith.constant 2 : index
    %1022 = vector.load %arg4[%c0_685, %c2_686, %c0_687, %c1_688, %c2_689] : memref<1x4x1x10x34xf32, #tpu.memory_space<vmem>>, vector<1x1x1x8x32xf32>
    %1023 = vector.shape_cast %1022 : vector<1x1x1x8x32xf32> to vector<8x32xf32>
    %c89 = arith.constant 89 : index
    %1024 = memref.load %arg2[%c89] : memref<192xf32, #tpu.memory_space<smem>>
    %1025 = vector.broadcast %1024 : f32 to vector<8x32xf32>
    %1026 = arith.mulf %1025, %1023 : vector<8x32xf32>
    %1027 = arith.addf %1017, %1026 : vector<8x32xf32>
    %c182 = arith.constant 182 : index
    %1028 = memref.load %arg2[%c182] : memref<192xf32, #tpu.memory_space<smem>>
    %1029 = vector.broadcast %1028 : f32 to vector<8x32xf32>
    %1030 = arith.mulf %1029, %1023 : vector<8x32xf32>
    %1031 = arith.addf %1021, %1030 : vector<8x32xf32>
    %c0_690 = arith.constant 0 : index
    %c2_691 = arith.constant 2 : index
    %c0_692 = arith.constant 0 : index
    %c2_693 = arith.constant 2 : index
    %c0_694 = arith.constant 0 : index
    %1032 = vector.load %arg4[%c0_690, %c2_691, %c0_692, %c2_693, %c0_694] : memref<1x4x1x10x34xf32, #tpu.memory_space<vmem>>, vector<1x1x1x8x32xf32>
    %1033 = vector.shape_cast %1032 : vector<1x1x1x8x32xf32> to vector<8x32xf32>
    %c183 = arith.constant 183 : index
    %1034 = memref.load %arg2[%c183] : memref<192xf32, #tpu.memory_space<smem>>
    %1035 = vector.broadcast %1034 : f32 to vector<8x32xf32>
    %1036 = arith.mulf %1035, %1033 : vector<8x32xf32>
    %1037 = arith.addf %1031, %1036 : vector<8x32xf32>
    %c0_695 = arith.constant 0 : index
    %c2_696 = arith.constant 2 : index
    %c0_697 = arith.constant 0 : index
    %c2_698 = arith.constant 2 : index
    %c1_699 = arith.constant 1 : index
    %1038 = vector.load %arg4[%c0_695, %c2_696, %c0_697, %c2_698, %c1_699] : memref<1x4x1x10x34xf32, #tpu.memory_space<vmem>>, vector<1x1x1x8x32xf32>
    %1039 = vector.shape_cast %1038 : vector<1x1x1x8x32xf32> to vector<8x32xf32>
    %c184 = arith.constant 184 : index
    %1040 = memref.load %arg2[%c184] : memref<192xf32, #tpu.memory_space<smem>>
    %1041 = vector.broadcast %1040 : f32 to vector<8x32xf32>
    %1042 = arith.mulf %1041, %1039 : vector<8x32xf32>
    %1043 = arith.addf %1037, %1042 : vector<8x32xf32>
    %c0_700 = arith.constant 0 : index
    %c2_701 = arith.constant 2 : index
    %c0_702 = arith.constant 0 : index
    %c2_703 = arith.constant 2 : index
    %c2_704 = arith.constant 2 : index
    %1044 = vector.load %arg4[%c0_700, %c2_701, %c0_702, %c2_703, %c2_704] : memref<1x4x1x10x34xf32, #tpu.memory_space<vmem>>, vector<1x1x1x8x32xf32>
    %1045 = vector.shape_cast %1044 : vector<1x1x1x8x32xf32> to vector<8x32xf32>
    %c185 = arith.constant 185 : index
    %1046 = memref.load %arg2[%c185] : memref<192xf32, #tpu.memory_space<smem>>
    %1047 = vector.broadcast %1046 : f32 to vector<8x32xf32>
    %1048 = arith.mulf %1047, %1045 : vector<8x32xf32>
    %1049 = arith.addf %1043, %1048 : vector<8x32xf32>
    %c0_705 = arith.constant 0 : index
    %c3_706 = arith.constant 3 : index
    %c0_707 = arith.constant 0 : index
    %c0_708 = arith.constant 0 : index
    %c0_709 = arith.constant 0 : index
    %1050 = vector.load %arg4[%c0_705, %c3_706, %c0_707, %c0_708, %c0_709] : memref<1x4x1x10x34xf32, #tpu.memory_space<vmem>>, vector<1x1x1x8x32xf32>
    %1051 = vector.shape_cast %1050 : vector<1x1x1x8x32xf32> to vector<8x32xf32>
    %c90 = arith.constant 90 : index
    %1052 = memref.load %arg2[%c90] : memref<192xf32, #tpu.memory_space<smem>>
    %1053 = vector.broadcast %1052 : f32 to vector<8x32xf32>
    %1054 = arith.mulf %1053, %1051 : vector<8x32xf32>
    %1055 = arith.addf %1027, %1054 : vector<8x32xf32>
    %c0_710 = arith.constant 0 : index
    %c3_711 = arith.constant 3 : index
    %c0_712 = arith.constant 0 : index
    %c0_713 = arith.constant 0 : index
    %c1_714 = arith.constant 1 : index
    %1056 = vector.load %arg4[%c0_710, %c3_711, %c0_712, %c0_713, %c1_714] : memref<1x4x1x10x34xf32, #tpu.memory_space<vmem>>, vector<1x1x1x8x32xf32>
    %1057 = vector.shape_cast %1056 : vector<1x1x1x8x32xf32> to vector<8x32xf32>
    %c91 = arith.constant 91 : index
    %1058 = memref.load %arg2[%c91] : memref<192xf32, #tpu.memory_space<smem>>
    %1059 = vector.broadcast %1058 : f32 to vector<8x32xf32>
    %1060 = arith.mulf %1059, %1057 : vector<8x32xf32>
    %1061 = arith.addf %1055, %1060 : vector<8x32xf32>
    %c0_715 = arith.constant 0 : index
    %c3_716 = arith.constant 3 : index
    %c0_717 = arith.constant 0 : index
    %c0_718 = arith.constant 0 : index
    %c2_719 = arith.constant 2 : index
    %1062 = vector.load %arg4[%c0_715, %c3_716, %c0_717, %c0_718, %c2_719] : memref<1x4x1x10x34xf32, #tpu.memory_space<vmem>>, vector<1x1x1x8x32xf32>
    %1063 = vector.shape_cast %1062 : vector<1x1x1x8x32xf32> to vector<8x32xf32>
    %c92 = arith.constant 92 : index
    %1064 = memref.load %arg2[%c92] : memref<192xf32, #tpu.memory_space<smem>>
    %1065 = vector.broadcast %1064 : f32 to vector<8x32xf32>
    %1066 = arith.mulf %1065, %1063 : vector<8x32xf32>
    %1067 = arith.addf %1061, %1066 : vector<8x32xf32>
    %c0_720 = arith.constant 0 : index
    %c3_721 = arith.constant 3 : index
    %c0_722 = arith.constant 0 : index
    %c1_723 = arith.constant 1 : index
    %c0_724 = arith.constant 0 : index
    %1068 = vector.load %arg4[%c0_720, %c3_721, %c0_722, %c1_723, %c0_724] : memref<1x4x1x10x34xf32, #tpu.memory_space<vmem>>, vector<1x1x1x8x32xf32>
    %1069 = vector.shape_cast %1068 : vector<1x1x1x8x32xf32> to vector<8x32xf32>
    %c93 = arith.constant 93 : index
    %1070 = memref.load %arg2[%c93] : memref<192xf32, #tpu.memory_space<smem>>
    %1071 = vector.broadcast %1070 : f32 to vector<8x32xf32>
    %1072 = arith.mulf %1071, %1069 : vector<8x32xf32>
    %1073 = arith.addf %1067, %1072 : vector<8x32xf32>
    %c186 = arith.constant 186 : index
    %1074 = memref.load %arg2[%c186] : memref<192xf32, #tpu.memory_space<smem>>
    %1075 = vector.broadcast %1074 : f32 to vector<8x32xf32>
    %1076 = arith.mulf %1075, %1069 : vector<8x32xf32>
    %1077 = arith.addf %1049, %1076 : vector<8x32xf32>
    %c0_725 = arith.constant 0 : index
    %c3_726 = arith.constant 3 : index
    %c0_727 = arith.constant 0 : index
    %c1_728 = arith.constant 1 : index
    %c1_729 = arith.constant 1 : index
    %1078 = vector.load %arg4[%c0_725, %c3_726, %c0_727, %c1_728, %c1_729] : memref<1x4x1x10x34xf32, #tpu.memory_space<vmem>>, vector<1x1x1x8x32xf32>
    %1079 = vector.shape_cast %1078 : vector<1x1x1x8x32xf32> to vector<8x32xf32>
    %c94 = arith.constant 94 : index
    %1080 = memref.load %arg2[%c94] : memref<192xf32, #tpu.memory_space<smem>>
    %1081 = vector.broadcast %1080 : f32 to vector<8x32xf32>
    %1082 = arith.mulf %1081, %1079 : vector<8x32xf32>
    %1083 = arith.addf %1073, %1082 : vector<8x32xf32>
    %c187 = arith.constant 187 : index
    %1084 = memref.load %arg2[%c187] : memref<192xf32, #tpu.memory_space<smem>>
    %1085 = vector.broadcast %1084 : f32 to vector<8x32xf32>
    %1086 = arith.mulf %1085, %1079 : vector<8x32xf32>
    %1087 = arith.addf %1077, %1086 : vector<8x32xf32>
    %c0_730 = arith.constant 0 : index
    %c3_731 = arith.constant 3 : index
    %c0_732 = arith.constant 0 : index
    %c1_733 = arith.constant 1 : index
    %c2_734 = arith.constant 2 : index
    %1088 = vector.load %arg4[%c0_730, %c3_731, %c0_732, %c1_733, %c2_734] : memref<1x4x1x10x34xf32, #tpu.memory_space<vmem>>, vector<1x1x1x8x32xf32>
    %1089 = vector.shape_cast %1088 : vector<1x1x1x8x32xf32> to vector<8x32xf32>
    %c95 = arith.constant 95 : index
    %1090 = memref.load %arg2[%c95] : memref<192xf32, #tpu.memory_space<smem>>
    %1091 = vector.broadcast %1090 : f32 to vector<8x32xf32>
    %1092 = arith.mulf %1091, %1089 : vector<8x32xf32>
    %1093 = arith.addf %1083, %1092 : vector<8x32xf32>
    %c188 = arith.constant 188 : index
    %1094 = memref.load %arg2[%c188] : memref<192xf32, #tpu.memory_space<smem>>
    %1095 = vector.broadcast %1094 : f32 to vector<8x32xf32>
    %1096 = arith.mulf %1095, %1089 : vector<8x32xf32>
    %1097 = arith.addf %1087, %1096 : vector<8x32xf32>
    %c0_735 = arith.constant 0 : index
    %c3_736 = arith.constant 3 : index
    %c0_737 = arith.constant 0 : index
    %c2_738 = arith.constant 2 : index
    %c0_739 = arith.constant 0 : index
    %1098 = vector.load %arg4[%c0_735, %c3_736, %c0_737, %c2_738, %c0_739] : memref<1x4x1x10x34xf32, #tpu.memory_space<vmem>>, vector<1x1x1x8x32xf32>
    %1099 = vector.shape_cast %1098 : vector<1x1x1x8x32xf32> to vector<8x32xf32>
    %c189 = arith.constant 189 : index
    %1100 = memref.load %arg2[%c189] : memref<192xf32, #tpu.memory_space<smem>>
    %1101 = vector.broadcast %1100 : f32 to vector<8x32xf32>
    %1102 = arith.mulf %1101, %1099 : vector<8x32xf32>
    %1103 = arith.addf %1097, %1102 : vector<8x32xf32>
    %c0_740 = arith.constant 0 : index
    %c3_741 = arith.constant 3 : index
    %c0_742 = arith.constant 0 : index
    %c2_743 = arith.constant 2 : index
    %c1_744 = arith.constant 1 : index
    %1104 = vector.load %arg4[%c0_740, %c3_741, %c0_742, %c2_743, %c1_744] : memref<1x4x1x10x34xf32, #tpu.memory_space<vmem>>, vector<1x1x1x8x32xf32>
    %1105 = vector.shape_cast %1104 : vector<1x1x1x8x32xf32> to vector<8x32xf32>
    %c190 = arith.constant 190 : index
    %1106 = memref.load %arg2[%c190] : memref<192xf32, #tpu.memory_space<smem>>
    %1107 = vector.broadcast %1106 : f32 to vector<8x32xf32>
    %1108 = arith.mulf %1107, %1105 : vector<8x32xf32>
    %1109 = arith.addf %1103, %1108 : vector<8x32xf32>
    %c0_745 = arith.constant 0 : index
    %c3_746 = arith.constant 3 : index
    %c0_747 = arith.constant 0 : index
    %c2_748 = arith.constant 2 : index
    %c2_749 = arith.constant 2 : index
    %1110 = vector.load %arg4[%c0_745, %c3_746, %c0_747, %c2_748, %c2_749] : memref<1x4x1x10x34xf32, #tpu.memory_space<vmem>>, vector<1x1x1x8x32xf32>
    %1111 = vector.shape_cast %1110 : vector<1x1x1x8x32xf32> to vector<8x32xf32>
    %c191 = arith.constant 191 : index
    %1112 = memref.load %arg2[%c191] : memref<192xf32, #tpu.memory_space<smem>>
    %1113 = vector.broadcast %1112 : f32 to vector<8x32xf32>
    %1114 = arith.mulf %1113, %1111 : vector<8x32xf32>
    %1115 = arith.addf %1109, %1114 : vector<8x32xf32>
    %cst_750 = arith.constant dense<0.000000e+00> : vector<16x32xf32>
    %1116 = tpu.matmul %6, %1093, %cst_750 {dimension_numbers = #tpu.dot_dimension_numbers<[1], [0], [0], [1], [0, 0, 1, 1], [], []>} : vector<16x8xf32>, vector<8x32xf32>, vector<16x32xf32> -> vector<16x32xf32>
    %cst_751 = arith.constant dense<0.000000e+00> : vector<16x32xf32>
    %1117 = tpu.matmul %13, %1115, %cst_751 {dimension_numbers = #tpu.dot_dimension_numbers<[1], [0], [0], [1], [0, 0, 1, 1], [], []>} : vector<16x8xf32>, vector<8x32xf32>, vector<16x32xf32> -> vector<16x32xf32>
    %1118 = arith.addf %1116, %1117 : vector<16x32xf32>
    %c0_752 = arith.constant 0 : index
    %c3_753 = arith.constant 3 : index
    %c0_754 = arith.constant 0 : index
    %c0_755 = arith.constant 0 : index
    %1119 = vector.load %arg5[%c0_752, %c3_753, %c0_754, %c0_755] : memref<1x4x16x32xf32, #tpu.memory_space<vmem>>, vector<1x1x16x32xf32>
    %1120 = vector.shape_cast %1119 : vector<1x1x16x32xf32> to vector<16x32xf32>
    %1121 = vector.shape_cast %1118 : vector<16x32xf32> to vector<1x1x16x32xf32>
    tpu.vector_store %arg5[%c0_752, %c3_753, %c0_754, %c0_755], %1121 {strides = array<i32>} : memref<1x4x16x32xf32, #tpu.memory_space<vmem>>, vector<1x1x16x32xf32>,
    return
  }
  func.func @transform_0(%arg0: i32, %arg1: i32) -> i32 {
    %c0_i32 = arith.constant 0 : i32
    %c0_i32_0 = arith.constant 0 : i32
    return %c0_i32 : i32
  }
  func.func @transform_1(%arg0: i32, %arg1: i32) -> i32 {
    %c0_i32 = arith.constant 0 : i32
    %c0_i32_0 = arith.constant 0 : i32
    return %c0_i32 : i32
  }
  func.func @transform_2(%arg0: i32, %arg1: i32) -> (i32, i32, i32, i32, i32) {
    %c0_i32 = arith.constant 0 : i32
    %c0_i32_0 = arith.constant 0 : i32
    %c0_i32_1 = arith.constant 0 : i32
    %c0_i32_2 = arith.constant 0 : i32
    return %arg0, %c0_i32, %arg1, %c0_i32_0, %c0_i32_1 : i32, i32, i32, i32, i32
  }
  func.func @transform_3(%arg0: i32, %arg1: i32) -> (i32, i32, i32, i32) {
    %c0_i32 = arith.constant 0 : i32
    %c0_i32_0 = arith.constant 0 : i32
    %c0_i32_1 = arith.constant 0 : i32
    return %arg0, %c0_i32, %arg1, %c0_i32_0 : i32, i32, i32, i32
  }
}

</mosaic_0001>

<llo_original>
// kernel: upsample_forward.3
$region0: #{upsample_forward.3}
  #allocation0 [shape = 'u32[]', space=smem, size = 0x4, offset = 0x4, fixed_abs, tag = 'smem constant byte address 0x4 - core index']
  #allocation1 [shape = 'u32[144,128]{1,0:T(1,128)}', space=vmem, size = 0x12000, scoped, tag = 'internal scratch']
  #allocation10 [shape = 's32[]', space=sflag, size = 0x4, offset = 0, fixed_abs, tag = 'sflag constant byte address 0x0 - dummy sync flag']
  #allocation12 [shape = 's32[]', space=sflag, size = 0x4, offset = 0, fixed_abs, tag = 'sflag constant byte address 0x0 - dummy sync flag']
  %s0 = inlined_call_operand.hbm [shape: f32[192], index: 0, kind: input, shape index: {}]
  %s1 = inlined_call_operand.hbm [shape: f32[4], index: 1, kind: input, shape index: {}]
  %s2 = inlined_call_operand.hbm [shape: f32[2,4,2,10,34], index: 2, kind: input, shape index: {}]
  %s3 = inlined_call_operand.hbm [shape: f32[2,4,32,32], index: 3, kind: output, shape index: {}]
  %s4 = sld [smem:[#allocation0]]
  $region57: #{upsample_forward.3} parent=0
    _
  %s6 = ssub.s32 1, %s4
  %s7 = scalar_select 0, %s6, %s4
  $region1: #{upsample_forward.3} parent=0
    #allocation2 [shape = 'u8[1024]{0}', space=smem, size = 0x400, scoped, tag = 'input window, operand 0, single buffered']
    #allocation3 [shape = 's32[2]{0}', space=sflag, size = 0x8, scoped, tag = 'scoped memory for upsample_forward.3']
    #allocation4 [shape = 's32[2]{0}', space=sflag, size = 0x8, scoped, tag = 'scoped memory for upsample_forward.3']
    #allocation5 [shape = 's32[2]{0}', space=sflag, size = 0x8, scoped, tag = 'scoped memory for upsample_forward.3']
    #allocation6 [shape = 'u8[512]{0}', space=smem, size = 0x200, scoped, tag = 'input window, operand 1, single buffered']
    #allocation7 [shape = 's32[1]{0}', space=sflag, size = 0x4, scoped, tag = 'scoped memory for upsample_forward.3']
    #allocation8 [shape = 'u8[65536]{0}', space=vmem, size = 0x10000, scoped, tag = 'input window, operand 2']
    #allocation9 [shape = 'u8[65536]{0}', space=vmem, size = 0x10000, scoped, tag = 'output window, operand 0']
    %8 = vsyncpa [#allocation5], 0
    %9 = vsyncpa [#allocation7], 0
    %10 = vsyncpa [#allocation3], 0
    %s11 = scalar_lea.sflag [#allocation3], 1
    %12 = vsyncpa %s11, 0
    %13 = vsyncpa [#allocation4], 0
    %s14 = scalar_lea.sflag [#allocation4], 1
    %15 = vsyncpa %s14, 0
    loop: start=0, step=1, limit=6
    $region2: #{upsample_forward.3} parent=1 // loop_pre_header
      _
    $region3: #{upsample_forward.3} parent=1 // loop_header
      %s17 = sphi 0, %s21
      %p18 = scmp.ge.s32.totalorder %s17, 6
      %s24 = sphi 0, %s36
      %s25 = sphi 0, %s32
      %s26 = sphi 0, %s24
      %s27 = sphi 0, %s25
      %s28 = sphi 0, %s26
      %s29 = sphi 0, %s27
      %s37 = sphi 0, %s37
      %s39 = sphi 0, %s37
      %s40 = sphi 0, %s39
      %s54 = sphi 0, %s40
      %s58 = sphi 0, %s58
      %s60 = sphi 0, %s58
      %s61 = sphi 0, %s60
      %s75 = sphi 0, %s61
      %s83 = sphi 0, %s85
      %s86 = sphi 0, %s83
      %s87 = sphi 0, %s86
      %s103 = sphi 0, %s87
      %s111 = sphi 0, %s113
      %s114 = sphi 0, %s111
      %s115 = sphi 0, %s114
      %s131 = sphi 0, %s115
    $region4: #{upsample_forward.3} parent=1 // loop_header_branch
      %20 = sbr.rel (%p18) target = $region8
    $region5: #{upsample_forward.3} parent=1 // loop_body
      %s22 = ssub.s32 %s17, 1
      %s23 = ssub.s32 %s17, 2
      %s30 = sadd.s32 1, %s25
      %p31 = scmp.ge.s32.totalorder %s30, 2
      %s32 = scalar_select %p31, 0, %s30
      %s33 = sadd.s32 1, %s24
      %s34 = scalar_select %p31, %s33, %s24
      %p35 = scmp.ge.s32.totalorder %s34, 2
      %s36 = scalar_select %p35, 0, %s34
      %s38 = sadd.s32 %s37, 1
      %p41 = scmp.eq.s32.totalorder %s17, 3
      %p42 = scmp.ne.s32.totalorder %s37, %s39
      %p43 = scmp.eq.s32.totalorder %s17, 0
      %p44 = por %p42, %p43
      %p45 = scmp.ne.s32.totalorder %s37, %s39
      %p46 = scmp.eq.s32.totalorder %s22, 3
      %p47 = por %p45, %p46
      %p48 = scmp.ne.s32.totalorder %s39, %s40
      %p49 = scmp.eq.s32.totalorder %s22, 0
      %p50 = por %p48, %p49
      %p51 = scmp.ne.s32.totalorder %s39, %s40
      %p52 = scmp.eq.s32.totalorder %s23, 3
      %p53 = por %p51, %p52
      %p55 = scmp.ne.s32.totalorder %s40, %s54
      %p56 = scmp.eq.s32.totalorder %s23, 0
      %p57 = por %p55, %p56
      %s59 = sadd.s32 %s58, 1
      %p62 = scmp.eq.s32.totalorder %s17, 3
      %p63 = scmp.ne.s32.totalorder %s58, %s60
      %p64 = scmp.eq.s32.totalorder %s17, 0
      %p65 = por %p63, %p64
      %p66 = scmp.ne.s32.totalorder %s58, %s60
      %p67 = scmp.eq.s32.totalorder %s22, 3
      %p68 = por %p66, %p67
      %p69 = scmp.ne.s32.totalorder %s60, %s61
      %p70 = scmp.eq.s32.totalorder %s22, 0
      %p71 = por %p69, %p70
      %p72 = scmp.ne.s32.totalorder %s60, %s61
      %p73 = scmp.eq.s32.totalorder %s23, 3
      %p74 = por %p72, %p73
      %p76 = scmp.ne.s32.totalorder %s61, %s75
      %p77 = scmp.eq.s32.totalorder %s23, 0
      %p78 = por %p76, %p77
      %s79 = ssub.s32 %s24, %s36
      %s80 = ssub.s32 %s25, %s32
      %s81 = sor.u32 %s79, %s80
      %p82 = scmp.eq.s32.totalorder %s81, 0
      %s84 = sadd.s32 %s83, 1
      %s85 = scalar_select %p82, %s83, %s84
      %p88 = pneg %p82
      %p89 = scmp.eq.s32.totalorder %s17, 3
      %p90 = por %p88, %p89
      %p91 = scmp.ne.s32.totalorder %s83, %s86
      %p92 = scmp.eq.s32.totalorder %s17, 0
      %p93 = por %p91, %p92
      %p94 = scmp.ne.s32.totalorder %s83, %s86
      %p95 = scmp.eq.s32.totalorder %s22, 3
      %p96 = por %p94, %p95
      %p97 = scmp.ne.s32.totalorder %s86, %s87
      %p98 = scmp.eq.s32.totalorder %s22, 0
      %p99 = por %p97, %p98
      %p100 = scmp.ne.s32.totalorder %s86, %s87
      %p101 = scmp.eq.s32.totalorder %s23, 3
      %p102 = por %p100, %p101
      %p104 = scmp.ne.s32.totalorder %s87, %s103
      %p105 = scmp.eq.s32.totalorder %s23, 0
      %p106 = por %p104, %p105
      %s107 = ssub.s32 %s24, %s36
      %s108 = ssub.s32 %s25, %s32
      %s109 = sor.u32 %s107, %s108
      %p110 = scmp.eq.s32.totalorder %s109, 0
      %s112 = sadd.s32 %s111, 1
      %s113 = scalar_select %p110, %s111, %s112
      %p116 = pneg %p110
      %p117 = scmp.eq.s32.totalorder %s17, 3
      %p118 = por %p116, %p117
      %p119 = scmp.ne.s32.totalorder %s111, %s114
      %p120 = scmp.eq.s32.totalorder %s17, 0
      %p121 = por %p119, %p120
      %p122 = scmp.ne.s32.totalorder %s111, %s114
      %p123 = scmp.eq.s32.totalorder %s22, 3
      %p124 = por %p122, %p123
      %p125 = scmp.ne.s32.totalorder %s114, %s115
      %p126 = scmp.eq.s32.totalorder %s22, 0
      %p127 = por %p125, %p126
      %p128 = scmp.ne.s32.totalorder %s114, %s115
      %p129 = scmp.eq.s32.totalorder %s23, 3
      %p130 = por %p128, %p129
      %p132 = scmp.ne.s32.totalorder %s115, %s131
      %p133 = scmp.eq.s32.totalorder %s23, 0
      %p134 = por %p132, %p133
      %p135 = scmp.le.s32.totalorder 1, %s17
      %p136 = scmp.lt.s32.totalorder %s17, 5
      %p137 = pnand %p135, %p136
      %p138 = pneg %p137
      // Predicated region
      $region9: #{upsample_forward.3} parent=5 // pred_check
        _
      $region10: #{upsample_forward.3} parent=5 // pred_check_branch
        %140 = sbr.rel (%p137) target = $region12
      $region11: #{upsample_forward.3} parent=5 // pred_region
        %s141 = ssub.s32 %s17, 1
        // Predicated region
        $region13: #{upsample_forward.3} parent=11 // pred_check
          %p142 = pneg %p50
        $region14: #{upsample_forward.3} parent=11 // pred_check_branch
          %144 = sbr.rel (%p142) target = $region16
        $region15: #{upsample_forward.3} parent=11 // pred_region
          %s146 = ssub.s32 32, 32
          %147 = vsyncadd [#allocation5], %s146
          %150 = dma.hbm_to_smem %s0, 32, [#allocation2], [#allocation5]
        $region16: #{upsample_forward.3} parent=11 // pred_fallthru
          _
        // Predicated region
        $region17: #{upsample_forward.3} parent=11 // pred_check
          %p151 = pneg %p71
        $region18: #{upsample_forward.3} parent=11 // pred_check_branch
          %153 = sbr.rel (%p151) target = $region20
        $region19: #{upsample_forward.3} parent=11 // pred_region
          %s155 = ssub.s32 16, 16
          %156 = vsyncadd [#allocation7], %s155
          %159 = dma.hbm_to_smem %s1, 16, [#allocation6], [#allocation7]
        $region20: #{upsample_forward.3} parent=11 // pred_fallthru
          _
      $region12: #{upsample_forward.3} parent=5 // pred_fallthru
        _
      %p160 = scmp.lt.s32.totalorder %s17, 4
      // Predicated region
      $region21: #{upsample_forward.3} parent=5 // pred_check
        %p161 = pneg %p160
      $region22: #{upsample_forward.3} parent=5 // pred_check_branch
        %163 = sbr.rel (%p161) target = $region24
      $region23: #{upsample_forward.3} parent=5 // pred_region
        // Predicated region
        $region25: #{upsample_forward.3} parent=23 // pred_check
          %p164 = pneg %p93
        $region26: #{upsample_forward.3} parent=23 // pred_check_branch
          %166 = sbr.rel (%p164) target = $region28
        $region27: #{upsample_forward.3} parent=23 // pred_region
          #allocation11 [shape = 'u32[6]{0}', space=smem, size = 0x18, scoped, tag = 'DMA stride descriptor']
          %s167 = sand.u32 %s83, 1
          %s168 = scalar_lea.sflag [#allocation3], %s167
          %s169 = sand.u32 %s83, 1
          %s170 = smul.addr %s169, 64
          %s171 = scalar_lea.vmem [#allocation8], %s170
          %s173 = ssub.s32 1024, 1024
          %174 = vsyncadd %s168, %s173
          %s175 = smul.addr %s25, 2
          %s176 = smul.addr %s24, 16
          %s177 = sadd.s32 %s175, %s176
          %s178 = smul.addr %s177, 128
          %s179 = scalar_lea.hbm %s2, %s178
          %s181 = sshll.u32 1, 14
          %s182 = sxor.u32 4294967295, %s181
          %s184 = sld [smem:[#allocation0]]
          %s185 = sadd.s32 2, %s184
          %s187 = sshll.u32 7, 26
          %s188 = sxor.u32 4294967295, %s187
          %s189 = sand.u32 0, %s188
          %s190 = sshll.u32 %s185, 26
          %s191 = sor.u32 %s189, %s190
          %s192 = sshll.u32 %s171, 4
          %s193 = int_to_ptr.vmem [resolvable:$true] %s192
          %199 = sst [smem:[#allocation11]] 512
          %s200 = scalar_lea.smem [#allocation11], 1
          %201 = sst [smem:[%s200]] 256
          %s202 = scalar_lea.smem [#allocation11], 2
          %203 = sst [smem:[%s202]] 2
          %s204 = scalar_lea.smem [#allocation11], 3
          %205 = sst [smem:[%s204]] 128
          %s206 = scalar_lea.smem [#allocation11], 4
          %207 = sst [smem:[%s206]] 128
          %s208 = scalar_lea.smem [#allocation11], 5
          %209 = sst [smem:[%s208]] 8
          %211 = dma.general %s179, 1024, %s193, %s168, [#allocation10], [#allocation11], %s191, 0
        $region28: #{upsample_forward.3} parent=23 // pred_fallthru
          _
      $region24: #{upsample_forward.3} parent=5 // pred_fallthru
        _
      %p212 = scmp.le.s32.totalorder 1, %s17
      %p213 = scmp.lt.s32.totalorder %s17, 5
      %p214 = pnand %p212, %p213
      %p215 = pneg %p214
      // Predicated region
      $region29: #{upsample_forward.3} parent=5 // pred_check
        _
      $region30: #{upsample_forward.3} parent=5 // pred_check_branch
        %217 = sbr.rel (%p214) target = $region32
      $region31: #{upsample_forward.3} parent=5 // pred_region
        %s218 = ssub.s32 %s17, 1
        // Predicated region
        $region33: #{upsample_forward.3} parent=31 // pred_check
          %p219 = pneg %p50
        $region34: #{upsample_forward.3} parent=31 // pred_check_branch
          %221 = sbr.rel (%p219) target = $region36
        $region35: #{upsample_forward.3} parent=31 // pred_region
          %222 = dma.done [#allocation5], 32
        $region36: #{upsample_forward.3} parent=31 // pred_fallthru
          _
        // Predicated region
        $region37: #{upsample_forward.3} parent=31 // pred_check
          %p223 = pneg %p71
        $region38: #{upsample_forward.3} parent=31 // pred_check_branch
          %225 = sbr.rel (%p223) target = $region40
        $region39: #{upsample_forward.3} parent=31 // pred_region
          %226 = dma.done [#allocation7], 16
        $region40: #{upsample_forward.3} parent=31 // pred_fallthru
          _
        %s227 = sand.u32 %s86, 1
        %s228 = scalar_lea.sflag [#allocation3], %s227
        %s229 = sand.u32 %s86, 1
        %s230 = smul.addr %s229, 64
        %s231 = scalar_lea.vmem [#allocation8], %s230
        // Predicated region
        $region41: #{upsample_forward.3} parent=31 // pred_check
          %p232 = pneg %p99
        $region42: #{upsample_forward.3} parent=31 // pred_check_branch
          %234 = sbr.rel (%p232) target = $region44
        $region43: #{upsample_forward.3} parent=31 // pred_region
          %235 = dma.done %s228, 1024
        $region44: #{upsample_forward.3} parent=31 // pred_fallthru
          _
        %236 = sfence
        %p237 = pneg %p50
        %p238 = pneg %p47
        %p239 = pneg %p71
        %p240 = pneg %p68
        %s241 = sand.u32 %s86, 1
        %s242 = scalar_lea.sflag [#allocation3], %s241
        %s243 = sand.u32 %s86, 1
        %s244 = smul.addr %s243, 64
        %s245 = scalar_lea.vmem [#allocation8], %s244
        %p246 = pneg %p99
        %p247 = pneg %p96
        %p248 = pneg %p127
        %p249 = pneg %p124
        %s250 = sand.u32 %s114, 1
        %s251 = scalar_lea.sflag [#allocation4], %s250
        %s252 = sand.u32 %s114, 1
        %s253 = smul.addr %s252, 64
        %s254 = scalar_lea.vmem [#allocation9], %s253
        %s255 = smul.u32 2, %s27
        %v256 = vlaneseq
        %v257 = vshrl.u32 %v256, 7
        %v258 = vadd.s32 %v257, 8
        %v259 = vlaneseq
        %v260 = vand.u32 %v259, 127
        %v261 = vmul.u32 %v260, 2
        %vm262 = vcmp.eq.s32.totalorder %v257, %v261
        %vm263 = vcmp.eq.s32.totalorder %v258, %v261
        %v264 = vsel %vm262, 1, 0
        %v265 = vsel %vm263, 1, 0
        %v266 = vcvt.s32.f32 %v264
        %v267 = vcvt.s32.f32 %v265
        %v268 = vadd.s32 %v261, 1
        %vm269 = vcmp.eq.s32.totalorder %v257, %v268
        %vm270 = vcmp.eq.s32.totalorder %v258, %v268
        %v271 = vsel %vm269, 1, 0
        %v272 = vsel %vm270, 1, 0
        %v273 = vcvt.s32.f32 %v271
        %v274 = vcvt.s32.f32 %v272
        %s275 = sld [smem:[#allocation6]]
        %v276 = vstv %s275
        %v277 = vadd.f32 %v276, 0.0
        %v278 = vld [vmem:[%s231] sm:$0xff]
        %s279 = sld [smem:[#allocation2]]
        %v280 = vstv %s279
        %v281 = vmul.f32 %v280, %v278
        %v282 = vadd.f32 %v277, %v281
        %s283 = sld [smem:[#allocation2 + $0x1]]
        %v284 = vstv %s283
        %v285 = vmul.f32 %v284, %v278
        %287 = vrot.lane.b32.xlu0 %v285, 127
        %v288 = vpop.permute.xlu0 %287
        %v290 = vadd.f32 %v282, %v288
        %s291 = sld [smem:[#allocation2 + $0x2]]
        %v292 = vstv %s291
        %v293 = vmul.f32 %v292, %v278
        %295 = vrot.lane.b32.xlu0 %v293, 126
        %v296 = vpop.permute.xlu0 %295
        %v298 = vadd.f32 %v290, %v296
        %v299 = vld [vmem:[%s231 + $0x1] sm:$0xff]
        %s300 = sld [smem:[#allocation2 + $0x3]]
        %v301 = vstv %s300
        %v302 = vmul.f32 %v301, %v299
        %v303 = vadd.f32 %v298, %v302
        %s304 = sld [smem:[#allocation2 + $0x60]]
        %v305 = vstv %s304
        %v306 = vmul.f32 %v305, %v299
        %v307 = vadd.f32 %v277, %v306
        %s308 = sld [smem:[#allocation2 + $0x4]]
        %v309 = vstv %s308
        %v310 = vmul.f32 %v309, %v299
        %312 = vrot.lane.b32.xlu0 %v310, 127
        %v313 = vpop.permute.xlu0 %312
        %v315 = vadd.f32 %v303, %v313
        %s316 = sld [smem:[#allocation2 + $0x61]]
        %v317 = vstv %s316
        %v318 = vmul.f32 %v317, %v299
        %320 = vrot.lane.b32.xlu0 %v318, 127
        %v321 = vpop.permute.xlu0 %320
        %v323 = vadd.f32 %v307, %v321
        %s324 = sld [smem:[#allocation2 + $0x5]]
        %v325 = vstv %s324
        %v326 = vmul.f32 %v325, %v299
        %328 = vrot.lane.b32.xlu0 %v326, 126
        %v329 = vpop.permute.xlu0 %328
        %v331 = vadd.f32 %v315, %v329
        %s332 = sld [smem:[#allocation2 + $0x62]]
        %v333 = vstv %s332
        %v334 = vmul.f32 %v333, %v299
        %336 = vrot.lane.b32.xlu0 %v334, 126
        %v337 = vpop.permute.xlu0 %336
        %v339 = vadd.f32 %v323, %v337
        %v340 = vld [vmem:[%s231 + $0x2] sm:$0xff]
        %s341 = sld [smem:[#allocation2 + $0x63]]
        %v342 = vstv %s341
        %v343 = vmul.f32 %v342, %v340
        %v344 = vadd.f32 %v339, %v343
        %s345 = sld [smem:[#allocation2 + $0x64]]
        %v346 = vstv %s345
        %v347 = vmul.f32 %v346, %v340
        %349 = vrot.lane.b32.xlu0 %v347, 127
        %v350 = vpop.permute.xlu0 %349
        %v352 = vadd.f32 %v344, %v350
        %s353 = sld [smem:[#allocation2 + $0x65]]
        %v354 = vstv %s353
        %v355 = vmul.f32 %v354, %v340
        %357 = vrot.lane.b32.xlu0 %v355, 126
        %v358 = vpop.permute.xlu0 %357
        %v360 = vadd.f32 %v352, %v358
        %s361 = scalar_lea.vmem %s231, 16 [#allocation8]
        %v362 = vld [vmem:[%s361] sm:$0xff]
        %s363 = sld [smem:[#allocation2 + $0x6]]
        %v364 = vstv %s363
        %v365 = vmul.f32 %v364, %v362
        %v366 = vadd.f32 %v331, %v365
        %s367 = sld [smem:[#allocation2 + $0x7]]
        %v368 = vstv %s367
        %v369 = vmul.f32 %v368, %v362
        %371 = vrot.lane.b32.xlu0 %v369, 127
        %v372 = vpop.permute.xlu0 %371
        %v374 = vadd.f32 %v366, %v372
        %s375 = sld [smem:[#allocation2 + $0x8]]
        %v376 = vstv %s375
        %v377 = vmul.f32 %v376, %v362
        %379 = vrot.lane.b32.xlu0 %v377, 126
        %v380 = vpop.permute.xlu0 %379
        %v382 = vadd.f32 %v374, %v380
        %v383 = vld [vmem:[%s361 + $0x1] sm:$0xff]
        %s384 = sld [smem:[#allocation2 + $0x9]]
        %v385 = vstv %s384
        %v386 = vmul.f32 %v385, %v383
        %v387 = vadd.f32 %v382, %v386
        %s388 = sld [smem:[#allocation2 + $0x66]]
        %v389 = vstv %s388
        %v390 = vmul.f32 %v389, %v383
        %v391 = vadd.f32 %v360, %v390
        %s392 = sld [smem:[#allocation2 + $0xa]]
        %v393 = vstv %s392
        %v394 = vmul.f32 %v393, %v383
        %396 = vrot.lane.b32.xlu0 %v394, 127
        %v397 = vpop.permute.xlu0 %396
        %v399 = vadd.f32 %v387, %v397
        %s400 = sld [smem:[#allocation2 + $0x67]]
        %v401 = vstv %s400
        %v402 = vmul.f32 %v401, %v383
        %404 = vrot.lane.b32.xlu0 %v402, 127
        %v405 = vpop.permute.xlu0 %404
        %v407 = vadd.f32 %v391, %v405
        %s408 = sld [smem:[#allocation2 + $0xb]]
        %v409 = vstv %s408
        %v410 = vmul.f32 %v409, %v383
        %412 = vrot.lane.b32.xlu0 %v410, 126
        %v413 = vpop.permute.xlu0 %412
        %v415 = vadd.f32 %v399, %v413
        %s416 = sld [smem:[#allocation2 + $0x68]]
        %v417 = vstv %s416
        %v418 = vmul.f32 %v417, %v383
        %420 = vrot.lane.b32.xlu0 %v418, 126
        %v421 = vpop.permute.xlu0 %420
        %v423 = vadd.f32 %v407, %v421
        %v424 = vld [vmem:[%s361 + $0x2] sm:$0xff]
        %s425 = sld [smem:[#allocation2 + $0x69]]
        %v426 = vstv %s425
        %v427 = vmul.f32 %v426, %v424
        %v428 = vadd.f32 %v423, %v427
        %s429 = sld [smem:[#allocation2 + $0x6a]]
        %v430 = vstv %s429
        %v431 = vmul.f32 %v430, %v424
        %433 = vrot.lane.b32.xlu0 %v431, 127
        %v434 = vpop.permute.xlu0 %433
        %v436 = vadd.f32 %v428, %v434
        %s437 = sld [smem:[#allocation2 + $0x6b]]
        %v438 = vstv %s437
        %v439 = vmul.f32 %v438, %v424
        %441 = vrot.lane.b32.xlu0 %v439, 126
        %v442 = vpop.permute.xlu0 %441
        %v444 = vadd.f32 %v436, %v442
        %s445 = scalar_lea.vmem %s231, 32 [#allocation8]
        %v446 = vld [vmem:[%s445] sm:$0xff]
        %s447 = sld [smem:[#allocation2 + $0xc]]
        %v448 = vstv %s447
        %v449 = vmul.f32 %v448, %v446
        %v450 = vadd.f32 %v415, %v449
        %s451 = sld [smem:[#allocation2 + $0xd]]
        %v452 = vstv %s451
        %v453 = vmul.f32 %v452, %v446
        %455 = vrot.lane.b32.xlu0 %v453, 127
        %v456 = vpop.permute.xlu0 %455
        %v458 = vadd.f32 %v450, %v456
        %s459 = sld [smem:[#allocation2 + $0xe]]
        %v460 = vstv %s459
        %v461 = vmul.f32 %v460, %v446
        %463 = vrot.lane.b32.xlu0 %v461, 126
        %v464 = vpop.permute.xlu0 %463
        %v466 = vadd.f32 %v458, %v464
        %v467 = vld [vmem:[%s445 + $0x1] sm:$0xff]
        %s468 = sld [smem:[#allocation2 + $0xf]]
        %v469 = vstv %s468
        %v470 = vmul.f32 %v469, %v467
        %v471 = vadd.f32 %v466, %v470
        %s472 = sld [smem:[#allocation2 + $0x6c]]
        %v473 = vstv %s472
        %v474 = vmul.f32 %v473, %v467
        %v475 = vadd.f32 %v444, %v474
        %s476 = sld [smem:[#allocation2 + $0x10]]
        %v477 = vstv %s476
        %v478 = vmul.f32 %v477, %v467
        %480 = vrot.lane.b32.xlu0 %v478, 127
        %v481 = vpop.permute.xlu0 %480
        %v483 = vadd.f32 %v471, %v481
        %s484 = sld [smem:[#allocation2 + $0x6d]]
        %v485 = vstv %s484
        %v486 = vmul.f32 %v485, %v467
        %488 = vrot.lane.b32.xlu0 %v486, 127
        %v489 = vpop.permute.xlu0 %488
        %v491 = vadd.f32 %v475, %v489
        %s492 = sld [smem:[#allocation2 + $0x11]]
        %v493 = vstv %s492
        %v494 = vmul.f32 %v493, %v467
        %496 = vrot.lane.b32.xlu0 %v494, 126
        %v497 = vpop.permute.xlu0 %496
        %v499 = vadd.f32 %v483, %v497
        %s500 = sld [smem:[#allocation2 + $0x6e]]
        %v501 = vstv %s500
        %v502 = vmul.f32 %v501, %v467
        %504 = vrot.lane.b32.xlu0 %v502, 126
        %v505 = vpop.permute.xlu0 %504
        %v507 = vadd.f32 %v491, %v505
        %v508 = vld [vmem:[%s445 + $0x2] sm:$0xff]
        %s509 = sld [smem:[#allocation2 + $0x6f]]
        %v510 = vstv %s509
        %v511 = vmul.f32 %v510, %v508
        %v512 = vadd.f32 %v507, %v511
        %s513 = sld [smem:[#allocation2 + $0x70]]
        %v514 = vstv %s513
        %v515 = vmul.f32 %v514, %v508
        %517 = vrot.lane.b32.xlu0 %v515, 127
        %v518 = vpop.permute.xlu0 %517
        %v520 = vadd.f32 %v512, %v518
        %s521 = sld [smem:[#allocation2 + $0x71]]
        %v522 = vstv %s521
        %v523 = vmul.f32 %v522, %v508
        %525 = vrot.lane.b32.xlu0 %v523, 126
        %v526 = vpop.permute.xlu0 %525
        %v528 = vadd.f32 %v520, %v526
        %s529 = scalar_lea.vmem %s231, 48 [#allocation8]
        %v530 = vld [vmem:[%s529] sm:$0xff]
        %s531 = sld [smem:[#allocation2 + $0x12]]
        %v532 = vstv %s531
        %v533 = vmul.f32 %v532, %v530
        %v534 = vadd.f32 %v499, %v533
        %s535 = sld [smem:[#allocation2 + $0x13]]
        %v536 = vstv %s535
        %v537 = vmul.f32 %v536, %v530
        %539 = vrot.lane.b32.xlu0 %v537, 127
        %v540 = vpop.permute.xlu0 %539
        %v542 = vadd.f32 %v534, %v540
        %s543 = sld [smem:[#allocation2 + $0x14]]
        %v544 = vstv %s543
        %v545 = vmul.f32 %v544, %v530
        %547 = vrot.lane.b32.xlu0 %v545, 126
        %v548 = vpop.permute.xlu0 %547
        %v550 = vadd.f32 %v542, %v548
        %v551 = vld [vmem:[%s529 + $0x1] sm:$0xff]
        %s552 = sld [smem:[#allocation2 + $0x15]]
        %v553 = vstv %s552
        %v554 = vmul.f32 %v553, %v551
        %v555 = vadd.f32 %v550, %v554
        %s556 = sld [smem:[#allocation2 + $0x72]]
        %v557 = vstv %s556
        %v558 = vmul.f32 %v557, %v551
        %v559 = vadd.f32 %v528, %v558
        %s560 = sld [smem:[#allocation2 + $0x16]]
        %v561 = vstv %s560
        %v562 = vmul.f32 %v561, %v551
        %564 = vrot.lane.b32.xlu0 %v562, 127
        %v565 = vpop.permute.xlu0 %564
        %v567 = vadd.f32 %v555, %v565
        %s568 = sld [smem:[#allocation2 + $0x73]]
        %v569 = vstv %s568
        %v570 = vmul.f32 %v569, %v551
        %572 = vrot.lane.b32.xlu0 %v570, 127
        %v573 = vpop.permute.xlu0 %572
        %v575 = vadd.f32 %v559, %v573
        %s576 = sld [smem:[#allocation2 + $0x17]]
        %v577 = vstv %s576
        %v578 = vmul.f32 %v577, %v551
        %580 = vrot.lane.b32.xlu0 %v578, 126
        %v581 = vpop.permute.xlu0 %580
        %v583 = vadd.f32 %v567, %v581
        %s584 = sld [smem:[#allocation2 + $0x74]]
        %v585 = vstv %s584
        %v586 = vmul.f32 %v585, %v551
        %588 = vrot.lane.b32.xlu0 %v586, 126
        %v589 = vpop.permute.xlu0 %588
        %v591 = vadd.f32 %v575, %v589
        %v592 = vld [vmem:[%s529 + $0x2] sm:$0xff]
        %s593 = sld [smem:[#allocation2 + $0x75]]
        %v594 = vstv %s593
        %v595 = vmul.f32 %v594, %v592
        %v596 = vadd.f32 %v591, %v595
        %s597 = sld [smem:[#allocation2 + $0x76]]
        %v598 = vstv %s597
        %v599 = vmul.f32 %v598, %v592
        %601 = vrot.lane.b32.xlu0 %v599, 127
        %v602 = vpop.permute.xlu0 %601
        %v604 = vadd.f32 %v596, %v602
        %s605 = sld [smem:[#allocation2 + $0x77]]
        %v606 = vstv %s605
        %v607 = vmul.f32 %v606, %v592
        %609 = vrot.lane.b32.xlu0 %v607, 126
        %v610 = vpop.permute.xlu0 %609
        %v612 = vadd.f32 %v604, %v610
        %vm613 = vcmask 64512
        %v615 = vsel %vm613, %v273, 0
        %v618 = vsel %vm613, %v274, 0
        %620 = vmatprep.subr.mxu0 0.0
        %621 = vmatpush1.msra.mxu0 %v612
        %622 = vmatprep.subr.mxu0 0.0
        %623 = vmatpush1.msra.mxu0 0.0
        %624 = vmatprep.subr.mxu0 0.0
        %625 = vmatpush1.msra.mxu0 0.0
        %626 = vmatprep.subr.mxu0 0.0
        %627 = vmatpush1.msra.mxu0 0.0
        %628 = vmatprep.subr.mxu0 0.0
        %629 = vmatpush1.msra.mxu0 0.0
        %630 = vmatprep.subr.mxu0 0.0
        %631 = vmatpush1.msra.mxu0 0.0
        %632 = vmatprep.subr.mxu0 0.0
        %633 = vmatpush1.msra.mxu0 0.0
        %634 = vmatprep.subr.mxu0 0.0
        %635 = vmatpush1.msra.mxu0 0.0
        %636 = vmatprep.subr.mxu0 0.0
        %637 = vmatpush1.msra.mxu0 0.0
        %638 = vmatprep.subr.mxu0 0.0
        %639 = vmatpush1.msra.mxu0 0.0
        %640 = vmatprep.subr.mxu0 0.0
        %641 = vmatpush1.msra.mxu0 0.0
        %642 = vmatprep.subr.mxu0 0.0
        %643 = vmatpush1.msra.mxu0 0.0
        %644 = vmatprep.subr.mxu0 0.0
        %645 = vmatpush1.msra.mxu0 0.0
        %646 = vmatprep.subr.mxu0 0.0
        %647 = vmatpush1.msra.mxu0 0.0
        %648 = vmatprep.subr.mxu0 0.0
        %649 = vmatpush1.msra.mxu0 0.0
        %650 = vmatprep.subr.mxu0 0.0
        %651 = vmatpush1.msra.mxu0 0.0
        %652 = vmatprep.subr.mxu0 0.0
        %653 = vmatpush1.msra.mxu0 0.0
        %654 = vmatprep.subr.mxu0 0.0
        %655 = vmatpush1.msra.mxu0 0.0
        %656 = vmatprep.subr.mxu0 0.0
        %657 = vmatpush1.msra.mxu0 0.0
        %658 = vmatprep.subr.mxu0 0.0
        %659 = vmatpush1.msra.mxu0 0.0
        %660 = vmatprep.subr.mxu0 0.0
        %661 = vmatpush1.msra.mxu0 0.0
        %662 = vmatprep.subr.mxu0 0.0
        %663 = vmatpush1.msra.mxu0 0.0
        %664 = vmatprep.subr.mxu0 0.0
        %665 = vmatpush1.msra.mxu0 0.0
        %666 = vmatprep.subr.mxu0 0.0
        %667 = vmatpush1.msra.mxu0 0.0
        %668 = vmatprep.subr.mxu0 0.0
        %669 = vmatpush1.msra.mxu0 0.0
        %670 = vmatprep.subr.mxu0 0.0
        %671 = vmatpush1.msra.mxu0 0.0
        %672 = vmatprep.subr.mxu0 0.0
        %673 = vmatpush1.msra.mxu0 0.0
        %674 = vmatprep.subr.mxu0 0.0
        %675 = vmatpush1.msra.mxu0 0.0
        %676 = vmatprep.subr.mxu0 0.0
        %677 = vmatpush1.msra.mxu0 0.0
        %678 = vmatprep.subr.mxu0 0.0
        %679 = vmatpush1.msra.mxu0 0.0
        %680 = vmatprep.subr.mxu0 0.0
        %681 = vmatpush1.msra.mxu0 0.0
        %682 = vmatprep.subr.mxu0 0.0
        %683 = vmatpush1.msra.mxu0 0.0
        %684 = vmatprep.mubr.f32.mxu0 0.0
        %685 = vmatmul.mubr.f32.gmra.mrb[0].mxu0 %v615
        %v686 = vpop.f32.mrb[0].mxu0
        %v687 = vadd.f32 0.0, %v686
        %v688 = vpop.f32.mrb[0].mxu0
        %689 = vmatprep.mubr.f32.mxu0 0.0
        %690 = vmatmul.mubr.f32.gmra.mrb[0].mxu0 %v618
        %v691 = vpop.f32.mrb[0].mxu0
        %v692 = vadd.f32 0.0, %v691
        %v693 = vpop.f32.mrb[0].mxu0
        %694 = vdwg.mxu0
        %v696 = vsel %vm613, %v266, 0
        %v699 = vsel %vm613, %v267, 0
        %701 = vmatprep.subr.mxu0 0.0
        %702 = vmatpush1.msra.mxu0 %v583
        %703 = vmatprep.subr.mxu0 0.0
        %704 = vmatpush1.msra.mxu0 0.0
        %705 = vmatprep.subr.mxu0 0.0
        %706 = vmatpush1.msra.mxu0 0.0
        %707 = vmatprep.subr.mxu0 0.0
        %708 = vmatpush1.msra.mxu0 0.0
        %709 = vmatprep.subr.mxu0 0.0
        %710 = vmatpush1.msra.mxu0 0.0
        %711 = vmatprep.subr.mxu0 0.0
        %712 = vmatpush1.msra.mxu0 0.0
        %713 = vmatprep.subr.mxu0 0.0
        %714 = vmatpush1.msra.mxu0 0.0
        %715 = vmatprep.subr.mxu0 0.0
        %716 = vmatpush1.msra.mxu0 0.0
        %717 = vmatprep.subr.mxu0 0.0
        %718 = vmatpush1.msra.mxu0 0.0
        %719 = vmatprep.subr.mxu0 0.0
        %720 = vmatpush1.msra.mxu0 0.0
        %721 = vmatprep.subr.mxu0 0.0
        %722 = vmatpush1.msra.mxu0 0.0
        %723 = vmatprep.subr.mxu0 0.0
        %724 = vmatpush1.msra.mxu0 0.0
        %725 = vmatprep.subr.mxu0 0.0
        %726 = vmatpush1.msra.mxu0 0.0
        %727 = vmatprep.subr.mxu0 0.0
        %728 = vmatpush1.msra.mxu0 0.0
        %729 = vmatprep.subr.mxu0 0.0
        %730 = vmatpush1.msra.mxu0 0.0
        %731 = vmatprep.subr.mxu0 0.0
        %732 = vmatpush1.msra.mxu0 0.0
        %733 = vmatprep.subr.mxu0 0.0
        %734 = vmatpush1.msra.mxu0 0.0
        %735 = vmatprep.subr.mxu0 0.0
        %736 = vmatpush1.msra.mxu0 0.0
        %737 = vmatprep.subr.mxu0 0.0
        %738 = vmatpush1.msra.mxu0 0.0
        %739 = vmatprep.subr.mxu0 0.0
        %740 = vmatpush1.msra.mxu0 0.0
        %741 = vmatprep.subr.mxu0 0.0
        %742 = vmatpush1.msra.mxu0 0.0
        %743 = vmatprep.subr.mxu0 0.0
        %744 = vmatpush1.msra.mxu0 0.0
        %745 = vmatprep.subr.mxu0 0.0
        %746 = vmatpush1.msra.mxu0 0.0
        %747 = vmatprep.subr.mxu0 0.0
        %748 = vmatpush1.msra.mxu0 0.0
        %749 = vmatprep.subr.mxu0 0.0
        %750 = vmatpush1.msra.mxu0 0.0
        %751 = vmatprep.subr.mxu0 0.0
        %752 = vmatpush1.msra.mxu0 0.0
        %753 = vmatprep.subr.mxu0 0.0
        %754 = vmatpush1.msra.mxu0 0.0
        %755 = vmatprep.subr.mxu0 0.0
        %756 = vmatpush1.msra.mxu0 0.0
        %757 = vmatprep.subr.mxu0 0.0
        %758 = vmatpush1.msra.mxu0 0.0
        %759 = vmatprep.subr.mxu0 0.0
        %760 = vmatpush1.msra.mxu0 0.0
        %761 = vmatprep.subr.mxu0 0.0
        %762 = vmatpush1.msra.mxu0 0.0
        %763 = vmatprep.subr.mxu0 0.0
        %764 = vmatpush1.msra.mxu0 0.0
        %765 = vmatprep.mubr.f32.mxu0 0.0
        %766 = vmatmul.mubr.f32.gmra.mrb[0].mxu0 %v696
        %v767 = vpop.f32.mrb[0].mxu0
        %v768 = vadd.f32 %v687, %v767
        %v769 = vpop.f32.mrb[0].mxu0
        %770 = vmatprep.mubr.f32.mxu0 0.0
        %771 = vmatmul.mubr.f32.gmra.mrb[0].mxu0 %v699
        %v772 = vpop.f32.mrb[0].mxu0
        %v773 = vadd.f32 %v692, %v772
        %v774 = vpop.f32.mrb[0].mxu0
        %775 = vdwg.mxu0
        %vm776 = vcmask 261120
        %777 = vst.msk [vmem:[%s254] sm:$0xff] %vm776, %v768
        %778 = vst.msk [vmem:[%s254 + $0x8] sm:$0xff] %vm776, %v773
        %s779 = sld [smem:[#allocation6 + $0x1]]
        %v780 = vstv %s779
        %v781 = vadd.f32 %v780, 0.0
        %v782 = vld [vmem:[%s231] sm:$0xff]
        %s783 = sld [smem:[#allocation2 + $0x18]]
        %v784 = vstv %s783
        %v785 = vmul.f32 %v784, %v782
        %v786 = vadd.f32 %v781, %v785
        %s787 = sld [smem:[#allocation2 + $0x19]]
        %v788 = vstv %s787
        %v789 = vmul.f32 %v788, %v782
        %791 = vrot.lane.b32.xlu0 %v789, 127
        %v792 = vpop.permute.xlu0 %791
        %v794 = vadd.f32 %v786, %v792
        %s795 = sld [smem:[#allocation2 + $0x1a]]
        %v796 = vstv %s795
        %v797 = vmul.f32 %v796, %v782
        %799 = vrot.lane.b32.xlu0 %v797, 126
        %v800 = vpop.permute.xlu0 %799
        %v802 = vadd.f32 %v794, %v800
        %v803 = vld [vmem:[%s231 + $0x1] sm:$0xff]
        %s804 = sld [smem:[#allocation2 + $0x1b]]
        %v805 = vstv %s804
        %v806 = vmul.f32 %v805, %v803
        %v807 = vadd.f32 %v802, %v806
        %s808 = sld [smem:[#allocation2 + $0x78]]
        %v809 = vstv %s808
        %v810 = vmul.f32 %v809, %v803
        %v811 = vadd.f32 %v781, %v810
        %s812 = sld [smem:[#allocation2 + $0x1c]]
        %v813 = vstv %s812
        %v814 = vmul.f32 %v813, %v803
        %816 = vrot.lane.b32.xlu0 %v814, 127
        %v817 = vpop.permute.xlu0 %816
        %v819 = vadd.f32 %v807, %v817
        %s820 = sld [smem:[#allocation2 + $0x79]]
        %v821 = vstv %s820
        %v822 = vmul.f32 %v821, %v803
        %824 = vrot.lane.b32.xlu0 %v822, 127
        %v825 = vpop.permute.xlu0 %824
        %v827 = vadd.f32 %v811, %v825
        %s828 = sld [smem:[#allocation2 + $0x1d]]
        %v829 = vstv %s828
        %v830 = vmul.f32 %v829, %v803
        %832 = vrot.lane.b32.xlu0 %v830, 126
        %v833 = vpop.permute.xlu0 %832
        %v835 = vadd.f32 %v819, %v833
        %s836 = sld [smem:[#allocation2 + $0x7a]]
        %v837 = vstv %s836
        %v838 = vmul.f32 %v837, %v803
        %840 = vrot.lane.b32.xlu0 %v838, 126
        %v841 = vpop.permute.xlu0 %840
        %v843 = vadd.f32 %v827, %v841
        %v844 = vld [vmem:[%s231 + $0x2] sm:$0xff]
        %s845 = sld [smem:[#allocation2 + $0x7b]]
        %v846 = vstv %s845
        %v847 = vmul.f32 %v846, %v844
        %v848 = vadd.f32 %v843, %v847
        %s849 = sld [smem:[#allocation2 + $0x7c]]
        %v850 = vstv %s849
        %v851 = vmul.f32 %v850, %v844
        %853 = vrot.lane.b32.xlu0 %v851, 127
        %v854 = vpop.permute.xlu0 %853
        %v856 = vadd.f32 %v848, %v854
        %s857 = sld [smem:[#allocation2 + $0x7d]]
        %v858 = vstv %s857
        %v859 = vmul.f32 %v858, %v844
        %861 = vrot.lane.b32.xlu0 %v859, 126
        %v862 = vpop.permute.xlu0 %861
        %v864 = vadd.f32 %v856, %v862
        %v865 = vld [vmem:[%s361] sm:$0xff]
        %s866 = sld [smem:[#allocation2 + $0x1e]]
        %v867 = vstv %s866
        %v868 = vmul.f32 %v867, %v865
        %v869 = vadd.f32 %v835, %v868
        %s870 = sld [smem:[#allocation2 + $0x1f]]
        %v871 = vstv %s870
        %v872 = vmul.f32 %v871, %v865
        %874 = vrot.lane.b32.xlu0 %v872, 127
        %v875 = vpop.permute.xlu0 %874
        %v877 = vadd.f32 %v869, %v875
        %s878 = sld [smem:[#allocation2 + $0x20]]
        %v879 = vstv %s878
        %v880 = vmul.f32 %v879, %v865
        %882 = vrot.lane.b32.xlu0 %v880, 126
        %v883 = vpop.permute.xlu0 %882
        %v885 = vadd.f32 %v877, %v883
        %v886 = vld [vmem:[%s361 + $0x1] sm:$0xff]
        %s887 = sld [smem:[#allocation2 + $0x21]]
        %v888 = vstv %s887
        %v889 = vmul.f32 %v888, %v886
        %v890 = vadd.f32 %v885, %v889
        %s891 = sld [smem:[#allocation2 + $0x7e]]
        %v892 = vstv %s891
        %v893 = vmul.f32 %v892, %v886
        %v894 = vadd.f32 %v864, %v893
        %s895 = sld [smem:[#allocation2 + $0x22]]
        %v896 = vstv %s895
        %v897 = vmul.f32 %v896, %v886
        %899 = vrot.lane.b32.xlu0 %v897, 127
        %v900 = vpop.permute.xlu0 %899
        %v902 = vadd.f32 %v890, %v900
        %s903 = sld [smem:[#allocation2 + $0x7f]]
        %v904 = vstv %s903
        %v905 = vmul.f32 %v904, %v886
        %907 = vrot.lane.b32.xlu0 %v905, 127
        %v908 = vpop.permute.xlu0 %907
        %v910 = vadd.f32 %v894, %v908
        %s911 = sld [smem:[#allocation2 + $0x23]]
        %v912 = vstv %s911
        %v913 = vmul.f32 %v912, %v886
        %915 = vrot.lane.b32.xlu0 %v913, 126
        %v916 = vpop.permute.xlu0 %915
        %v918 = vadd.f32 %v902, %v916
        %s919 = sld [smem:[#allocation2 + $0x80]]
        %v920 = vstv %s919
        %v921 = vmul.f32 %v920, %v886
        %923 = vrot.lane.b32.xlu0 %v921, 126
        %v924 = vpop.permute.xlu0 %923
        %v926 = vadd.f32 %v910, %v924
        %v927 = vld [vmem:[%s361 + $0x2] sm:$0xff]
        %s928 = sld [smem:[#allocation2 + $0x81]]
        %v929 = vstv %s928
        %v930 = vmul.f32 %v929, %v927
        %v931 = vadd.f32 %v926, %v930
        %s932 = sld [smem:[#allocation2 + $0x82]]
        %v933 = vstv %s932
        %v934 = vmul.f32 %v933, %v927
        %936 = vrot.lane.b32.xlu0 %v934, 127
        %v937 = vpop.permute.xlu0 %936
        %v939 = vadd.f32 %v931, %v937
        %s940 = sld [smem:[#allocation2 + $0x83]]
        %v941 = vstv %s940
        %v942 = vmul.f32 %v941, %v927
        %944 = vrot.lane.b32.xlu0 %v942, 126
        %v945 = vpop.permute.xlu0 %944
        %v947 = vadd.f32 %v939, %v945
        %v948 = vld [vmem:[%s445] sm:$0xff]
        %s949 = sld [smem:[#allocation2 + $0x24]]
        %v950 = vstv %s949
        %v951 = vmul.f32 %v950, %v948
        %v952 = vadd.f32 %v918, %v951
        %s953 = sld [smem:[#allocation2 + $0x25]]
        %v954 = vstv %s953
        %v955 = vmul.f32 %v954, %v948
        %957 = vrot.lane.b32.xlu0 %v955, 127
        %v958 = vpop.permute.xlu0 %957
        %v960 = vadd.f32 %v952, %v958
        %s961 = sld [smem:[#allocation2 + $0x26]]
        %v962 = vstv %s961
        %v963 = vmul.f32 %v962, %v948
        %965 = vrot.lane.b32.xlu0 %v963, 126
        %v966 = vpop.permute.xlu0 %965
        %v968 = vadd.f32 %v960, %v966
        %v969 = vld [vmem:[%s445 + $0x1] sm:$0xff]
        %s970 = sld [smem:[#allocation2 + $0x27]]
        %v971 = vstv %s970
        %v972 = vmul.f32 %v971, %v969
        %v973 = vadd.f32 %v968, %v972
        %s974 = sld [smem:[#allocation2 + $0x84]]
        %v975 = vstv %s974
        %v976 = vmul.f32 %v975, %v969
        %v977 = vadd.f32 %v947, %v976
        %s978 = sld [smem:[#allocation2 + $0x28]]
        %v979 = vstv %s978
        %v980 = vmul.f32 %v979, %v969
        %982 = vrot.lane.b32.xlu0 %v980, 127
        %v983 = vpop.permute.xlu0 %982
        %v985 = vadd.f32 %v973, %v983
        %s986 = sld [smem:[#allocation2 + $0x85]]
        %v987 = vstv %s986
        %v988 = vmul.f32 %v987, %v969
        %990 = vrot.lane.b32.xlu0 %v988, 127
        %v991 = vpop.permute.xlu0 %990
        %v993 = vadd.f32 %v977, %v991
        %s994 = sld [smem:[#allocation2 + $0x29]]
        %v995 = vstv %s994
        %v996 = vmul.f32 %v995, %v969
        %998 = vrot.lane.b32.xlu0 %v996, 126
        %v999 = vpop.permute.xlu0 %998
        %v1001 = vadd.f32 %v985, %v999
        %s1002 = sld [smem:[#allocation2 + $0x86]]
        %v1003 = vstv %s1002
        %v1004 = vmul.f32 %v1003, %v969
        %1006 = vrot.lane.b32.xlu0 %v1004, 126
        %v1007 = vpop.permute.xlu0 %1006
        %v1009 = vadd.f32 %v993, %v1007
        %v1010 = vld [vmem:[%s445 + $0x2] sm:$0xff]
        %s1011 = sld [smem:[#allocation2 + $0x87]]
        %v1012 = vstv %s1011
        %v1013 = vmul.f32 %v1012, %v1010
        %v1014 = vadd.f32 %v1009, %v1013
        %s1015 = sld [smem:[#allocation2 + $0x88]]
        %v1016 = vstv %s1015
        %v1017 = vmul.f32 %v1016, %v1010
        %1019 = vrot.lane.b32.xlu0 %v1017, 127
        %v1020 = vpop.permute.xlu0 %1019
        %v1022 = vadd.f32 %v1014, %v1020
        %s1023 = sld [smem:[#allocation2 + $0x89]]
        %v1024 = vstv %s1023
        %v1025 = vmul.f32 %v1024, %v1010
        %1027 = vrot.lane.b32.xlu0 %v1025, 126
        %v1028 = vpop.permute.xlu0 %1027
        %v1030 = vadd.f32 %v1022, %v1028
        %v1031 = vld [vmem:[%s529] sm:$0xff]
        %s1032 = sld [smem:[#allocation2 + $0x2a]]
        %v1033 = vstv %s1032
        %v1034 = vmul.f32 %v1033, %v1031
        %v1035 = vadd.f32 %v1001, %v1034
        %s1036 = sld [smem:[#allocation2 + $0x2b]]
        %v1037 = vstv %s1036
        %v1038 = vmul.f32 %v1037, %v1031
        %1040 = vrot.lane.b32.xlu0 %v1038, 127
        %v1041 = vpop.permute.xlu0 %1040
        %v1043 = vadd.f32 %v1035, %v1041
        %s1044 = sld [smem:[#allocation2 + $0x2c]]
        %v1045 = vstv %s1044
        %v1046 = vmul.f32 %v1045, %v1031
        %1048 = vrot.lane.b32.xlu0 %v1046, 126
        %v1049 = vpop.permute.xlu0 %1048
        %v1051 = vadd.f32 %v1043, %v1049
        %v1052 = vld [vmem:[%s529 + $0x1] sm:$0xff]
        %s1053 = sld [smem:[#allocation2 + $0x2d]]
        %v1054 = vstv %s1053
        %v1055 = vmul.f32 %v1054, %v1052
        %v1056 = vadd.f32 %v1051, %v1055
        %s1057 = sld [smem:[#allocation2 + $0x8a]]
        %v1058 = vstv %s1057
        %v1059 = vmul.f32 %v1058, %v1052
        %v1060 = vadd.f32 %v1030, %v1059
        %s1061 = sld [smem:[#allocation2 + $0x2e]]
        %v1062 = vstv %s1061
        %v1063 = vmul.f32 %v1062, %v1052
        %1065 = vrot.lane.b32.xlu0 %v1063, 127
        %v1066 = vpop.permute.xlu0 %1065
        %v1068 = vadd.f32 %v1056, %v1066
        %s1069 = sld [smem:[#allocation2 + $0x8b]]
        %v1070 = vstv %s1069
        %v1071 = vmul.f32 %v1070, %v1052
        %1073 = vrot.lane.b32.xlu0 %v1071, 127
        %v1074 = vpop.permute.xlu0 %1073
        %v1076 = vadd.f32 %v1060, %v1074
        %s1077 = sld [smem:[#allocation2 + $0x2f]]
        %v1078 = vstv %s1077
        %v1079 = vmul.f32 %v1078, %v1052
        %1081 = vrot.lane.b32.xlu0 %v1079, 126
        %v1082 = vpop.permute.xlu0 %1081
        %v1084 = vadd.f32 %v1068, %v1082
        %s1085 = sld [smem:[#allocation2 + $0x8c]]
        %v1086 = vstv %s1085
        %v1087 = vmul.f32 %v1086, %v1052
        %1089 = vrot.lane.b32.xlu0 %v1087, 126
        %v1090 = vpop.permute.xlu0 %1089
        %v1092 = vadd.f32 %v1076, %v1090
        %v1093 = vld [vmem:[%s529 + $0x2] sm:$0xff]
        %s1094 = sld [smem:[#allocation2 + $0x8d]]
        %v1095 = vstv %s1094
        %v1096 = vmul.f32 %v1095, %v1093
        %v1097 = vadd.f32 %v1092, %v1096
        %s1098 = sld [smem:[#allocation2 + $0x8e]]
        %v1099 = vstv %s1098
        %v1100 = vmul.f32 %v1099, %v1093
        %1102 = vrot.lane.b32.xlu0 %v1100, 127
        %v1103 = vpop.permute.xlu0 %1102
        %v1105 = vadd.f32 %v1097, %v1103
        %s1106 = sld [smem:[#allocation2 + $0x8f]]
        %v1107 = vstv %s1106
        %v1108 = vmul.f32 %v1107, %v1093
        %1110 = vrot.lane.b32.xlu0 %v1108, 126
        %v1111 = vpop.permute.xlu0 %1110
        %v1113 = vadd.f32 %v1105, %v1111
        %1114 = vmatprep.subr.mxu0 0.0
        %1115 = vmatpush1.msra.mxu0 %v1113
        %1116 = vmatprep.subr.mxu0 0.0
        %1117 = vmatpush1.msra.mxu0 0.0
        %1118 = vmatprep.subr.mxu0 0.0
        %1119 = vmatpush1.msra.mxu0 0.0
        %1120 = vmatprep.subr.mxu0 0.0
        %1121 = vmatpush1.msra.mxu0 0.0
        %1122 = vmatprep.subr.mxu0 0.0
        %1123 = vmatpush1.msra.mxu0 0.0
        %1124 = vmatprep.subr.mxu0 0.0
        %1125 = vmatpush1.msra.mxu0 0.0
        %1126 = vmatprep.subr.mxu0 0.0
        %1127 = vmatpush1.msra.mxu0 0.0
        %1128 = vmatprep.subr.mxu0 0.0
        %1129 = vmatpush1.msra.mxu0 0.0
        %1130 = vmatprep.subr.mxu0 0.0
        %1131 = vmatpush1.msra.mxu0 0.0
        %1132 = vmatprep.subr.mxu0 0.0
        %1133 = vmatpush1.msra.mxu0 0.0
        %1134 = vmatprep.subr.mxu0 0.0
        %1135 = vmatpush1.msra.mxu0 0.0
        %1136 = vmatprep.subr.mxu0 0.0
        %1137 = vmatpush1.msra.mxu0 0.0
        %1138 = vmatprep.subr.mxu0 0.0
        %1139 = vmatpush1.msra.mxu0 0.0
        %1140 = vmatprep.subr.mxu0 0.0
        %1141 = vmatpush1.msra.mxu0 0.0
        %1142 = vmatprep.subr.mxu0 0.0
        %1143 = vmatpush1.msra.mxu0 0.0
        %1144 = vmatprep.subr.mxu0 0.0
        %1145 = vmatpush1.msra.mxu0 0.0
        %1146 = vmatprep.subr.mxu0 0.0
        %1147 = vmatpush1.msra.mxu0 0.0
        %1148 = vmatprep.subr.mxu0 0.0
        %1149 = vmatpush1.msra.mxu0 0.0
        %1150 = vmatprep.subr.mxu0 0.0
        %1151 = vmatpush1.msra.mxu0 0.0
        %1152 = vmatprep.subr.mxu0 0.0
        %1153 = vmatpush1.msra.mxu0 0.0
        %1154 = vmatprep.subr.mxu0 0.0
        %1155 = vmatpush1.msra.mxu0 0.0
        %1156 = vmatprep.subr.mxu0 0.0
        %1157 = vmatpush1.msra.mxu0 0.0
        %1158 = vmatprep.subr.mxu0 0.0
        %1159 = vmatpush1.msra.mxu0 0.0
        %1160 = vmatprep.subr.mxu0 0.0
        %1161 = vmatpush1.msra.mxu0 0.0
        %1162 = vmatprep.subr.mxu0 0.0
        %1163 = vmatpush1.msra.mxu0 0.0
        %1164 = vmatprep.subr.mxu0 0.0
        %1165 = vmatpush1.msra.mxu0 0.0
        %1166 = vmatprep.subr.mxu0 0.0
        %1167 = vmatpush1.msra.mxu0 0.0
        %1168 = vmatprep.subr.mxu0 0.0
        %1169 = vmatpush1.msra.mxu0 0.0
        %1170 = vmatprep.subr.mxu0 0.0
        %1171 = vmatpush1.msra.mxu0 0.0
        %1172 = vmatprep.subr.mxu0 0.0
        %1173 = vmatpush1.msra.mxu0 0.0
        %1174 = vmatprep.subr.mxu0 0.0
        %1175 = vmatpush1.msra.mxu0 0.0
        %1176 = vmatprep.subr.mxu0 0.0
        %1177 = vmatpush1.msra.mxu0 0.0
        %1178 = vmatprep.mubr.f32.mxu0 0.0
        %1179 = vmatmul.mubr.f32.gmra.mrb[0].mxu0 %v615
        %v1180 = vpop.f32.mrb[0].mxu0
        %v1181 = vadd.f32 0.0, %v1180
        %v1182 = vpop.f32.mrb[0].mxu0
        %1183 = vmatprep.mubr.f32.mxu0 0.0
        %1184 = vmatmul.mubr.f32.gmra.mrb[0].mxu0 %v618
        %v1185 = vpop.f32.mrb[0].mxu0
        %v1186 = vadd.f32 0.0, %v1185
        %v1187 = vpop.f32.mrb[0].mxu0
        %1188 = vdwg.mxu0
        %1189 = vmatprep.subr.mxu0 0.0
        %1190 = vmatpush1.msra.mxu0 %v1084
        %1191 = vmatprep.subr.mxu0 0.0
        %1192 = vmatpush1.msra.mxu0 0.0
        %1193 = vmatprep.subr.mxu0 0.0
        %1194 = vmatpush1.msra.mxu0 0.0
        %1195 = vmatprep.subr.mxu0 0.0
        %1196 = vmatpush1.msra.mxu0 0.0
        %1197 = vmatprep.subr.mxu0 0.0
        %1198 = vmatpush1.msra.mxu0 0.0
        %1199 = vmatprep.subr.mxu0 0.0
        %1200 = vmatpush1.msra.mxu0 0.0
        %1201 = vmatprep.subr.mxu0 0.0
        %1202 = vmatpush1.msra.mxu0 0.0
        %1203 = vmatprep.subr.mxu0 0.0
        %1204 = vmatpush1.msra.mxu0 0.0
        %1205 = vmatprep.subr.mxu0 0.0
        %1206 = vmatpush1.msra.mxu0 0.0
        %1207 = vmatprep.subr.mxu0 0.0
        %1208 = vmatpush1.msra.mxu0 0.0
        %1209 = vmatprep.subr.mxu0 0.0
        %1210 = vmatpush1.msra.mxu0 0.0
        %1211 = vmatprep.subr.mxu0 0.0
        %1212 = vmatpush1.msra.mxu0 0.0
        %1213 = vmatprep.subr.mxu0 0.0
        %1214 = vmatpush1.msra.mxu0 0.0
        %1215 = vmatprep.subr.mxu0 0.0
        %1216 = vmatpush1.msra.mxu0 0.0
        %1217 = vmatprep.subr.mxu0 0.0
        %1218 = vmatpush1.msra.mxu0 0.0
        %1219 = vmatprep.subr.mxu0 0.0
        %1220 = vmatpush1.msra.mxu0 0.0
        %1221 = vmatprep.subr.mxu0 0.0
        %1222 = vmatpush1.msra.mxu0 0.0
        %1223 = vmatprep.subr.mxu0 0.0
        %1224 = vmatpush1.msra.mxu0 0.0
        %1225 = vmatprep.subr.mxu0 0.0
        %1226 = vmatpush1.msra.mxu0 0.0
        %1227 = vmatprep.subr.mxu0 0.0
        %1228 = vmatpush1.msra.mxu0 0.0
        %1229 = vmatprep.subr.mxu0 0.0
        %1230 = vmatpush1.msra.mxu0 0.0
        %1231 = vmatprep.subr.mxu0 0.0
        %1232 = vmatpush1.msra.mxu0 0.0
        %1233 = vmatprep.subr.mxu0 0.0
        %1234 = vmatpush1.msra.mxu0 0.0
        %1235 = vmatprep.subr.mxu0 0.0
        %1236 = vmatpush1.msra.mxu0 0.0
        %1237 = vmatprep.subr.mxu0 0.0
        %1238 = vmatpush1.msra.mxu0 0.0
        %1239 = vmatprep.subr.mxu0 0.0
        %1240 = vmatpush1.msra.mxu0 0.0
        %1241 = vmatprep.subr.mxu0 0.0
        %1242 = vmatpush1.msra.mxu0 0.0
        %1243 = vmatprep.subr.mxu0 0.0
        %1244 = vmatpush1.msra.mxu0 0.0
        %1245 = vmatprep.subr.mxu0 0.0
        %1246 = vmatpush1.msra.mxu0 0.0
        %1247 = vmatprep.subr.mxu0 0.0
        %1248 = vmatpush1.msra.mxu0 0.0
        %1249 = vmatprep.subr.mxu0 0.0
        %1250 = vmatpush1.msra.mxu0 0.0
        %1251 = vmatprep.subr.mxu0 0.0
        %1252 = vmatpush1.msra.mxu0 0.0
        %1253 = vmatprep.mubr.f32.mxu0 0.0
        %1254 = vmatmul.mubr.f32.gmra.mrb[0].mxu0 %v696
        %v1255 = vpop.f32.mrb[0].mxu0
        %v1256 = vadd.f32 %v1181, %v1255
        %v1257 = vpop.f32.mrb[0].mxu0
        %1258 = vmatprep.mubr.f32.mxu0 0.0
        %1259 = vmatmul.mubr.f32.gmra.mrb[0].mxu0 %v699
        %v1260 = vpop.f32.mrb[0].mxu0
        %v1261 = vadd.f32 %v1186, %v1260
        %v1262 = vpop.f32.mrb[0].mxu0
        %1263 = vdwg.mxu0
        %s1264 = scalar_lea.vmem %s254, 16 [#allocation9]
        %1265 = vst.msk [vmem:[%s1264] sm:$0xff] %vm776, %v1256
        %1266 = vst.msk [vmem:[%s1264 + $0x8] sm:$0xff] %vm776, %v1261
        %s1267 = sld [smem:[#allocation6 + $0x2]]
        %v1268 = vstv %s1267
        %v1269 = vadd.f32 %v1268, 0.0
        %v1270 = vld [vmem:[%s231] sm:$0xff]
        %s1271 = sld [smem:[#allocation2 + $0x30]]
        %v1272 = vstv %s1271
        %v1273 = vmul.f32 %v1272, %v1270
        %v1274 = vadd.f32 %v1269, %v1273
        %s1275 = sld [smem:[#allocation2 + $0x31]]
        %v1276 = vstv %s1275
        %v1277 = vmul.f32 %v1276, %v1270
        %1279 = vrot.lane.b32.xlu0 %v1277, 127
        %v1280 = vpop.permute.xlu0 %1279
        %v1282 = vadd.f32 %v1274, %v1280
        %s1283 = sld [smem:[#allocation2 + $0x32]]
        %v1284 = vstv %s1283
        %v1285 = vmul.f32 %v1284, %v1270
        %1287 = vrot.lane.b32.xlu0 %v1285, 126
        %v1288 = vpop.permute.xlu0 %1287
        %v1290 = vadd.f32 %v1282, %v1288
        %v1291 = vld [vmem:[%s231 + $0x1] sm:$0xff]
        %s1292 = sld [smem:[#allocation2 + $0x33]]
        %v1293 = vstv %s1292
        %v1294 = vmul.f32 %v1293, %v1291
        %v1295 = vadd.f32 %v1290, %v1294
        %s1296 = sld [smem:[#allocation2 + $0x90]]
        %v1297 = vstv %s1296
        %v1298 = vmul.f32 %v1297, %v1291
        %v1299 = vadd.f32 %v1269, %v1298
        %s1300 = sld [smem:[#allocation2 + $0x34]]
        %v1301 = vstv %s1300
        %v1302 = vmul.f32 %v1301, %v1291
        %1304 = vrot.lane.b32.xlu0 %v1302, 127
        %v1305 = vpop.permute.xlu0 %1304
        %v1307 = vadd.f32 %v1295, %v1305
        %s1308 = sld [smem:[#allocation2 + $0x91]]
        %v1309 = vstv %s1308
        %v1310 = vmul.f32 %v1309, %v1291
        %1312 = vrot.lane.b32.xlu0 %v1310, 127
        %v1313 = vpop.permute.xlu0 %1312
        %v1315 = vadd.f32 %v1299, %v1313
        %s1316 = sld [smem:[#allocation2 + $0x35]]
        %v1317 = vstv %s1316
        %v1318 = vmul.f32 %v1317, %v1291
        %1320 = vrot.lane.b32.xlu0 %v1318, 126
        %v1321 = vpop.permute.xlu0 %1320
        %v1323 = vadd.f32 %v1307, %v1321
        %s1324 = sld [smem:[#allocation2 + $0x92]]
        %v1325 = vstv %s1324
        %v1326 = vmul.f32 %v1325, %v1291
        %1328 = vrot.lane.b32.xlu0 %v1326, 126
        %v1329 = vpop.permute.xlu0 %1328
        %v1331 = vadd.f32 %v1315, %v1329
        %v1332 = vld [vmem:[%s231 + $0x2] sm:$0xff]
        %s1333 = sld [smem:[#allocation2 + $0x93]]
        %v1334 = vstv %s1333
        %v1335 = vmul.f32 %v1334, %v1332
        %v1336 = vadd.f32 %v1331, %v1335
        %s1337 = sld [smem:[#allocation2 + $0x94]]
        %v1338 = vstv %s1337
        %v1339 = vmul.f32 %v1338, %v1332
        %1341 = vrot.lane.b32.xlu0 %v1339, 127
        %v1342 = vpop.permute.xlu0 %1341
        %v1344 = vadd.f32 %v1336, %v1342
        %s1345 = sld [smem:[#allocation2 + $0x95]]
        %v1346 = vstv %s1345
        %v1347 = vmul.f32 %v1346, %v1332
        %1349 = vrot.lane.b32.xlu0 %v1347, 126
        %v1350 = vpop.permute.xlu0 %1349
        %v1352 = vadd.f32 %v1344, %v1350
        %v1353 = vld [vmem:[%s361] sm:$0xff]
        %s1354 = sld [smem:[#allocation2 + $0x36]]
        %v1355 = vstv %s1354
        %v1356 = vmul.f32 %v1355, %v1353
        %v1357 = vadd.f32 %v1323, %v1356
        %s1358 = sld [smem:[#allocation2 + $0x37]]
        %v1359 = vstv %s1358
        %v1360 = vmul.f32 %v1359, %v1353
        %1362 = vrot.lane.b32.xlu0 %v1360, 127
        %v1363 = vpop.permute.xlu0 %1362
        %v1365 = vadd.f32 %v1357, %v1363
        %s1366 = sld [smem:[#allocation2 + $0x38]]
        %v1367 = vstv %s1366
        %v1368 = vmul.f32 %v1367, %v1353
        %1370 = vrot.lane.b32.xlu0 %v1368, 126
        %v1371 = vpop.permute.xlu0 %1370
        %v1373 = vadd.f32 %v1365, %v1371
        %v1374 = vld [vmem:[%s361 + $0x1] sm:$0xff]
        %s1375 = sld [smem:[#allocation2 + $0x39]]
        %v1376 = vstv %s1375
        %v1377 = vmul.f32 %v1376, %v1374
        %v1378 = vadd.f32 %v1373, %v1377
        %s1379 = sld [smem:[#allocation2 + $0x96]]
        %v1380 = vstv %s1379
        %v1381 = vmul.f32 %v1380, %v1374
        %v1382 = vadd.f32 %v1352, %v1381
        %s1383 = sld [smem:[#allocation2 + $0x3a]]
        %v1384 = vstv %s1383
        %v1385 = vmul.f32 %v1384, %v1374
        %1387 = vrot.lane.b32.xlu0 %v1385, 127
        %v1388 = vpop.permute.xlu0 %1387
        %v1390 = vadd.f32 %v1378, %v1388
        %s1391 = sld [smem:[#allocation2 + $0x97]]
        %v1392 = vstv %s1391
        %v1393 = vmul.f32 %v1392, %v1374
        %1395 = vrot.lane.b32.xlu0 %v1393, 127
        %v1396 = vpop.permute.xlu0 %1395
        %v1398 = vadd.f32 %v1382, %v1396
        %s1399 = sld [smem:[#allocation2 + $0x3b]]
        %v1400 = vstv %s1399
        %v1401 = vmul.f32 %v1400, %v1374
        %1403 = vrot.lane.b32.xlu0 %v1401, 126
        %v1404 = vpop.permute.xlu0 %1403
        %v1406 = vadd.f32 %v1390, %v1404
        %s1407 = sld [smem:[#allocation2 + $0x98]]
        %v1408 = vstv %s1407
        %v1409 = vmul.f32 %v1408, %v1374
        %1411 = vrot.lane.b32.xlu0 %v1409, 126
        %v1412 = vpop.permute.xlu0 %1411
        %v1414 = vadd.f32 %v1398, %v1412
        %v1415 = vld [vmem:[%s361 + $0x2] sm:$0xff]
        %s1416 = sld [smem:[#allocation2 + $0x99]]
        %v1417 = vstv %s1416
        %v1418 = vmul.f32 %v1417, %v1415
        %v1419 = vadd.f32 %v1414, %v1418
        %s1420 = sld [smem:[#allocation2 + $0x9a]]
        %v1421 = vstv %s1420
        %v1422 = vmul.f32 %v1421, %v1415
        %1424 = vrot.lane.b32.xlu0 %v1422, 127
        %v1425 = vpop.permute.xlu0 %1424
        %v1427 = vadd.f32 %v1419, %v1425
        %s1428 = sld [smem:[#allocation2 + $0x9b]]
        %v1429 = vstv %s1428
        %v1430 = vmul.f32 %v1429, %v1415
        %1432 = vrot.lane.b32.xlu0 %v1430, 126
        %v1433 = vpop.permute.xlu0 %1432
        %v1435 = vadd.f32 %v1427, %v1433
        %v1436 = vld [vmem:[%s445] sm:$0xff]
        %s1437 = sld [smem:[#allocation2 + $0x3c]]
        %v1438 = vstv %s1437
        %v1439 = vmul.f32 %v1438, %v1436
        %v1440 = vadd.f32 %v1406, %v1439
        %s1441 = sld [smem:[#allocation2 + $0x3d]]
        %v1442 = vstv %s1441
        %v1443 = vmul.f32 %v1442, %v1436
        %1445 = vrot.lane.b32.xlu0 %v1443, 127
        %v1446 = vpop.permute.xlu0 %1445
        %v1448 = vadd.f32 %v1440, %v1446
        %s1449 = sld [smem:[#allocation2 + $0x3e]]
        %v1450 = vstv %s1449
        %v1451 = vmul.f32 %v1450, %v1436
        %1453 = vrot.lane.b32.xlu0 %v1451, 126
        %v1454 = vpop.permute.xlu0 %1453
        %v1456 = vadd.f32 %v1448, %v1454
        %v1457 = vld [vmem:[%s445 + $0x1] sm:$0xff]
        %s1458 = sld [smem:[#allocation2 + $0x3f]]
        %v1459 = vstv %s1458
        %v1460 = vmul.f32 %v1459, %v1457
        %v1461 = vadd.f32 %v1456, %v1460
        %s1462 = sld [smem:[#allocation2 + $0x9c]]
        %v1463 = vstv %s1462
        %v1464 = vmul.f32 %v1463, %v1457
        %v1465 = vadd.f32 %v1435, %v1464
        %s1466 = sld [smem:[#allocation2 + $0x40]]
        %v1467 = vstv %s1466
        %v1468 = vmul.f32 %v1467, %v1457
        %1470 = vrot.lane.b32.xlu0 %v1468, 127
        %v1471 = vpop.permute.xlu0 %1470
        %v1473 = vadd.f32 %v1461, %v1471
        %s1474 = sld [smem:[#allocation2 + $0x9d]]
        %v1475 = vstv %s1474
        %v1476 = vmul.f32 %v1475, %v1457
        %1478 = vrot.lane.b32.xlu0 %v1476, 127
        %v1479 = vpop.permute.xlu0 %1478
        %v1481 = vadd.f32 %v1465, %v1479
        %s1482 = sld [smem:[#allocation2 + $0x41]]
        %v1483 = vstv %s1482
        %v1484 = vmul.f32 %v1483, %v1457
        %1486 = vrot.lane.b32.xlu0 %v1484, 126
        %v1487 = vpop.permute.xlu0 %1486
        %v1489 = vadd.f32 %v1473, %v1487
        %s1490 = sld [smem:[#allocation2 + $0x9e]]
        %v1491 = vstv %s1490
        %v1492 = vmul.f32 %v1491, %v1457
        %1494 = vrot.lane.b32.xlu0 %v1492, 126
        %v1495 = vpop.permute.xlu0 %1494
        %v1497 = vadd.f32 %v1481, %v1495
        %v1498 = vld [vmem:[%s445 + $0x2] sm:$0xff]
        %s1499 = sld [smem:[#allocation2 + $0x9f]]
        %v1500 = vstv %s1499
        %v1501 = vmul.f32 %v1500, %v1498
        %v1502 = vadd.f32 %v1497, %v1501
        %s1503 = sld [smem:[#allocation2 + $0xa0]]
        %v1504 = vstv %s1503
        %v1505 = vmul.f32 %v1504, %v1498
        %1507 = vrot.lane.b32.xlu0 %v1505, 127
        %v1508 = vpop.permute.xlu0 %1507
        %v1510 = vadd.f32 %v1502, %v1508
        %s1511 = sld [smem:[#allocation2 + $0xa1]]
        %v1512 = vstv %s1511
        %v1513 = vmul.f32 %v1512, %v1498
        %1515 = vrot.lane.b32.xlu0 %v1513, 126
        %v1516 = vpop.permute.xlu0 %1515
        %v1518 = vadd.f32 %v1510, %v1516
        %v1519 = vld [vmem:[%s529] sm:$0xff]
        %s1520 = sld [smem:[#allocation2 + $0x42]]
        %v1521 = vstv %s1520
        %v1522 = vmul.f32 %v1521, %v1519
        %v1523 = vadd.f32 %v1489, %v1522
        %s1524 = sld [smem:[#allocation2 + $0x43]]
        %v1525 = vstv %s1524
        %v1526 = vmul.f32 %v1525, %v1519
        %1528 = vrot.lane.b32.xlu0 %v1526, 127
        %v1529 = vpop.permute.xlu0 %1528
        %v1531 = vadd.f32 %v1523, %v1529
        %s1532 = sld [smem:[#allocation2 + $0x44]]
        %v1533 = vstv %s1532
        %v1534 = vmul.f32 %v1533, %v1519
        %1536 = vrot.lane.b32.xlu0 %v1534, 126
        %v1537 = vpop.permute.xlu0 %1536
        %v1539 = vadd.f32 %v1531, %v1537
        %v1540 = vld [vmem:[%s529 + $0x1] sm:$0xff]
        %s1541 = sld [smem:[#allocation2 + $0x45]]
        %v1542 = vstv %s1541
        %v1543 = vmul.f32 %v1542, %v1540
        %v1544 = vadd.f32 %v1539, %v1543
        %s1545 = sld [smem:[#allocation2 + $0xa2]]
        %v1546 = vstv %s1545
        %v1547 = vmul.f32 %v1546, %v1540
        %v1548 = vadd.f32 %v1518, %v1547
        %s1549 = sld [smem:[#allocation2 + $0x46]]
        %v1550 = vstv %s1549
        %v1551 = vmul.f32 %v1550, %v1540
        %1553 = vrot.lane.b32.xlu0 %v1551, 127
        %v1554 = vpop.permute.xlu0 %1553
        %v1556 = vadd.f32 %v1544, %v1554
        %s1557 = sld [smem:[#allocation2 + $0xa3]]
        %v1558 = vstv %s1557
        %v1559 = vmul.f32 %v1558, %v1540
        %1561 = vrot.lane.b32.xlu0 %v1559, 127
        %v1562 = vpop.permute.xlu0 %1561
        %v1564 = vadd.f32 %v1548, %v1562
        %s1565 = sld [smem:[#allocation2 + $0x47]]
        %v1566 = vstv %s1565
        %v1567 = vmul.f32 %v1566, %v1540
        %1569 = vrot.lane.b32.xlu0 %v1567, 126
        %v1570 = vpop.permute.xlu0 %1569
        %v1572 = vadd.f32 %v1556, %v1570
        %s1573 = sld [smem:[#allocation2 + $0xa4]]
        %v1574 = vstv %s1573
        %v1575 = vmul.f32 %v1574, %v1540
        %1577 = vrot.lane.b32.xlu0 %v1575, 126
        %v1578 = vpop.permute.xlu0 %1577
        %v1580 = vadd.f32 %v1564, %v1578
        %v1581 = vld [vmem:[%s529 + $0x2] sm:$0xff]
        %s1582 = sld [smem:[#allocation2 + $0xa5]]
        %v1583 = vstv %s1582
        %v1584 = vmul.f32 %v1583, %v1581
        %v1585 = vadd.f32 %v1580, %v1584
        %s1586 = sld [smem:[#allocation2 + $0xa6]]
        %v1587 = vstv %s1586
        %v1588 = vmul.f32 %v1587, %v1581
        %1590 = vrot.lane.b32.xlu0 %v1588, 127
        %v1591 = vpop.permute.xlu0 %1590
        %v1593 = vadd.f32 %v1585, %v1591
        %s1594 = sld [smem:[#allocation2 + $0xa7]]
        %v1595 = vstv %s1594
        %v1596 = vmul.f32 %v1595, %v1581
        %1598 = vrot.lane.b32.xlu0 %v1596, 126
        %v1599 = vpop.permute.xlu0 %1598
        %v1601 = vadd.f32 %v1593, %v1599
        %1602 = vmatprep.subr.mxu0 0.0
        %1603 = vmatpush1.msra.mxu0 %v1601
        %1604 = vmatprep.subr.mxu0 0.0
        %1605 = vmatpush1.msra.mxu0 0.0
        %1606 = vmatprep.subr.mxu0 0.0
        %1607 = vmatpush1.msra.mxu0 0.0
        %1608 = vmatprep.subr.mxu0 0.0
        %1609 = vmatpush1.msra.mxu0 0.0
        %1610 = vmatprep.subr.mxu0 0.0
        %1611 = vmatpush1.msra.mxu0 0.0
        %1612 = vmatprep.subr.mxu0 0.0
        %1613 = vmatpush1.msra.mxu0 0.0
        %1614 = vmatprep.subr.mxu0 0.0
        %1615 = vmatpush1.msra.mxu0 0.0
        %1616 = vmatprep.subr.mxu0 0.0
        %1617 = vmatpush1.msra.mxu0 0.0
        %1618 = vmatprep.subr.mxu0 0.0
        %1619 = vmatpush1.msra.mxu0 0.0
        %1620 = vmatprep.subr.mxu0 0.0
        %1621 = vmatpush1.msra.mxu0 0.0
        %1622 = vmatprep.subr.mxu0 0.0
        %1623 = vmatpush1.msra.mxu0 0.0
        %1624 = vmatprep.subr.mxu0 0.0
        %1625 = vmatpush1.msra.mxu0 0.0
        %1626 = vmatprep.subr.mxu0 0.0
        %1627 = vmatpush1.msra.mxu0 0.0
        %1628 = vmatprep.subr.mxu0 0.0
        %1629 = vmatpush1.msra.mxu0 0.0
        %1630 = vmatprep.subr.mxu0 0.0
        %1631 = vmatpush1.msra.mxu0 0.0
        %1632 = vmatprep.subr.mxu0 0.0
        %1633 = vmatpush1.msra.mxu0 0.0
        %1634 = vmatprep.subr.mxu0 0.0
        %1635 = vmatpush1.msra.mxu0 0.0
        %1636 = vmatprep.subr.mxu0 0.0
        %1637 = vmatpush1.msra.mxu0 0.0
        %1638 = vmatprep.subr.mxu0 0.0
        %1639 = vmatpush1.msra.mxu0 0.0
        %1640 = vmatprep.subr.mxu0 0.0
        %1641 = vmatpush1.msra.mxu0 0.0
        %1642 = vmatprep.subr.mxu0 0.0
        %1643 = vmatpush1.msra.mxu0 0.0
        %1644 = vmatprep.subr.mxu0 0.0
        %1645 = vmatpush1.msra.mxu0 0.0
        %1646 = vmatprep.subr.mxu0 0.0
        %1647 = vmatpush1.msra.mxu0 0.0
        %1648 = vmatprep.subr.mxu0 0.0
        %1649 = vmatpush1.msra.mxu0 0.0
        %1650 = vmatprep.subr.mxu0 0.0
        %1651 = vmatpush1.msra.mxu0 0.0
        %1652 = vmatprep.subr.mxu0 0.0
        %1653 = vmatpush1.msra.mxu0 0.0
        %1654 = vmatprep.subr.mxu0 0.0
        %1655 = vmatpush1.msra.mxu0 0.0
        %1656 = vmatprep.subr.mxu0 0.0
        %1657 = vmatpush1.msra.mxu0 0.0
        %1658 = vmatprep.subr.mxu0 0.0
        %1659 = vmatpush1.msra.mxu0 0.0
        %1660 = vmatprep.subr.mxu0 0.0
        %1661 = vmatpush1.msra.mxu0 0.0
        %1662 = vmatprep.subr.mxu0 0.0
        %1663 = vmatpush1.msra.mxu0 0.0
        %1664 = vmatprep.subr.mxu0 0.0
        %1665 = vmatpush1.msra.mxu0 0.0
        %1666 = vmatprep.mubr.f32.mxu0 0.0
        %1667 = vmatmul.mubr.f32.gmra.mrb[0].mxu0 %v615
        %v1668 = vpop.f32.mrb[0].mxu0
        %v1669 = vadd.f32 0.0, %v1668
        %v1670 = vpop.f32.mrb[0].mxu0
        %1671 = vmatprep.mubr.f32.mxu0 0.0
        %1672 = vmatmul.mubr.f32.gmra.mrb[0].mxu0 %v618
        %v1673 = vpop.f32.mrb[0].mxu0
        %v1674 = vadd.f32 0.0, %v1673
        %v1675 = vpop.f32.mrb[0].mxu0
        %1676 = vdwg.mxu0
        %1677 = vmatprep.subr.mxu0 0.0
        %1678 = vmatpush1.msra.mxu0 %v1572
        %1679 = vmatprep.subr.mxu0 0.0
        %1680 = vmatpush1.msra.mxu0 0.0
        %1681 = vmatprep.subr.mxu0 0.0
        %1682 = vmatpush1.msra.mxu0 0.0
        %1683 = vmatprep.subr.mxu0 0.0
        %1684 = vmatpush1.msra.mxu0 0.0
        %1685 = vmatprep.subr.mxu0 0.0
        %1686 = vmatpush1.msra.mxu0 0.0
        %1687 = vmatprep.subr.mxu0 0.0
        %1688 = vmatpush1.msra.mxu0 0.0
        %1689 = vmatprep.subr.mxu0 0.0
        %1690 = vmatpush1.msra.mxu0 0.0
        %1691 = vmatprep.subr.mxu0 0.0
        %1692 = vmatpush1.msra.mxu0 0.0
        %1693 = vmatprep.subr.mxu0 0.0
        %1694 = vmatpush1.msra.mxu0 0.0
        %1695 = vmatprep.subr.mxu0 0.0
        %1696 = vmatpush1.msra.mxu0 0.0
        %1697 = vmatprep.subr.mxu0 0.0
        %1698 = vmatpush1.msra.mxu0 0.0
        %1699 = vmatprep.subr.mxu0 0.0
        %1700 = vmatpush1.msra.mxu0 0.0
        %1701 = vmatprep.subr.mxu0 0.0
        %1702 = vmatpush1.msra.mxu0 0.0
        %1703 = vmatprep.subr.mxu0 0.0
        %1704 = vmatpush1.msra.mxu0 0.0
        %1705 = vmatprep.subr.mxu0 0.0
        %1706 = vmatpush1.msra.mxu0 0.0
        %1707 = vmatprep.subr.mxu0 0.0
        %1708 = vmatpush1.msra.mxu0 0.0
        %1709 = vmatprep.subr.mxu0 0.0
        %1710 = vmatpush1.msra.mxu0 0.0
        %1711 = vmatprep.subr.mxu0 0.0
        %1712 = vmatpush1.msra.mxu0 0.0
        %1713 = vmatprep.subr.mxu0 0.0
        %1714 = vmatpush1.msra.mxu0 0.0
        %1715 = vmatprep.subr.mxu0 0.0
        %1716 = vmatpush1.msra.mxu0 0.0
        %1717 = vmatprep.subr.mxu0 0.0
        %1718 = vmatpush1.msra.mxu0 0.0
        %1719 = vmatprep.subr.mxu0 0.0
        %1720 = vmatpush1.msra.mxu0 0.0
        %1721 = vmatprep.subr.mxu0 0.0
        %1722 = vmatpush1.msra.mxu0 0.0
        %1723 = vmatprep.subr.mxu0 0.0
        %1724 = vmatpush1.msra.mxu0 0.0
        %1725 = vmatprep.subr.mxu0 0.0
        %1726 = vmatpush1.msra.mxu0 0.0
        %1727 = vmatprep.subr.mxu0 0.0
        %1728 = vmatpush1.msra.mxu0 0.0
        %1729 = vmatprep.subr.mxu0 0.0
        %1730 = vmatpush1.msra.mxu0 0.0
        %1731 = vmatprep.subr.mxu0 0.0
        %1732 = vmatpush1.msra.mxu0 0.0
        %1733 = vmatprep.subr.mxu0 0.0
        %1734 = vmatpush1.msra.mxu0 0.0
        %1735 = vmatprep.subr.mxu0 0.0
        %1736 = vmatpush1.msra.mxu0 0.0
        %1737 = vmatprep.subr.mxu0 0.0
        %1738 = vmatpush1.msra.mxu0 0.0
        %1739 = vmatprep.subr.mxu0 0.0
        %1740 = vmatpush1.msra.mxu0 0.0
        %1741 = vmatprep.mubr.f32.mxu0 0.0
        %1742 = vmatmul.mubr.f32.gmra.mrb[0].mxu0 %v696
        %v1743 = vpop.f32.mrb[0].mxu0
        %v1744 = vadd.f32 %v1669, %v1743
        %v1745 = vpop.f32.mrb[0].mxu0
        %1746 = vmatprep.mubr.f32.mxu0 0.0
        %1747 = vmatmul.mubr.f32.gmra.mrb[0].mxu0 %v699
        %v1748 = vpop.f32.mrb[0].mxu0
        %v1749 = vadd.f32 %v1674, %v1748
        %v1750 = vpop.f32.mrb[0].mxu0
        %1751 = vdwg.mxu0
        %s1752 = scalar_lea.vmem %s254, 32 [#allocation9]
        %1753 = vst.msk [vmem:[%s1752] sm:$0xff] %vm776, %v1744
        %1754 = vst.msk [vmem:[%s1752 + $0x8] sm:$0xff] %vm776, %v1749
        %s1755 = sld [smem:[#allocation6 + $0x3]]
        %v1756 = vstv %s1755
        %v1757 = vadd.f32 %v1756, 0.0
        %v1758 = vld [vmem:[%s231] sm:$0xff]
        %s1759 = sld [smem:[#allocation2 + $0x48]]
        %v1760 = vstv %s1759
        %v1761 = vmul.f32 %v1760, %v1758
        %v1762 = vadd.f32 %v1757, %v1761
        %s1763 = sld [smem:[#allocation2 + $0x49]]
        %v1764 = vstv %s1763
        %v1765 = vmul.f32 %v1764, %v1758
        %1767 = vrot.lane.b32.xlu0 %v1765, 127
        %v1768 = vpop.permute.xlu0 %1767
        %v1770 = vadd.f32 %v1762, %v1768
        %s1771 = sld [smem:[#allocation2 + $0x4a]]
        %v1772 = vstv %s1771
        %v1773 = vmul.f32 %v1772, %v1758
        %1775 = vrot.lane.b32.xlu0 %v1773, 126
        %v1776 = vpop.permute.xlu0 %1775
        %v1778 = vadd.f32 %v1770, %v1776
        %v1779 = vld [vmem:[%s231 + $0x1] sm:$0xff]
        %s1780 = sld [smem:[#allocation2 + $0x4b]]
        %v1781 = vstv %s1780
        %v1782 = vmul.f32 %v1781, %v1779
        %v1783 = vadd.f32 %v1778, %v1782
        %s1784 = sld [smem:[#allocation2 + $0xa8]]
        %v1785 = vstv %s1784
        %v1786 = vmul.f32 %v1785, %v1779
        %v1787 = vadd.f32 %v1757, %v1786
        %s1788 = sld [smem:[#allocation2 + $0x4c]]
        %v1789 = vstv %s1788
        %v1790 = vmul.f32 %v1789, %v1779
        %1792 = vrot.lane.b32.xlu0 %v1790, 127
        %v1793 = vpop.permute.xlu0 %1792
        %v1795 = vadd.f32 %v1783, %v1793
        %s1796 = sld [smem:[#allocation2 + $0xa9]]
        %v1797 = vstv %s1796
        %v1798 = vmul.f32 %v1797, %v1779
        %1800 = vrot.lane.b32.xlu0 %v1798, 127
        %v1801 = vpop.permute.xlu0 %1800
        %v1803 = vadd.f32 %v1787, %v1801
        %s1804 = sld [smem:[#allocation2 + $0x4d]]
        %v1805 = vstv %s1804
        %v1806 = vmul.f32 %v1805, %v1779
        %1808 = vrot.lane.b32.xlu0 %v1806, 126
        %v1809 = vpop.permute.xlu0 %1808
        %v1811 = vadd.f32 %v1795, %v1809
        %s1812 = sld [smem:[#allocation2 + $0xaa]]
        %v1813 = vstv %s1812
        %v1814 = vmul.f32 %v1813, %v1779
        %1816 = vrot.lane.b32.xlu0 %v1814, 126
        %v1817 = vpop.permute.xlu0 %1816
        %v1819 = vadd.f32 %v1803, %v1817
        %v1820 = vld [vmem:[%s231 + $0x2] sm:$0xff]
        %s1821 = sld [smem:[#allocation2 + $0xab]]
        %v1822 = vstv %s1821
        %v1823 = vmul.f32 %v1822, %v1820
        %v1824 = vadd.f32 %v1819, %v1823
        %s1825 = sld [smem:[#allocation2 + $0xac]]
        %v1826 = vstv %s1825
        %v1827 = vmul.f32 %v1826, %v1820
        %1829 = vrot.lane.b32.xlu0 %v1827, 127
        %v1830 = vpop.permute.xlu0 %1829
        %v1832 = vadd.f32 %v1824, %v1830
        %s1833 = sld [smem:[#allocation2 + $0xad]]
        %v1834 = vstv %s1833
        %v1835 = vmul.f32 %v1834, %v1820
        %1837 = vrot.lane.b32.xlu0 %v1835, 126
        %v1838 = vpop.permute.xlu0 %1837
        %v1840 = vadd.f32 %v1832, %v1838
        %v1841 = vld [vmem:[%s361] sm:$0xff]
        %s1842 = sld [smem:[#allocation2 + $0x4e]]
        %v1843 = vstv %s1842
        %v1844 = vmul.f32 %v1843, %v1841
        %v1845 = vadd.f32 %v1811, %v1844
        %s1846 = sld [smem:[#allocation2 + $0x4f]]
        %v1847 = vstv %s1846
        %v1848 = vmul.f32 %v1847, %v1841
        %1850 = vrot.lane.b32.xlu0 %v1848, 127
        %v1851 = vpop.permute.xlu0 %1850
        %v1853 = vadd.f32 %v1845, %v1851
        %s1854 = sld [smem:[#allocation2 + $0x50]]
        %v1855 = vstv %s1854
        %v1856 = vmul.f32 %v1855, %v1841
        %1858 = vrot.lane.b32.xlu0 %v1856, 126
        %v1859 = vpop.permute.xlu0 %1858
        %v1861 = vadd.f32 %v1853, %v1859
        %v1862 = vld [vmem:[%s361 + $0x1] sm:$0xff]
        %s1863 = sld [smem:[#allocation2 + $0x51]]
        %v1864 = vstv %s1863
        %v1865 = vmul.f32 %v1864, %v1862
        %v1866 = vadd.f32 %v1861, %v1865
        %s1867 = sld [smem:[#allocation2 + $0xae]]
        %v1868 = vstv %s1867
        %v1869 = vmul.f32 %v1868, %v1862
        %v1870 = vadd.f32 %v1840, %v1869
        %s1871 = sld [smem:[#allocation2 + $0x52]]
        %v1872 = vstv %s1871
        %v1873 = vmul.f32 %v1872, %v1862
        %1875 = vrot.lane.b32.xlu0 %v1873, 127
        %v1876 = vpop.permute.xlu0 %1875
        %v1878 = vadd.f32 %v1866, %v1876
        %s1879 = sld [smem:[#allocation2 + $0xaf]]
        %v1880 = vstv %s1879
        %v1881 = vmul.f32 %v1880, %v1862
        %1883 = vrot.lane.b32.xlu0 %v1881, 127
        %v1884 = vpop.permute.xlu0 %1883
        %v1886 = vadd.f32 %v1870, %v1884
        %s1887 = sld [smem:[#allocation2 + $0x53]]
        %v1888 = vstv %s1887
        %v1889 = vmul.f32 %v1888, %v1862
        %1891 = vrot.lane.b32.xlu0 %v1889, 126
        %v1892 = vpop.permute.xlu0 %1891
        %v1894 = vadd.f32 %v1878, %v1892
        %s1895 = sld [smem:[#allocation2 + $0xb0]]
        %v1896 = vstv %s1895
        %v1897 = vmul.f32 %v1896, %v1862
        %1899 = vrot.lane.b32.xlu0 %v1897, 126
        %v1900 = vpop.permute.xlu0 %1899
        %v1902 = vadd.f32 %v1886, %v1900
        %v1903 = vld [vmem:[%s361 + $0x2] sm:$0xff]
        %s1904 = sld [smem:[#allocation2 + $0xb1]]
        %v1905 = vstv %s1904
        %v1906 = vmul.f32 %v1905, %v1903
        %v1907 = vadd.f32 %v1902, %v1906
        %s1908 = sld [smem:[#allocation2 + $0xb2]]
        %v1909 = vstv %s1908
        %v1910 = vmul.f32 %v1909, %v1903
        %1912 = vrot.lane.b32.xlu0 %v1910, 127
        %v1913 = vpop.permute.xlu0 %1912
        %v1915 = vadd.f32 %v1907, %v1913
        %s1916 = sld [smem:[#allocation2 + $0xb3]]
        %v1917 = vstv %s1916
        %v1918 = vmul.f32 %v1917, %v1903
        %1920 = vrot.lane.b32.xlu0 %v1918, 126
        %v1921 = vpop.permute.xlu0 %1920
        %v1923 = vadd.f32 %v1915, %v1921
        %v1924 = vld [vmem:[%s445] sm:$0xff]
        %s1925 = sld [smem:[#allocation2 + $0x54]]
        %v1926 = vstv %s1925
        %v1927 = vmul.f32 %v1926, %v1924
        %v1928 = vadd.f32 %v1894, %v1927
        %s1929 = sld [smem:[#allocation2 + $0x55]]
        %v1930 = vstv %s1929
        %v1931 = vmul.f32 %v1930, %v1924
        %1933 = vrot.lane.b32.xlu0 %v1931, 127
        %v1934 = vpop.permute.xlu0 %1933
        %v1936 = vadd.f32 %v1928, %v1934
        %s1937 = sld [smem:[#allocation2 + $0x56]]
        %v1938 = vstv %s1937
        %v1939 = vmul.f32 %v1938, %v1924
        %1941 = vrot.lane.b32.xlu0 %v1939, 126
        %v1942 = vpop.permute.xlu0 %1941
        %v1944 = vadd.f32 %v1936, %v1942
        %v1945 = vld [vmem:[%s445 + $0x1] sm:$0xff]
        %s1946 = sld [smem:[#allocation2 + $0x57]]
        %v1947 = vstv %s1946
        %v1948 = vmul.f32 %v1947, %v1945
        %v1949 = vadd.f32 %v1944, %v1948
        %s1950 = sld [smem:[#allocation2 + $0xb4]]
        %v1951 = vstv %s1950
        %v1952 = vmul.f32 %v1951, %v1945
        %v1953 = vadd.f32 %v1923, %v1952
        %s1954 = sld [smem:[#allocation2 + $0x58]]
        %v1955 = vstv %s1954
        %v1956 = vmul.f32 %v1955, %v1945
        %1958 = vrot.lane.b32.xlu0 %v1956, 127
        %v1959 = vpop.permute.xlu0 %1958
        %v1961 = vadd.f32 %v1949, %v1959
        %s1962 = sld [smem:[#allocation2 + $0xb5]]
        %v1963 = vstv %s1962
        %v1964 = vmul.f32 %v1963, %v1945
        %1966 = vrot.lane.b32.xlu0 %v1964, 127
        %v1967 = vpop.permute.xlu0 %1966
        %v1969 = vadd.f32 %v1953, %v1967
        %s1970 = sld [smem:[#allocation2 + $0x59]]
        %v1971 = vstv %s1970
        %v1972 = vmul.f32 %v1971, %v1945
        %1974 = vrot.lane.b32.xlu0 %v1972, 126
        %v1975 = vpop.permute.xlu0 %1974
        %v1977 = vadd.f32 %v1961, %v1975
        %s1978 = sld [smem:[#allocation2 + $0xb6]]
        %v1979 = vstv %s1978
        %v1980 = vmul.f32 %v1979, %v1945
        %1982 = vrot.lane.b32.xlu0 %v1980, 126
        %v1983 = vpop.permute.xlu0 %1982
        %v1985 = vadd.f32 %v1969, %v1983
        %v1986 = vld [vmem:[%s445 + $0x2] sm:$0xff]
        %s1987 = sld [smem:[#allocation2 + $0xb7]]
        %v1988 = vstv %s1987
        %v1989 = vmul.f32 %v1988, %v1986
        %v1990 = vadd.f32 %v1985, %v1989
        %s1991 = sld [smem:[#allocation2 + $0xb8]]
        %v1992 = vstv %s1991
        %v1993 = vmul.f32 %v1992, %v1986
        %1995 = vrot.lane.b32.xlu0 %v1993, 127
        %v1996 = vpop.permute.xlu0 %1995
        %v1998 = vadd.f32 %v1990, %v1996
        %s1999 = sld [smem:[#allocation2 + $0xb9]]
        %v2000 = vstv %s1999
        %v2001 = vmul.f32 %v2000, %v1986
        %2003 = vrot.lane.b32.xlu0 %v2001, 126
        %v2004 = vpop.permute.xlu0 %2003
        %v2006 = vadd.f32 %v1998, %v2004
        %v2007 = vld [vmem:[%s529] sm:$0xff]
        %s2008 = sld [smem:[#allocation2 + $0x5a]]
        %v2009 = vstv %s2008
        %v2010 = vmul.f32 %v2009, %v2007
        %v2011 = vadd.f32 %v1977, %v2010
        %s2012 = sld [smem:[#allocation2 + $0x5b]]
        %v2013 = vstv %s2012
        %v2014 = vmul.f32 %v2013, %v2007
        %2016 = vrot.lane.b32.xlu0 %v2014, 127
        %v2017 = vpop.permute.xlu0 %2016
        %v2019 = vadd.f32 %v2011, %v2017
        %s2020 = sld [smem:[#allocation2 + $0x5c]]
        %v2021 = vstv %s2020
        %v2022 = vmul.f32 %v2021, %v2007
        %2024 = vrot.lane.b32.xlu0 %v2022, 126
        %v2025 = vpop.permute.xlu0 %2024
        %v2027 = vadd.f32 %v2019, %v2025
        %v2028 = vld [vmem:[%s529 + $0x1] sm:$0xff]
        %s2029 = sld [smem:[#allocation2 + $0x5d]]
        %v2030 = vstv %s2029
        %v2031 = vmul.f32 %v2030, %v2028
        %v2032 = vadd.f32 %v2027, %v2031
        %s2033 = sld [smem:[#allocation2 + $0xba]]
        %v2034 = vstv %s2033
        %v2035 = vmul.f32 %v2034, %v2028
        %v2036 = vadd.f32 %v2006, %v2035
        %s2037 = sld [smem:[#allocation2 + $0x5e]]
        %v2038 = vstv %s2037
        %v2039 = vmul.f32 %v2038, %v2028
        %2041 = vrot.lane.b32.xlu0 %v2039, 127
        %v2042 = vpop.permute.xlu0 %2041
        %v2044 = vadd.f32 %v2032, %v2042
        %s2045 = sld [smem:[#allocation2 + $0xbb]]
        %v2046 = vstv %s2045
        %v2047 = vmul.f32 %v2046, %v2028
        %2049 = vrot.lane.b32.xlu0 %v2047, 127
        %v2050 = vpop.permute.xlu0 %2049
        %v2052 = vadd.f32 %v2036, %v2050
        %s2053 = sld [smem:[#allocation2 + $0x5f]]
        %v2054 = vstv %s2053
        %v2055 = vmul.f32 %v2054, %v2028
        %2057 = vrot.lane.b32.xlu0 %v2055, 126
        %v2058 = vpop.permute.xlu0 %2057
        %v2060 = vadd.f32 %v2044, %v2058
        %s2061 = sld [smem:[#allocation2 + $0xbc]]
        %v2062 = vstv %s2061
        %v2063 = vmul.f32 %v2062, %v2028
        %2065 = vrot.lane.b32.xlu0 %v2063, 126
        %v2066 = vpop.permute.xlu0 %2065
        %v2068 = vadd.f32 %v2052, %v2066
        %v2069 = vld [vmem:[%s529 + $0x2] sm:$0xff]
        %s2070 = sld [smem:[#allocation2 + $0xbd]]
        %v2071 = vstv %s2070
        %v2072 = vmul.f32 %v2071, %v2069
        %v2073 = vadd.f32 %v2068, %v2072
        %s2074 = sld [smem:[#allocation2 + $0xbe]]
        %v2075 = vstv %s2074
        %v2076 = vmul.f32 %v2075, %v2069
        %2078 = vrot.lane.b32.xlu0 %v2076, 127
        %v2079 = vpop.permute.xlu0 %2078
        %v2081 = vadd.f32 %v2073, %v2079
        %s2082 = sld [smem:[#allocation2 + $0xbf]]
        %v2083 = vstv %s2082
        %v2084 = vmul.f32 %v2083, %v2069
        %2086 = vrot.lane.b32.xlu0 %v2084, 126
        %v2087 = vpop.permute.xlu0 %2086
        %v2089 = vadd.f32 %v2081, %v2087
        %2090 = vmatprep.subr.mxu0 0.0
        %2091 = vmatpush1.msra.mxu0 %v2089
        %2092 = vmatprep.subr.mxu0 0.0
        %2093 = vmatpush1.msra.mxu0 0.0
        %2094 = vmatprep.subr.mxu0 0.0
        %2095 = vmatpush1.msra.mxu0 0.0
        %2096 = vmatprep.subr.mxu0 0.0
        %2097 = vmatpush1.msra.mxu0 0.0
        %2098 = vmatprep.subr.mxu0 0.0
        %2099 = vmatpush1.msra.mxu0 0.0
        %2100 = vmatprep.subr.mxu0 0.0
        %2101 = vmatpush1.msra.mxu0 0.0
        %2102 = vmatprep.subr.mxu0 0.0
        %2103 = vmatpush1.msra.mxu0 0.0
        %2104 = vmatprep.subr.mxu0 0.0
        %2105 = vmatpush1.msra.mxu0 0.0
        %2106 = vmatprep.subr.mxu0 0.0
        %2107 = vmatpush1.msra.mxu0 0.0
        %2108 = vmatprep.subr.mxu0 0.0
        %2109 = vmatpush1.msra.mxu0 0.0
        %2110 = vmatprep.subr.mxu0 0.0
        %2111 = vmatpush1.msra.mxu0 0.0
        %2112 = vmatprep.subr.mxu0 0.0
        %2113 = vmatpush1.msra.mxu0 0.0
        %2114 = vmatprep.subr.mxu0 0.0
        %2115 = vmatpush1.msra.mxu0 0.0
        %2116 = vmatprep.subr.mxu0 0.0
        %2117 = vmatpush1.msra.mxu0 0.0
        %2118 = vmatprep.subr.mxu0 0.0
        %2119 = vmatpush1.msra.mxu0 0.0
        %2120 = vmatprep.subr.mxu0 0.0
        %2121 = vmatpush1.msra.mxu0 0.0
        %2122 = vmatprep.subr.mxu0 0.0
        %2123 = vmatpush1.msra.mxu0 0.0
        %2124 = vmatprep.subr.mxu0 0.0
        %2125 = vmatpush1.msra.mxu0 0.0
        %2126 = vmatprep.subr.mxu0 0.0
        %2127 = vmatpush1.msra.mxu0 0.0
        %2128 = vmatprep.subr.mxu0 0.0
        %2129 = vmatpush1.msra.mxu0 0.0
        %2130 = vmatprep.subr.mxu0 0.0
        %2131 = vmatpush1.msra.mxu0 0.0
        %2132 = vmatprep.subr.mxu0 0.0
        %2133 = vmatpush1.msra.mxu0 0.0
        %2134 = vmatprep.subr.mxu0 0.0
        %2135 = vmatpush1.msra.mxu0 0.0
        %2136 = vmatprep.subr.mxu0 0.0
        %2137 = vmatpush1.msra.mxu0 0.0
        %2138 = vmatprep.subr.mxu0 0.0
        %2139 = vmatpush1.msra.mxu0 0.0
        %2140 = vmatprep.subr.mxu0 0.0
        %2141 = vmatpush1.msra.mxu0 0.0
        %2142 = vmatprep.subr.mxu0 0.0
        %2143 = vmatpush1.msra.mxu0 0.0
        %2144 = vmatprep.subr.mxu0 0.0
        %2145 = vmatpush1.msra.mxu0 0.0
        %2146 = vmatprep.subr.mxu0 0.0
        %2147 = vmatpush1.msra.mxu0 0.0
        %2148 = vmatprep.subr.mxu0 0.0
        %2149 = vmatpush1.msra.mxu0 0.0
        %2150 = vmatprep.subr.mxu0 0.0
        %2151 = vmatpush1.msra.mxu0 0.0
        %2152 = vmatprep.subr.mxu0 0.0
        %2153 = vmatpush1.msra.mxu0 0.0
        %2154 = vmatprep.mubr.f32.mxu0 0.0
        %2155 = vmatmul.mubr.f32.gmra.mrb[0].mxu0 %v615
        %v2156 = vpop.f32.mrb[0].mxu0
        %v2157 = vadd.f32 0.0, %v2156
        %v2158 = vpop.f32.mrb[0].mxu0
        %2159 = vmatprep.mubr.f32.mxu0 0.0
        %2160 = vmatmul.mubr.f32.gmra.mrb[0].mxu0 %v618
        %v2161 = vpop.f32.mrb[0].mxu0
        %v2162 = vadd.f32 0.0, %v2161
        %v2163 = vpop.f32.mrb[0].mxu0
        %2164 = vdwg.mxu0
        %2165 = vmatprep.subr.mxu0 0.0
        %2166 = vmatpush1.msra.mxu0 %v2060
        %2167 = vmatprep.subr.mxu0 0.0
        %2168 = vmatpush1.msra.mxu0 0.0
        %2169 = vmatprep.subr.mxu0 0.0
        %2170 = vmatpush1.msra.mxu0 0.0
        %2171 = vmatprep.subr.mxu0 0.0
        %2172 = vmatpush1.msra.mxu0 0.0
        %2173 = vmatprep.subr.mxu0 0.0
        %2174 = vmatpush1.msra.mxu0 0.0
        %2175 = vmatprep.subr.mxu0 0.0
        %2176 = vmatpush1.msra.mxu0 0.0
        %2177 = vmatprep.subr.mxu0 0.0
        %2178 = vmatpush1.msra.mxu0 0.0
        %2179 = vmatprep.subr.mxu0 0.0
        %2180 = vmatpush1.msra.mxu0 0.0
        %2181 = vmatprep.subr.mxu0 0.0
        %2182 = vmatpush1.msra.mxu0 0.0
        %2183 = vmatprep.subr.mxu0 0.0
        %2184 = vmatpush1.msra.mxu0 0.0
        %2185 = vmatprep.subr.mxu0 0.0
        %2186 = vmatpush1.msra.mxu0 0.0
        %2187 = vmatprep.subr.mxu0 0.0
        %2188 = vmatpush1.msra.mxu0 0.0
        %2189 = vmatprep.subr.mxu0 0.0
        %2190 = vmatpush1.msra.mxu0 0.0
        %2191 = vmatprep.subr.mxu0 0.0
        %2192 = vmatpush1.msra.mxu0 0.0
        %2193 = vmatprep.subr.mxu0 0.0
        %2194 = vmatpush1.msra.mxu0 0.0
        %2195 = vmatprep.subr.mxu0 0.0
        %2196 = vmatpush1.msra.mxu0 0.0
        %2197 = vmatprep.subr.mxu0 0.0
        %2198 = vmatpush1.msra.mxu0 0.0
        %2199 = vmatprep.subr.mxu0 0.0
        %2200 = vmatpush1.msra.mxu0 0.0
        %2201 = vmatprep.subr.mxu0 0.0
        %2202 = vmatpush1.msra.mxu0 0.0
        %2203 = vmatprep.subr.mxu0 0.0
        %2204 = vmatpush1.msra.mxu0 0.0
        %2205 = vmatprep.subr.mxu0 0.0
        %2206 = vmatpush1.msra.mxu0 0.0
        %2207 = vmatprep.subr.mxu0 0.0
        %2208 = vmatpush1.msra.mxu0 0.0
        %2209 = vmatprep.subr.mxu0 0.0
        %2210 = vmatpush1.msra.mxu0 0.0
        %2211 = vmatprep.subr.mxu0 0.0
        %2212 = vmatpush1.msra.mxu0 0.0
        %2213 = vmatprep.subr.mxu0 0.0
        %2214 = vmatpush1.msra.mxu0 0.0
        %2215 = vmatprep.subr.mxu0 0.0
        %2216 = vmatpush1.msra.mxu0 0.0
        %2217 = vmatprep.subr.mxu0 0.0
        %2218 = vmatpush1.msra.mxu0 0.0
        %2219 = vmatprep.subr.mxu0 0.0
        %2220 = vmatpush1.msra.mxu0 0.0
        %2221 = vmatprep.subr.mxu0 0.0
        %2222 = vmatpush1.msra.mxu0 0.0
        %2223 = vmatprep.subr.mxu0 0.0
        %2224 = vmatpush1.msra.mxu0 0.0
        %2225 = vmatprep.subr.mxu0 0.0
        %2226 = vmatpush1.msra.mxu0 0.0
        %2227 = vmatprep.subr.mxu0 0.0
        %2228 = vmatpush1.msra.mxu0 0.0
        %2229 = vmatprep.mubr.f32.mxu0 0.0
        %2230 = vmatmul.mubr.f32.gmra.mrb[0].mxu0 %v696
        %v2231 = vpop.f32.mrb[0].mxu0
        %v2232 = vadd.f32 %v2157, %v2231
        %v2233 = vpop.f32.mrb[0].mxu0
        %2234 = vmatprep.mubr.f32.mxu0 0.0
        %2235 = vmatmul.mubr.f32.gmra.mrb[0].mxu0 %v699
        %v2236 = vpop.f32.mrb[0].mxu0
        %v2237 = vadd.f32 %v2162, %v2236
        %v2238 = vpop.f32.mrb[0].mxu0
        %2239 = vdwg.mxu0
        %s2240 = scalar_lea.vmem %s254, 48 [#allocation9]
        %2241 = vst.msk [vmem:[%s2240] sm:$0xff] %vm776, %v2232
        %2242 = vst.msk [vmem:[%s2240 + $0x8] sm:$0xff] %vm776, %v2237
        %s2243 = sand.u32 %s114, 1
        %s2244 = scalar_lea.sflag [#allocation4], %s2243
        %s2245 = sand.u32 %s114, 1
        %s2246 = smul.addr %s2245, 64
        %s2247 = scalar_lea.vmem [#allocation9], %s2246
        // Predicated region
        $region45: #{upsample_forward.3} parent=31 // pred_check
          %p2248 = pneg %p124
        $region46: #{upsample_forward.3} parent=31 // pred_check_branch
          %2250 = sbr.rel (%p2248) target = $region48
        $region47: #{upsample_forward.3} parent=31 // pred_region
          #allocation13 [shape = 'u32[6]{0}', space=smem, size = 0x18, scoped, tag = 'DMA stride descriptor']
          %s2251 = smul.u32 2, %s27
          %s2253 = ssub.s32 1024, 1024
          %2254 = vsyncadd %s2244, %s2253
          %s2255 = smul.addr %s26, 16
          %s2256 = sadd.s32 %s2251, %s2255
          %s2257 = smul.addr %s2256, 128
          %s2258 = scalar_lea.hbm %s3, %s2257
          %s2260 = sshll.u32 1, 14
          %s2261 = sxor.u32 4294967295, %s2260
          %s2264 = sshll.u32 7, 18
          %s2265 = sxor.u32 4294967295, %s2264
          %s2266 = sand.u32 0, %s2265
          %s2268 = sor.u32 %s2266, 0
          %s2270 = sshll.u32 3, 24
          %s2271 = sxor.u32 4294967295, %s2270
          %s2272 = sand.u32 %s2268, %s2271
          %s2274 = sor.u32 %s2272, 0
          %s2275 = sshll.u32 %s2247, 4
          %s2276 = int_to_ptr.vmem [resolvable:$true] %s2275
          %2282 = sst [smem:[#allocation13]] 256
          %s2283 = scalar_lea.smem [#allocation13], 1
          %2284 = sst [smem:[%s2283]] 512
          %s2285 = scalar_lea.smem [#allocation13], 2
          %2286 = sst [smem:[%s2285]] 2
          %s2287 = scalar_lea.smem [#allocation13], 3
          %2288 = sst [smem:[%s2287]] 128
          %s2289 = scalar_lea.smem [#allocation13], 4
          %2290 = sst [smem:[%s2289]] 128
          %s2291 = scalar_lea.smem [#allocation13], 5
          %2292 = sst [smem:[%s2291]] 8
          %2294 = dma.general %s2276, 1024, %s2258, %s2244, [#allocation12], [#allocation13], %s2274, 0
        $region48: #{upsample_forward.3} parent=31 // pred_fallthru
          _
      $region32: #{upsample_forward.3} parent=5 // pred_fallthru
        _
      %p2295 = scmp.le.s32.totalorder 2, %s17
      // Predicated region
      $region49: #{upsample_forward.3} parent=5 // pred_check
        %p2296 = pneg %p2295
      $region50: #{upsample_forward.3} parent=5 // pred_check_branch
        %2298 = sbr.rel (%p2296) target = $region52
      $region51: #{upsample_forward.3} parent=5 // pred_region
        %s2299 = ssub.s32 %s17, 2
        // Predicated region
        $region53: #{upsample_forward.3} parent=51 // pred_check
          %p2300 = pneg %p130
        $region54: #{upsample_forward.3} parent=51 // pred_check_branch
          %2302 = sbr.rel (%p2300) target = $region56
        $region55: #{upsample_forward.3} parent=51 // pred_region
          %s2303 = sand.u32 %s115, 1
          %s2304 = scalar_lea.sflag [#allocation4], %s2303
          %s2305 = sand.u32 %s115, 1
          %s2306 = smul.addr %s2305, 64
          %s2307 = scalar_lea.vmem [#allocation9], %s2306
          %2308 = dma.done %s2304, 1024
        $region56: #{upsample_forward.3} parent=51 // pred_fallthru
          _
      $region52: #{upsample_forward.3} parent=5 // pred_fallthru
        _
    $region6: #{upsample_forward.3} parent=1 // loop_footer
      %s21 = sadd.s32 1, %s17
    $region7: #{upsample_forward.3} parent=1 // loop_footer_branch
      %16 = sbr.rel target = $region3
    $region8: #{upsample_forward.3} parent=1 // loop_exit
      _
    %2309 = vsyncpa [#allocation3], 1
    %s2310 = scalar_lea.sflag [#allocation3], 1
    %2311 = vsyncpa %s2310, 1
    %2312 = vsyncpa [#allocation4], 1
    %s2313 = scalar_lea.sflag [#allocation4], 1
    %2314 = vsyncpa %s2313, 1
    %2315 = vsyncpa [#allocation5], 1
    %s2316 = scalar_lea.sflag [#allocation5], 1
    %2317 = vsyncpa %s2316, 1
    %2318 = vsyncpa [#allocation7], 1

</llo_original>
